<compile_context>
chip_gen: v7x
topology: tpu7x:2x2x1
jax: 0.10.0
libtpu: 0.0.40
codegen_flags: <defaults>
</compile_context>

<pallas_src>
import functools

import jax
import jax.numpy as jnp
from jax.experimental import pallas as pl
from jax.experimental.pallas import tpu as pltpu

LEAKY_SLOPE = 0.2
BN_EPS = 1e-5

# Conservative per-pallas_call VMEM budget (fits default scoped VMEM on
# v5e (16 MiB) / v6e (32 MiB) / v7x (32 MiB of 64 MiB physical)).
_VMEM_BUDGET = 12 << 20


# ---------------------------------------------------------------------------
# Pallas kernels
# ---------------------------------------------------------------------------
def _matmul_leaky_kernel(a_ref, w_ref, o_ref):
    """o = leaky_relu(A @ W); bf16 inputs, f32 MXU accumulation, bf16 out."""
    acc = jnp.dot(a_ref[...], w_ref[...], preferred_element_type=jnp.float32)
    o_ref[...] = jnp.where(acc >= 0, acc, LEAKY_SLOPE * acc).astype(o_ref.dtype)


def _matmul_stats_kernel(a_ref, w_ref, o_ref, sum_ref, sq_ref, *, m_total, tm):
    """Raw conv output tile (f32) + fused per-tile BN partial statistics."""
    acc = jnp.dot(a_ref[...], w_ref[...], preferred_element_type=jnp.float32)
    o_ref[...] = acc
    # Mask rows past the true M (ragged tail tile reads are unspecified) so
    # the BN mean / variance stay unbiased.
    row = jax.lax.broadcasted_iota(jnp.int32, acc.shape, 0) + pl.program_id(0) * tm
    acc_m = jnp.where(row < m_total, acc, 0.0)
    sum_ref[...] = jnp.sum(acc_m, axis=0, keepdims=True)[None]          # (1,1,C)
    sq_ref[...] = jnp.sum(acc_m * acc_m, axis=0, keepdims=True)[None]   # (1,1,C)


def _bn_leaky_kernel(x_ref, s_ref, b_ref, o_ref):
    """o = leaky_relu(x * scale + bias)  (folded BatchNorm + LeakyReLU)."""
    y = x_ref[...] * s_ref[...] + b_ref[...]
    o_ref[...] = jnp.where(y >= 0, y, LEAKY_SLOPE * y).astype(o_ref.dtype)


# ---------------------------------------------------------------------------
# VMEM-aware tile-size selection (portable across v5e / v6e / v7x defaults)
# ---------------------------------------------------------------------------
def _pick_tm_matmul(M, K, C):
    if M <= 128:
        return M  # single full block (allowed even if M not a multiple of 8)
    for tm in (1024, 512, 256, 128):
        if tm > M:
            continue
        # double-buffered bf16 A tile + bf16 W + f32 raw-out tile + stats
        footprint = 2 * tm * K * 2 + 2 * K * C * 2 + 2 * tm * C * 4 + 8 * C * 4
        if footprint <= _VMEM_BUDGET:
            return tm
    return 128


def _pick_tm_rows(M, C):
    if M <= 256:
        return M
    for tm in (4096, 2048, 1024, 512, 256):
        if tm > M:
            continue
        if tm * C * 16 <= _VMEM_BUDGET:  # ~2x f32 in + 2x bf16 out buffers
            return tm
    return 256


# ---------------------------------------------------------------------------
# Glue: channels-last im2col + layer composition
# ---------------------------------------------------------------------------
def im2col_nhwc(x, k, stride, pad):
    """x: NHWC -> patches [N*Ho*Wo, k*k*C] with (kh, kw, C) flattening order."""
    N, H, W, C = x.shape
    if pad:
        x = jnp.pad(x, ((0, 0), (pad, pad), (pad, pad), (0, 0)))
    Hp, Wp = H + 2 * pad, W + 2 * pad
    Ho = (Hp - k) // stride + 1
    Wo = (Wp - k) // stride + 1
    cols = [x[:, i:i + stride * Ho:stride, j:j + stride * Wo:stride, :]
            for i in range(k) for j in range(k)]
    patches = jnp.stack(cols, axis=3)                 # (N, Ho, Wo, k*k, C)
    return patches.reshape(N * Ho * Wo, k * k * C), Ho, Wo


def _weight_matrix(w):
    """PyTorch (Cout, Cin, kh, kw) -> bf16 (kh*kw*Cin, Cout) matching im2col."""
    Cout = w.shape[0]
    return w.transpose(2, 3, 1, 0).reshape(-1, Cout).astype(jnp.bfloat16)


def conv_leaky(x_nhwc, w, k, stride, pad):
    """Conv2d(bias=False) + LeakyReLU(0.2), NHWC bf16 in/out."""
    N = x_nhwc.shape[0]
    Cout = w.shape[0]
    patches, Ho, Wo = im2col_nhwc(x_nhwc, k, stride, pad)
    w_mat = _weight_matrix(w)
    M, K = patches.shape
    tm = _pick_tm_matmul(M, K, Cout)
    nt = pl.cdiv(M, tm)
    out = pl.pallas_call(
        _matmul_leaky_kernel,
        out_shape=jax.ShapeDtypeStruct((M, Cout), jnp.bfloat16),
        grid=(nt,),
        in_specs=[
            pl.BlockSpec((tm, K), lambda i: (i, 0)),
            pl.BlockSpec((K, Cout), lambda i: (0, 0)),
        ],
        out_specs=pl.BlockSpec((tm, Cout), lambda i: (i, 0)),
        compiler_params=pltpu.CompilerParams(dimension_semantics=("parallel",)),
    )(patches, w_mat)
    return out.reshape(N, Ho, Wo, Cout)


def conv_bn_leaky(x_nhwc, w, gamma, beta, k, stride, pad):
    """Conv2d(bias=False) + BatchNorm2d(training) + LeakyReLU(0.2), NHWC."""
    N = x_nhwc.shape[0]
    Cout = w.shape[0]
    patches, Ho, Wo = im2col_nhwc(x_nhwc, k, stride, pad)
    w_mat = _weight_matrix(w)
    M, K = patches.shape
    tm = _pick_tm_matmul(M, K, Cout)
    nt = pl.cdiv(M, tm)

    raw, psum, psq = pl.pallas_call(
        functools.partial(_matmul_stats_kernel, m_total=M, tm=tm),
        out_shape=(
            jax.ShapeDtypeStruct((M, Cout), jnp.float32),
            jax.ShapeDtypeStruct((nt, 1, Cout), jnp.float32),
            jax.ShapeDtypeStruct((nt, 1, Cout), jnp.float32),
        ),
        grid=(nt,),
        in_specs=[
            pl.BlockSpec((tm, K), lambda i: (i, 0)),
            pl.BlockSpec((K, Cout), lambda i: (0, 0)),
        ],
        out_specs=(
            pl.BlockSpec((tm, Cout), lambda i: (i, 0)),
            pl.BlockSpec((1, 1, Cout), lambda i: (i, 0, 0)),
            pl.BlockSpec((1, 1, Cout), lambda i: (i, 0, 0)),
        ),
        compiler_params=pltpu.CompilerParams(dimension_semantics=("parallel",)),
    )(patches, w_mat)

    # Tiny (nt, C) reductions + BN fold: negligible work, plain JAX.
    s = jnp.sum(psum, axis=0)                              # (1, Cout)
    sq = jnp.sum(psq, axis=0)                              # (1, Cout)
    mean = s / M
    var = jnp.maximum(sq / M - mean * mean, 0.0)           # biased var, clamped
    inv = gamma / jnp.sqrt(var + BN_EPS)
    scale = inv
    bias = beta - mean * inv

    tm2 = _pick_tm_rows(M, Cout)
    nt2 = pl.cdiv(M, tm2)
    out = pl.pallas_call(
        _bn_leaky_kernel,
        out_shape=jax.ShapeDtypeStruct((M, Cout), jnp.bfloat16),
        grid=(nt2,),
        in_specs=[
            pl.BlockSpec((tm2, Cout), lambda i: (i, 0)),
            pl.BlockSpec((1, Cout), lambda i: (0, 0)),
            pl.BlockSpec((1, Cout), lambda i: (0, 0)),
        ],
        out_specs=pl.BlockSpec((tm2, Cout), lambda i: (i, 0)),
        compiler_params=pltpu.CompilerParams(dimension_semantics=("parallel",)),
    )(raw, scale, bias)
    return out.reshape(N, Ho, Wo, Cout)


def final_conv_sigmoid(x_nhwc, w):
    """Final Conv2d(Cout=1, bias=False) + Sigmoid.

    Per the performance review: a (tm, 1) output block is maximally
    lane-sparse and the layer is tiny (M = batch), so this is a plain-JAX
    VPU row-dot rather than an MXU Pallas kernel.
    """
    N = x_nhwc.shape[0]
    patches, Ho, Wo = im2col_nhwc(x_nhwc, 4, 1, 0)         # (N*Ho*Wo, K)
    w_vec = w.transpose(2, 3, 1, 0).reshape(-1).astype(jnp.float32)
    logits = jnp.sum(patches.astype(jnp.float32) * w_vec[None, :], axis=-1)
    out = jax.nn.sigmoid(logits)
    return out.reshape(N, Ho, Wo, 1).transpose(0, 3, 1, 2)  # back to NCHW


def discriminator_forward(x_nchw, p):
    # Channels-last, bf16 activations end-to-end (C stays on the 128-lane axis).
    h = jnp.transpose(x_nchw, (0, 2, 3, 1)).astype(jnp.bfloat16)
    h = conv_leaky(h, p["w1"], 4, 2, 1)
    h = conv_bn_leaky(h, p["w2"], p["g2"], p["b2"], 4, 2, 1)
    h = conv_bn_leaky(h, p["w3"], p["g3"], p["b3"], 4, 2, 1)
    h = conv_bn_leaky(h, p["w4"], p["g4"], p["b4"], 4, 2, 1)
    return final_conv_sigmoid(h, p["w5"])                  # (N, 1, 1, 1)


# ---------------------------------------------------------------------------
# Deterministic parameter init + driver
# ---------------------------------------------------------------------------
def init_params(key, nc, ndf):
    ks = jax.random.split(key, 5)

    def w(k, co, ci):
        return jax.random.normal(k, (co, ci, 4, 4), jnp.float32) * 0.02

    p = {
        "w1": w(ks[0], ndf, nc),
        "w2": w(ks[1], ndf * 2, ndf),
        "w3": w(ks[2], ndf * 4, ndf * 2),
        "w4": w(ks[3], ndf * 8, ndf * 4),
        "w5": w(ks[4], 1, ndf * 8),
    }
    for i, c in ((2, ndf * 2), (3, ndf * 4), (4, ndf * 8)):
        p[f"g{i}"] = jnp.ones((1, c), jnp.float32)    # BatchNorm default weight
        p[f"b{i}"] = jnp.zeros((1, c), jnp.float32)   # BatchNorm default bias
    return p


if __name__ == "__main__":
    key = jax.random.PRNGKey(0)
    k_param, k_x = jax.random.split(key)

    # Small-but-valid DCGAN shapes: the 5-conv stack needs 64x64 input to end
    # at a 1x1 map (64 -> 32 -> 16 -> 8 -> 4 -> 1).
    N, nc, ndf, H = 2, 3, 8, 64
    params = init_params(k_param, nc, ndf)
    x = jax.random.normal(k_x, (N, nc, H, H), jnp.float32)

    fwd = jax.jit(discriminator_forward)
    out = fwd(x, params)
    out = jax.block_until_ready(out)

    assert out.shape == (N, 1, 1, 1), out.shape
    assert bool(jnp.all((out >= 0.0) & (out <= 1.0)))
    print("KERNEL_OK")
</pallas_src>

<mosaic_0001>
module attributes {stable_mosaic.version = 11 : i64} {
  func.func @_matmul_leaky_kernel(%arg0: i32, %arg1: memref<1024x48xbf16, #tpu.memory_space<vmem>>, %arg2: memref<48x8xbf16, #tpu.memory_space<vmem>>, %arg3: memref<1024x8xbf16, #tpu.memory_space<vmem>>) attributes {dimension_semantics = [#tpu.dimension_semantics<parallel>], iteration_bounds = array<i64: 2>, scalar_prefetch = 0 : i64, scratch_operands = 0 : i64, tpu.core_type = #tpu.core_type<tc>, window_params = [{transform_indices = @transform_0, window_bounds = array<i64: 1024, 48>}, {pipeline_mode = #tpu.pipeline_mode<synchronous>, transform_indices = @transform_1, window_bounds = array<i64: 48, 8>}, {transform_indices = @transform_2, window_bounds = array<i64: 1024, 8>}]} {
    %c0 = arith.constant 0 : index
    %c0_0 = arith.constant 0 : index
    %0 = vector.load %arg1[%c0, %c0_0] : memref<1024x48xbf16, #tpu.memory_space<vmem>>, vector<1024x48xbf16>
    %c0_1 = arith.constant 0 : index
    %c0_2 = arith.constant 0 : index
    %1 = vector.load %arg2[%c0_1, %c0_2] : memref<48x8xbf16, #tpu.memory_space<vmem>>, vector<48x8xbf16>
    %cst = arith.constant dense<0.000000e+00> : vector<1024x8xf32>
    %2 = tpu.matmul %0, %1, %cst {dimension_numbers = #tpu.dot_dimension_numbers<[1], [0], [0], [1], [0, 0, 1, 1], [], []>} : vector<1024x48xbf16>, vector<48x8xbf16>, vector<1024x8xf32> -> vector<1024x8xf32>
    %cst_3 = arith.constant 0.000000e+00 : f32
    %3 = vector.broadcast %cst_3 : f32 to vector<1024x8xf32>
    %4 = arith.cmpf oge, %2, %3 : vector<1024x8xf32>
    %cst_4 = arith.constant 2.000000e-01 : f32
    %5 = vector.broadcast %cst_4 : f32 to vector<1024x8xf32>
    %6 = arith.mulf %5, %2 : vector<1024x8xf32>
    %7 = arith.select %4, %2, %6 : vector<1024x8xi1>, vector<1024x8xf32>
    %8 = arith.truncf %7 : vector<1024x8xf32> to vector<1024x8xbf16>
    %c0_5 = arith.constant 0 : index
    %c0_6 = arith.constant 0 : index
    %9 = vector.load %arg3[%c0_5, %c0_6] : memref<1024x8xbf16, #tpu.memory_space<vmem>>, vector<1024x8xbf16>
    tpu.vector_store %arg3[%c0_5, %c0_6], %8 {strides = array<i32>} : memref<1024x8xbf16, #tpu.memory_space<vmem>>, vector<1024x8xbf16>,
    return
  }
  func.func @transform_0(%arg0: i32) -> (i32, i32) {
    %c0_i32 = arith.constant 0 : i32
    %c0_i32_0 = arith.constant 0 : i32
    return %arg0, %c0_i32 : i32, i32
  }
  func.func @transform_1(%arg0: i32) -> (i32, i32) {
    %c0_i32 = arith.constant 0 : i32
    %c0_i32_0 = arith.constant 0 : i32
    %c0_i32_1 = arith.constant 0 : i32
    return %c0_i32, %c0_i32_0 : i32, i32
  }
  func.func @transform_2(%arg0: i32) -> (i32, i32) {
    %c0_i32 = arith.constant 0 : i32
    %c0_i32_0 = arith.constant 0 : i32
    return %arg0, %c0_i32 : i32, i32
  }
}

module attributes {stable_mosaic.version = 11 : i64} {
  func.func @_matmul_stats_kernel(%arg0: i32, %arg1: memref<512x128xbf16, #tpu.memory_space<vmem>>, %arg2: memref<128x16xbf16, #tpu.memory_space<vmem>>, %arg3: memref<512x16xf32, #tpu.memory_space<vmem>>, %arg4: memref<1x1x16xf32, #tpu.memory_space<vmem>>, %arg5: memref<1x1x16xf32, #tpu.memory_space<vmem>>) attributes {dimension_semantics = [#tpu.dimension_semantics<parallel>], iteration_bounds = array<i64: 1>, scalar_prefetch = 0 : i64, scratch_operands = 0 : i64, tpu.core_type = #tpu.core_type<tc>, window_params = [{transform_indices = @transform_0, window_bounds = array<i64: 512, 128>}, {pipeline_mode = #tpu.pipeline_mode<synchronous>, transform_indices = @transform_1, window_bounds = array<i64: 128, 16>}, {transform_indices = @transform_2, window_bounds = array<i64: 512, 16>}, {transform_indices = @transform_3, window_bounds = array<i64: 1, 1, 16>}, {transform_indices = @transform_4, window_bounds = array<i64: 1, 1, 16>}]} {
    %c0 = arith.constant 0 : index
    %c0_0 = arith.constant 0 : index
    %0 = vector.load %arg1[%c0, %c0_0] : memref<512x128xbf16, #tpu.memory_space<vmem>>, vector<512x128xbf16>
    %c0_1 = arith.constant 0 : index
    %c0_2 = arith.constant 0 : index
    %1 = vector.load %arg2[%c0_1, %c0_2] : memref<128x16xbf16, #tpu.memory_space<vmem>>, vector<128x16xbf16>
    %cst = arith.constant dense<0.000000e+00> : vector<512x16xf32>
    %2 = tpu.matmul %0, %1, %cst {dimension_numbers = #tpu.dot_dimension_numbers<[1], [0], [0], [1], [0, 0, 1, 1], [], []>} : vector<512x128xbf16>, vector<128x16xbf16>, vector<512x16xf32> -> vector<512x16xf32>
    %c0_3 = arith.constant 0 : index
    %c0_4 = arith.constant 0 : index
    %3 = vector.load %arg3[%c0_3, %c0_4] : memref<512x16xf32, #tpu.memory_space<vmem>>, vector<512x16xf32>
    tpu.vector_store %arg3[%c0_3, %c0_4], %2 {strides = array<i32>} : memref<512x16xf32, #tpu.memory_space<vmem>>, vector<512x16xf32>,
    %4 = tpu.iota {dimensions = array<i32: 0>} : vector<512x16xi32>
    %c512_i32 = arith.constant 512 : i32
    %5 = arith.muli %arg0, %c512_i32 : i32
    %6 = vector.broadcast %5 : i32 to vector<512x16xi32>
    %7 = arith.addi %4, %6 : vector<512x16xi32>
    %c512_i32_5 = arith.constant 512 : i32
    %8 = vector.broadcast %c512_i32_5 : i32 to vector<512x16xi32>
    %9 = arith.cmpi slt, %7, %8 : vector<512x16xi32>
    %cst_6 = arith.constant 0.000000e+00 : f32
    %10 = vector.broadcast %cst_6 : f32 to vector<512x16xf32>
    %11 = arith.select %9, %2, %10 : vector<512x16xi1>, vector<512x16xf32>
    %cst_7 = arith.constant dense<0.000000e+00> : vector<16xf32>
    %12 = vector.multi_reduction <add>, %11, %cst_7 [0] : vector<512x16xf32> to vector<16xf32>
    %13 = vector.shape_cast %12 : vector<16xf32> to vector<1x16xf32>
    %14 = vector.shape_cast %13 : vector<1x16xf32> to vector<1x1x16xf32>
    %c0_8 = arith.constant 0 : index
    %c0_9 = arith.constant 0 : index
    %c0_10 = arith.constant 0 : index
    %15 = vector.load %arg4[%c0_8, %c0_9, %c0_10] : memref<1x1x16xf32, #tpu.memory_space<vmem>>, vector<1x1x16xf32>
    tpu.vector_store %arg4[%c0_8, %c0_9, %c0_10], %14 {strides = array<i32>} : memref<1x1x16xf32, #tpu.memory_space<vmem>>, vector<1x1x16xf32>,
    %16 = arith.mulf %11, %11 : vector<512x16xf32>
    %cst_11 = arith.constant dense<0.000000e+00> : vector<16xf32>
    %17 = vector.multi_reduction <add>, %16, %cst_11 [0] : vector<512x16xf32> to vector<16xf32>
    %18 = vector.shape_cast %17 : vector<16xf32> to vector<1x16xf32>
    %19 = vector.shape_cast %18 : vector<1x16xf32> to vector<1x1x16xf32>
    %c0_12 = arith.constant 0 : index
    %c0_13 = arith.constant 0 : index
    %c0_14 = arith.constant 0 : index
    %20 = vector.load %arg5[%c0_12, %c0_13, %c0_14] : memref<1x1x16xf32, #tpu.memory_space<vmem>>, vector<1x1x16xf32>
    tpu.vector_store %arg5[%c0_12, %c0_13, %c0_14], %19 {strides = array<i32>} : memref<1x1x16xf32, #tpu.memory_space<vmem>>, vector<1x1x16xf32>,
    return
  }
  func.func @transform_0(%arg0: i32) -> (i32, i32) {
    %c0_i32 = arith.constant 0 : i32
    %c0_i32_0 = arith.constant 0 : i32
    return %arg0, %c0_i32 : i32, i32
  }
  func.func @transform_1(%arg0: i32) -> (i32, i32) {
    %c0_i32 = arith.constant 0 : i32
    %c0_i32_0 = arith.constant 0 : i32
    %c0_i32_1 = arith.constant 0 : i32
    return %c0_i32, %c0_i32_0 : i32, i32
  }
  func.func @transform_2(%arg0: i32) -> (i32, i32) {
    %c0_i32 = arith.constant 0 : i32
    %c0_i32_0 = arith.constant 0 : i32
    return %arg0, %c0_i32 : i32, i32
  }
  func.func @transform_3(%arg0: i32) -> (i32, i32, i32) {
    %c0_i32 = arith.constant 0 : i32
    %c0_i32_0 = arith.constant 0 : i32
    %c0_i32_1 = arith.constant 0 : i32
    return %arg0, %c0_i32, %c0_i32_0 : i32, i32, i32
  }
  func.func @transform_4(%arg0: i32) -> (i32, i32, i32) {
    %c0_i32 = arith.constant 0 : i32
    %c0_i32_0 = arith.constant 0 : i32
    %c0_i32_1 = arith.constant 0 : i32
    return %arg0, %c0_i32, %c0_i32_0 : i32, i32, i32
  }
}

module attributes {stable_mosaic.version = 11 : i64} {
  func.func @_bn_leaky_kernel(%arg0: i32, %arg1: memref<512x16xf32, #tpu.memory_space<vmem>>, %arg2: memref<1x16xf32, #tpu.memory_space<vmem>>, %arg3: memref<1x16xf32, #tpu.memory_space<vmem>>, %arg4: memref<512x16xbf16, #tpu.memory_space<vmem>>) attributes {dimension_semantics = [#tpu.dimension_semantics<parallel>], iteration_bounds = array<i64: 1>, scalar_prefetch = 0 : i64, scratch_operands = 0 : i64, tpu.core_type = #tpu.core_type<tc>, window_params = [{transform_indices = @transform_0, window_bounds = array<i64: 512, 16>}, {pipeline_mode = #tpu.pipeline_mode<synchronous>, transform_indices = @transform_1, window_bounds = array<i64: 1, 16>}, {pipeline_mode = #tpu.pipeline_mode<synchronous>, transform_indices = @transform_2, window_bounds = array<i64: 1, 16>}, {transform_indices = @transform_3, window_bounds = array<i64: 512, 16>}]} {
    %c0 = arith.constant 0 : index
    %c0_0 = arith.constant 0 : index
    %0 = vector.load %arg1[%c0, %c0_0] : memref<512x16xf32, #tpu.memory_space<vmem>>, vector<512x16xf32>
    %c0_1 = arith.constant 0 : index
    %c0_2 = arith.constant 0 : index
    %1 = vector.load %arg2[%c0_1, %c0_2] : memref<1x16xf32, #tpu.memory_space<vmem>>, vector<1x16xf32>
    %2 = vector.broadcast %1 : vector<1x16xf32> to vector<512x16xf32>
    %3 = arith.mulf %0, %2 : vector<512x16xf32>
    %c0_3 = arith.constant 0 : index
    %c0_4 = arith.constant 0 : index
    %4 = vector.load %arg3[%c0_3, %c0_4] : memref<1x16xf32, #tpu.memory_space<vmem>>, vector<1x16xf32>
    %5 = vector.broadcast %4 : vector<1x16xf32> to vector<512x16xf32>
    %6 = arith.addf %3, %5 : vector<512x16xf32>
    %cst = arith.constant 0.000000e+00 : f32
    %7 = vector.broadcast %cst : f32 to vector<512x16xf32>
    %8 = arith.cmpf oge, %6, %7 : vector<512x16xf32>
    %cst_5 = arith.constant 2.000000e-01 : f32
    %9 = vector.broadcast %cst_5 : f32 to vector<512x16xf32>
    %10 = arith.mulf %9, %6 : vector<512x16xf32>
    %11 = arith.select %8, %6, %10 : vector<512x16xi1>, vector<512x16xf32>
    %12 = arith.truncf %11 : vector<512x16xf32> to vector<512x16xbf16>
    %c0_6 = arith.constant 0 : index
    %c0_7 = arith.constant 0 : index
    %13 = vector.load %arg4[%c0_6, %c0_7] : memref<512x16xbf16, #tpu.memory_space<vmem>>, vector<512x16xbf16>
    tpu.vector_store %arg4[%c0_6, %c0_7], %12 {strides = array<i32>} : memref<512x16xbf16, #tpu.memory_space<vmem>>, vector<512x16xbf16>,
    return
  }
  func.func @transform_0(%arg0: i32) -> (i32, i32) {
    %c0_i32 = arith.constant 0 : i32
    %c0_i32_0 = arith.constant 0 : i32
    return %arg0, %c0_i32 : i32, i32
  }
  func.func @transform_1(%arg0: i32) -> (i32, i32) {
    %c0_i32 = arith.constant 0 : i32
    %c0_i32_0 = arith.constant 0 : i32
    %c0_i32_1 = arith.constant 0 : i32
    return %c0_i32, %c0_i32_0 : i32, i32
  }
  func.func @transform_2(%arg0: i32) -> (i32, i32) {
    %c0_i32 = arith.constant 0 : i32
    %c0_i32_0 = arith.constant 0 : i32
    %c0_i32_1 = arith.constant 0 : i32
    return %c0_i32, %c0_i32_0 : i32, i32
  }
  func.func @transform_3(%arg0: i32) -> (i32, i32) {
    %c0_i32 = arith.constant 0 : i32
    %c0_i32_0 = arith.constant 0 : i32
    return %arg0, %c0_i32 : i32, i32
  }
}

module attributes {stable_mosaic.version = 11 : i64} {
  func.func @_matmul_stats_kernel(%arg0: i32, %arg1: memref<128x256xbf16, #tpu.memory_space<vmem>>, %arg2: memref<256x32xbf16, #tpu.memory_space<vmem>>, %arg3: memref<128x32xf32, #tpu.memory_space<vmem>>, %arg4: memref<1x1x32xf32, #tpu.memory_space<vmem>>, %arg5: memref<1x1x32xf32, #tpu.memory_space<vmem>>) attributes {dimension_semantics = [#tpu.dimension_semantics<parallel>], iteration_bounds = array<i64: 1>, scalar_prefetch = 0 : i64, scratch_operands = 0 : i64, tpu.core_type = #tpu.core_type<tc>, window_params = [{transform_indices = @transform_0, window_bounds = array<i64: 128, 256>}, {pipeline_mode = #tpu.pipeline_mode<synchronous>, transform_indices = @transform_1, window_bounds = array<i64: 256, 32>}, {transform_indices = @transform_2, window_bounds = array<i64: 128, 32>}, {transform_indices = @transform_3, window_bounds = array<i64: 1, 1, 32>}, {transform_indices = @transform_4, window_bounds = array<i64: 1, 1, 32>}]} {
    %c0 = arith.constant 0 : index
    %c0_0 = arith.constant 0 : index
    %0 = vector.load %arg1[%c0, %c0_0] : memref<128x256xbf16, #tpu.memory_space<vmem>>, vector<128x256xbf16>
    %c0_1 = arith.constant 0 : index
    %c0_2 = arith.constant 0 : index
    %1 = vector.load %arg2[%c0_1, %c0_2] : memref<256x32xbf16, #tpu.memory_space<vmem>>, vector<256x32xbf16>
    %cst = arith.constant dense<0.000000e+00> : vector<128x32xf32>
    %2 = tpu.matmul %0, %1, %cst {dimension_numbers = #tpu.dot_dimension_numbers<[1], [0], [0], [1], [0, 0, 1, 1], [], []>} : vector<128x256xbf16>, vector<256x32xbf16>, vector<128x32xf32> -> vector<128x32xf32>
    %c0_3 = arith.constant 0 : index
    %c0_4 = arith.constant 0 : index
    %3 = vector.load %arg3[%c0_3, %c0_4] : memref<128x32xf32, #tpu.memory_space<vmem>>, vector<128x32xf32>
    tpu.vector_store %arg3[%c0_3, %c0_4], %2 {strides = array<i32>} : memref<128x32xf32, #tpu.memory_space<vmem>>, vector<128x32xf32>,
    %4 = tpu.iota {dimensions = array<i32: 0>} : vector<128x32xi32>
    %c128_i32 = arith.constant 128 : i32
    %5 = arith.muli %arg0, %c128_i32 : i32
    %6 = vector.broadcast %5 : i32 to vector<128x32xi32>
    %7 = arith.addi %4, %6 : vector<128x32xi32>
    %c128_i32_5 = arith.constant 128 : i32
    %8 = vector.broadcast %c128_i32_5 : i32 to vector<128x32xi32>
    %9 = arith.cmpi slt, %7, %8 : vector<128x32xi32>
    %cst_6 = arith.constant 0.000000e+00 : f32
    %10 = vector.broadcast %cst_6 : f32 to vector<128x32xf32>
    %11 = arith.select %9, %2, %10 : vector<128x32xi1>, vector<128x32xf32>
    %cst_7 = arith.constant dense<0.000000e+00> : vector<32xf32>
    %12 = vector.multi_reduction <add>, %11, %cst_7 [0] : vector<128x32xf32> to vector<32xf32>
    %13 = vector.shape_cast %12 : vector<32xf32> to vector<1x32xf32>
    %14 = vector.shape_cast %13 : vector<1x32xf32> to vector<1x1x32xf32>
    %c0_8 = arith.constant 0 : index
    %c0_9 = arith.constant 0 : index
    %c0_10 = arith.constant 0 : index
    %15 = vector.load %arg4[%c0_8, %c0_9, %c0_10] : memref<1x1x32xf32, #tpu.memory_space<vmem>>, vector<1x1x32xf32>
    tpu.vector_store %arg4[%c0_8, %c0_9, %c0_10], %14 {strides = array<i32>} : memref<1x1x32xf32, #tpu.memory_space<vmem>>, vector<1x1x32xf32>,
    %16 = arith.mulf %11, %11 : vector<128x32xf32>
    %cst_11 = arith.constant dense<0.000000e+00> : vector<32xf32>
    %17 = vector.multi_reduction <add>, %16, %cst_11 [0] : vector<128x32xf32> to vector<32xf32>
    %18 = vector.shape_cast %17 : vector<32xf32> to vector<1x32xf32>
    %19 = vector.shape_cast %18 : vector<1x32xf32> to vector<1x1x32xf32>
    %c0_12 = arith.constant 0 : index
    %c0_13 = arith.constant 0 : index
    %c0_14 = arith.constant 0 : index
    %20 = vector.load %arg5[%c0_12, %c0_13, %c0_14] : memref<1x1x32xf32, #tpu.memory_space<vmem>>, vector<1x1x32xf32>
    tpu.vector_store %arg5[%c0_12, %c0_13, %c0_14], %19 {strides = array<i32>} : memref<1x1x32xf32, #tpu.memory_space<vmem>>, vector<1x1x32xf32>,
    return
  }
  func.func @transform_0(%arg0: i32) -> (i32, i32) {
    %c0_i32 = arith.constant 0 : i32
    %c0_i32_0 = arith.constant 0 : i32
    return %arg0, %c0_i32 : i32, i32
  }
  func.func @transform_1(%arg0: i32) -> (i32, i32) {
    %c0_i32 = arith.constant 0 : i32
    %c0_i32_0 = arith.constant 0 : i32
    %c0_i32_1 = arith.constant 0 : i32
    return %c0_i32, %c0_i32_0 : i32, i32
  }
  func.func @transform_2(%arg0: i32) -> (i32, i32) {
    %c0_i32 = arith.constant 0 : i32
    %c0_i32_0 = arith.constant 0 : i32
    return %arg0, %c0_i32 : i32, i32
  }
  func.func @transform_3(%arg0: i32) -> (i32, i32, i32) {
    %c0_i32 = arith.constant 0 : i32
    %c0_i32_0 = arith.constant 0 : i32
    %c0_i32_1 = arith.constant 0 : i32
    return %arg0, %c0_i32, %c0_i32_0 : i32, i32, i32
  }
  func.func @transform_4(%arg0: i32) -> (i32, i32, i32) {
    %c0_i32 = arith.constant 0 : i32
    %c0_i32_0 = arith.constant 0 : i32
    %c0_i32_1 = arith.constant 0 : i32
    return %arg0, %c0_i32, %c0_i32_0 : i32, i32, i32
  }
}

module attributes {stable_mosaic.version = 11 : i64} {
  func.func @_bn_leaky_kernel(%arg0: i32, %arg1: memref<128x32xf32, #tpu.memory_space<vmem>>, %arg2: memref<1x32xf32, #tpu.memory_space<vmem>>, %arg3: memref<1x32xf32, #tpu.memory_space<vmem>>, %arg4: memref<128x32xbf16, #tpu.memory_space<vmem>>) attributes {dimension_semantics = [#tpu.dimension_semantics<parallel>], iteration_bounds = array<i64: 1>, scalar_prefetch = 0 : i64, scratch_operands = 0 : i64, tpu.core_type = #tpu.core_type<tc>, window_params = [{transform_indices = @transform_0, window_bounds = array<i64: 128, 32>}, {pipeline_mode = #tpu.pipeline_mode<synchronous>, transform_indices = @transform_1, window_bounds = array<i64: 1, 32>}, {pipeline_mode = #tpu.pipeline_mode<synchronous>, transform_indices = @transform_2, window_bounds = array<i64: 1, 32>}, {transform_indices = @transform_3, window_bounds = array<i64: 128, 32>}]} {
    %c0 = arith.constant 0 : index
    %c0_0 = arith.constant 0 : index
    %0 = vector.load %arg1[%c0, %c0_0] : memref<128x32xf32, #tpu.memory_space<vmem>>, vector<128x32xf32>
    %c0_1 = arith.constant 0 : index
    %c0_2 = arith.constant 0 : index
    %1 = vector.load %arg2[%c0_1, %c0_2] : memref<1x32xf32, #tpu.memory_space<vmem>>, vector<1x32xf32>
    %2 = vector.broadcast %1 : vector<1x32xf32> to vector<128x32xf32>
    %3 = arith.mulf %0, %2 : vector<128x32xf32>
    %c0_3 = arith.constant 0 : index
    %c0_4 = arith.constant 0 : index
    %4 = vector.load %arg3[%c0_3, %c0_4] : memref<1x32xf32, #tpu.memory_space<vmem>>, vector<1x32xf32>
    %5 = vector.broadcast %4 : vector<1x32xf32> to vector<128x32xf32>
    %6 = arith.addf %3, %5 : vector<128x32xf32>
    %cst = arith.constant 0.000000e+00 : f32
    %7 = vector.broadcast %cst : f32 to vector<128x32xf32>
    %8 = arith.cmpf oge, %6, %7 : vector<128x32xf32>
    %cst_5 = arith.constant 2.000000e-01 : f32
    %9 = vector.broadcast %cst_5 : f32 to vector<128x32xf32>
    %10 = arith.mulf %9, %6 : vector<128x32xf32>
    %11 = arith.select %8, %6, %10 : vector<128x32xi1>, vector<128x32xf32>
    %12 = arith.truncf %11 : vector<128x32xf32> to vector<128x32xbf16>
    %c0_6 = arith.constant 0 : index
    %c0_7 = arith.constant 0 : index
    %13 = vector.load %arg4[%c0_6, %c0_7] : memref<128x32xbf16, #tpu.memory_space<vmem>>, vector<128x32xbf16>
    tpu.vector_store %arg4[%c0_6, %c0_7], %12 {strides = array<i32>} : memref<128x32xbf16, #tpu.memory_space<vmem>>, vector<128x32xbf16>,
    return
  }
  func.func @transform_0(%arg0: i32) -> (i32, i32) {
    %c0_i32 = arith.constant 0 : i32
    %c0_i32_0 = arith.constant 0 : i32
    return %arg0, %c0_i32 : i32, i32
  }
  func.func @transform_1(%arg0: i32) -> (i32, i32) {
    %c0_i32 = arith.constant 0 : i32
    %c0_i32_0 = arith.constant 0 : i32
    %c0_i32_1 = arith.constant 0 : i32
    return %c0_i32, %c0_i32_0 : i32, i32
  }
  func.func @transform_2(%arg0: i32) -> (i32, i32) {
    %c0_i32 = arith.constant 0 : i32
    %c0_i32_0 = arith.constant 0 : i32
    %c0_i32_1 = arith.constant 0 : i32
    return %c0_i32, %c0_i32_0 : i32, i32
  }
  func.func @transform_3(%arg0: i32) -> (i32, i32) {
    %c0_i32 = arith.constant 0 : i32
    %c0_i32_0 = arith.constant 0 : i32
    return %arg0, %c0_i32 : i32, i32
  }
}

module attributes {stable_mosaic.version = 11 : i64} {
  func.func @_matmul_stats_kernel(%arg0: i32, %arg1: memref<32x512xbf16, #tpu.memory_space<vmem>>, %arg2: memref<512x64xbf16, #tpu.memory_space<vmem>>, %arg3: memref<32x64xf32, #tpu.memory_space<vmem>>, %arg4: memref<1x1x64xf32, #tpu.memory_space<vmem>>, %arg5: memref<1x1x64xf32, #tpu.memory_space<vmem>>) attributes {dimension_semantics = [#tpu.dimension_semantics<parallel>], iteration_bounds = array<i64: 1>, scalar_prefetch = 0 : i64, scratch_operands = 0 : i64, tpu.core_type = #tpu.core_type<tc>, window_params = [{transform_indices = @transform_0, window_bounds = array<i64: 32, 512>}, {pipeline_mode = #tpu.pipeline_mode<synchronous>, transform_indices = @transform_1, window_bounds = array<i64: 512, 64>}, {transform_indices = @transform_2, window_bounds = array<i64: 32, 64>}, {transform_indices = @transform_3, window_bounds = array<i64: 1, 1, 64>}, {transform_indices = @transform_4, window_bounds = array<i64: 1, 1, 64>}]} {
    %c0 = arith.constant 0 : index
    %c0_0 = arith.constant 0 : index
    %0 = vector.load %arg1[%c0, %c0_0] : memref<32x512xbf16, #tpu.memory_space<vmem>>, vector<32x512xbf16>
    %c0_1 = arith.constant 0 : index
    %c0_2 = arith.constant 0 : index
    %1 = vector.load %arg2[%c0_1, %c0_2] : memref<512x64xbf16, #tpu.memory_space<vmem>>, vector<512x64xbf16>
    %cst = arith.constant dense<0.000000e+00> : vector<32x64xf32>
    %2 = tpu.matmul %0, %1, %cst {dimension_numbers = #tpu.dot_dimension_numbers<[1], [0], [0], [1], [0, 0, 1, 1], [], []>} : vector<32x512xbf16>, vector<512x64xbf16>, vector<32x64xf32> -> vector<32x64xf32>
    %c0_3 = arith.constant 0 : index
    %c0_4 = arith.constant 0 : index
    %3 = vector.load %arg3[%c0_3, %c0_4] : memref<32x64xf32, #tpu.memory_space<vmem>>, vector<32x64xf32>
    tpu.vector_store %arg3[%c0_3, %c0_4], %2 {strides = array<i32>} : memref<32x64xf32, #tpu.memory_space<vmem>>, vector<32x64xf32>,
    %4 = tpu.iota {dimensions = array<i32: 0>} : vector<32x64xi32>
    %c32_i32 = arith.constant 32 : i32
    %5 = arith.muli %arg0, %c32_i32 : i32
    %6 = vector.broadcast %5 : i32 to vector<32x64xi32>
    %7 = arith.addi %4, %6 : vector<32x64xi32>
    %c32_i32_5 = arith.constant 32 : i32
    %8 = vector.broadcast %c32_i32_5 : i32 to vector<32x64xi32>
    %9 = arith.cmpi slt, %7, %8 : vector<32x64xi32>
    %cst_6 = arith.constant 0.000000e+00 : f32
    %10 = vector.broadcast %cst_6 : f32 to vector<32x64xf32>
    %11 = arith.select %9, %2, %10 : vector<32x64xi1>, vector<32x64xf32>
    %cst_7 = arith.constant dense<0.000000e+00> : vector<64xf32>
    %12 = vector.multi_reduction <add>, %11, %cst_7 [0] : vector<32x64xf32> to vector<64xf32>
    %13 = vector.shape_cast %12 : vector<64xf32> to vector<1x64xf32>
    %14 = vector.shape_cast %13 : vector<1x64xf32> to vector<1x1x64xf32>
    %c0_8 = arith.constant 0 : index
    %c0_9 = arith.constant 0 : index
    %c0_10 = arith.constant 0 : index
    %15 = vector.load %arg4[%c0_8, %c0_9, %c0_10] : memref<1x1x64xf32, #tpu.memory_space<vmem>>, vector<1x1x64xf32>
    tpu.vector_store %arg4[%c0_8, %c0_9, %c0_10], %14 {strides = array<i32>} : memref<1x1x64xf32, #tpu.memory_space<vmem>>, vector<1x1x64xf32>,
    %16 = arith.mulf %11, %11 : vector<32x64xf32>
    %cst_11 = arith.constant dense<0.000000e+00> : vector<64xf32>
    %17 = vector.multi_reduction <add>, %16, %cst_11 [0] : vector<32x64xf32> to vector<64xf32>
    %18 = vector.shape_cast %17 : vector<64xf32> to vector<1x64xf32>
    %19 = vector.shape_cast %18 : vector<1x64xf32> to vector<1x1x64xf32>
    %c0_12 = arith.constant 0 : index
    %c0_13 = arith.constant 0 : index
    %c0_14 = arith.constant 0 : index
    %20 = vector.load %arg5[%c0_12, %c0_13, %c0_14] : memref<1x1x64xf32, #tpu.memory_space<vmem>>, vector<1x1x64xf32>
    tpu.vector_store %arg5[%c0_12, %c0_13, %c0_14], %19 {strides = array<i32>} : memref<1x1x64xf32, #tpu.memory_space<vmem>>, vector<1x1x64xf32>,
    return
  }
  func.func @transform_0(%arg0: i32) -> (i32, i32) {
    %c0_i32 = arith.constant 0 : i32
    %c0_i32_0 = arith.constant 0 : i32
    return %arg0, %c0_i32 : i32, i32
  }
  func.func @transform_1(%arg0: i32) -> (i32, i32) {
    %c0_i32 = arith.constant 0 : i32
    %c0_i32_0 = arith.constant 0 : i32
    %c0_i32_1 = arith.constant 0 : i32
    return %c0_i32, %c0_i32_0 : i32, i32
  }
  func.func @transform_2(%arg0: i32) -> (i32, i32) {
    %c0_i32 = arith.constant 0 : i32
    %c0_i32_0 = arith.constant 0 : i32
    return %arg0, %c0_i32 : i32, i32
  }
  func.func @transform_3(%arg0: i32) -> (i32, i32, i32) {
    %c0_i32 = arith.constant 0 : i32
    %c0_i32_0 = arith.constant 0 : i32
    %c0_i32_1 = arith.constant 0 : i32
    return %arg0, %c0_i32, %c0_i32_0 : i32, i32, i32
  }
  func.func @transform_4(%arg0: i32) -> (i32, i32, i32) {
    %c0_i32 = arith.constant 0 : i32
    %c0_i32_0 = arith.constant 0 : i32
    %c0_i32_1 = arith.constant 0 : i32
    return %arg0, %c0_i32, %c0_i32_0 : i32, i32, i32
  }
}

module attributes {stable_mosaic.version = 11 : i64} {
  func.func @_bn_leaky_kernel(%arg0: i32, %arg1: memref<32x64xf32, #tpu.memory_space<vmem>>, %arg2: memref<1x64xf32, #tpu.memory_space<vmem>>, %arg3: memref<1x64xf32, #tpu.memory_space<vmem>>, %arg4: memref<32x64xbf16, #tpu.memory_space<vmem>>) attributes {dimension_semantics = [#tpu.dimension_semantics<parallel>], iteration_bounds = array<i64: 1>, scalar_prefetch = 0 : i64, scratch_operands = 0 : i64, tpu.core_type = #tpu.core_type<tc>, window_params = [{transform_indices = @transform_0, window_bounds = array<i64: 32, 64>}, {pipeline_mode = #tpu.pipeline_mode<synchronous>, transform_indices = @transform_1, window_bounds = array<i64: 1, 64>}, {pipeline_mode = #tpu.pipeline_mode<synchronous>, transform_indices = @transform_2, window_bounds = array<i64: 1, 64>}, {transform_indices = @transform_3, window_bounds = array<i64: 32, 64>}]} {
    %c0 = arith.constant 0 : index
    %c0_0 = arith.constant 0 : index
    %0 = vector.load %arg1[%c0, %c0_0] : memref<32x64xf32, #tpu.memory_space<vmem>>, vector<32x64xf32>
    %c0_1 = arith.constant 0 : index
    %c0_2 = arith.constant 0 : index
    %1 = vector.load %arg2[%c0_1, %c0_2] : memref<1x64xf32, #tpu.memory_space<vmem>>, vector<1x64xf32>
    %2 = vector.broadcast %1 : vector<1x64xf32> to vector<32x64xf32>
    %3 = arith.mulf %0, %2 : vector<32x64xf32>
    %c0_3 = arith.constant 0 : index
    %c0_4 = arith.constant 0 : index
    %4 = vector.load %arg3[%c0_3, %c0_4] : memref<1x64xf32, #tpu.memory_space<vmem>>, vector<1x64xf32>
    %5 = vector.broadcast %4 : vector<1x64xf32> to vector<32x64xf32>
    %6 = arith.addf %3, %5 : vector<32x64xf32>
    %cst = arith.constant 0.000000e+00 : f32
    %7 = vector.broadcast %cst : f32 to vector<32x64xf32>
    %8 = arith.cmpf oge, %6, %7 : vector<32x64xf32>
    %cst_5 = arith.constant 2.000000e-01 : f32
    %9 = vector.broadcast %cst_5 : f32 to vector<32x64xf32>
    %10 = arith.mulf %9, %6 : vector<32x64xf32>
    %11 = arith.select %8, %6, %10 : vector<32x64xi1>, vector<32x64xf32>
    %12 = arith.truncf %11 : vector<32x64xf32> to vector<32x64xbf16>
    %c0_6 = arith.constant 0 : index
    %c0_7 = arith.constant 0 : index
    %13 = vector.load %arg4[%c0_6, %c0_7] : memref<32x64xbf16, #tpu.memory_space<vmem>>, vector<32x64xbf16>
    tpu.vector_store %arg4[%c0_6, %c0_7], %12 {strides = array<i32>} : memref<32x64xbf16, #tpu.memory_space<vmem>>, vector<32x64xbf16>,
    return
  }
  func.func @transform_0(%arg0: i32) -> (i32, i32) {
    %c0_i32 = arith.constant 0 : i32
    %c0_i32_0 = arith.constant 0 : i32
    return %arg0, %c0_i32 : i32, i32
  }
  func.func @transform_1(%arg0: i32) -> (i32, i32) {
    %c0_i32 = arith.constant 0 : i32
    %c0_i32_0 = arith.constant 0 : i32
    %c0_i32_1 = arith.constant 0 : i32
    return %c0_i32, %c0_i32_0 : i32, i32
  }
  func.func @transform_2(%arg0: i32) -> (i32, i32) {
    %c0_i32 = arith.constant 0 : i32
    %c0_i32_0 = arith.constant 0 : i32
    %c0_i32_1 = arith.constant 0 : i32
    return %c0_i32, %c0_i32_0 : i32, i32
  }
  func.func @transform_3(%arg0: i32) -> (i32, i32) {
    %c0_i32 = arith.constant 0 : i32
    %c0_i32_0 = arith.constant 0 : i32
    return %arg0, %c0_i32 : i32, i32
  }
}

</mosaic_0001>

<llo_original>
// kernel: discriminator_forward.7
$region0: #{discriminator_forward.7}
  #allocation0 [shape = 'u32[]', space=smem, size = 0x4, offset = 0x4, fixed_abs, tag = 'smem constant byte address 0x4 - core index']
  #allocation1 [shape = 'u32[144,128]{1,0:T(1,128)}', space=vmem, size = 0x12000, scoped, tag = 'internal scratch']
  %s0 = inlined_call_operand.vmem [shape: bf16[2048,48], index: 0, kind: input, shape index: {}]
  %s1 = inlined_call_operand.vmem [shape: bf16[48,8], index: 1, kind: input, shape index: {}]
  %s2 = inlined_call_operand.vmem [shape: bf16[2048,8], index: 2, kind: output, shape index: {}]
  %s3 = sld [smem:[#allocation0]]
  $region41: #{discriminator_forward.7} parent=0
    _
  %s5 = ssub.s32 1, %s3
  %s6 = scalar_select 0, %s5, %s3
  loop: start=0, step=1, limit=4
  $region2: #{discriminator_forward.7} parent=0 // loop_pre_header
    _
  $region3: #{discriminator_forward.7} parent=0 // loop_header
    %s8 = sphi 0, %s12
    %p9 = scmp.ge.s32.totalorder %s8, 4
    %s18 = sphi 0, %s20
    %s21 = sphi 0, %s18
    %s22 = sphi 0, %s21
    %s38 = sphi 0, %s22
    %s42 = sphi 0, %s42
    %s44 = sphi 0, %s42
    %s45 = sphi 0, %s44
    %s59 = sphi 0, %s45
    %s65 = sphi 0, %s67
    %s68 = sphi 0, %s65
    %s69 = sphi 0, %s68
    %s85 = sphi 0, %s69
  $region4: #{discriminator_forward.7} parent=0 // loop_header_branch
    %11 = sbr.rel (%p9) target = $region8
  $region5: #{discriminator_forward.7} parent=0 // loop_body
    %s13 = ssub.s32 %s8, 1
    %s14 = ssub.s32 %s8, 2
    %s15 = sadd.s32 %s8, 1
    %s16 = ssub.s32 %s8, %s15
    %p17 = scmp.eq.s32.totalorder %s16, 0
    %s19 = sadd.s32 %s18, 1
    %s20 = scalar_select %p17, %s18, %s19
    %p23 = pneg %p17
    %p24 = scmp.eq.s32.totalorder %s8, 1
    %p25 = por %p23, %p24
    %p26 = scmp.ne.s32.totalorder %s18, %s21
    %p27 = scmp.eq.s32.totalorder %s8, 0
    %p28 = por %p26, %p27
    %p29 = scmp.ne.s32.totalorder %s18, %s21
    %p30 = scmp.eq.s32.totalorder %s13, 1
    %p31 = por %p29, %p30
    %p32 = scmp.ne.s32.totalorder %s21, %s22
    %p33 = scmp.eq.s32.totalorder %s13, 0
    %p34 = por %p32, %p33
    %p35 = scmp.ne.s32.totalorder %s21, %s22
    %p36 = scmp.eq.s32.totalorder %s14, 1
    %p37 = por %p35, %p36
    %p39 = scmp.ne.s32.totalorder %s22, %s38
    %p40 = scmp.eq.s32.totalorder %s14, 0
    %p41 = por %p39, %p40
    %s43 = sadd.s32 %s42, 1
    %p46 = scmp.eq.s32.totalorder %s8, 1
    %p47 = scmp.ne.s32.totalorder %s42, %s44
    %p48 = scmp.eq.s32.totalorder %s8, 0
    %p49 = por %p47, %p48
    %p50 = scmp.ne.s32.totalorder %s42, %s44
    %p51 = scmp.eq.s32.totalorder %s13, 1
    %p52 = por %p50, %p51
    %p53 = scmp.ne.s32.totalorder %s44, %s45
    %p54 = scmp.eq.s32.totalorder %s13, 0
    %p55 = por %p53, %p54
    %p56 = scmp.ne.s32.totalorder %s44, %s45
    %p57 = scmp.eq.s32.totalorder %s14, 1
    %p58 = por %p56, %p57
    %p60 = scmp.ne.s32.totalorder %s45, %s59
    %p61 = scmp.eq.s32.totalorder %s14, 0
    %p62 = por %p60, %p61
    %s63 = ssub.s32 %s8, %s15
    %p64 = scmp.eq.s32.totalorder %s63, 0
    %s66 = sadd.s32 %s65, 1
    %s67 = scalar_select %p64, %s65, %s66
    %p70 = pneg %p64
    %p71 = scmp.eq.s32.totalorder %s8, 1
    %p72 = por %p70, %p71
    %p73 = scmp.ne.s32.totalorder %s65, %s68
    %p74 = scmp.eq.s32.totalorder %s8, 0
    %p75 = por %p73, %p74
    %p76 = scmp.ne.s32.totalorder %s65, %s68
    %p77 = scmp.eq.s32.totalorder %s13, 1
    %p78 = por %p76, %p77
    %p79 = scmp.ne.s32.totalorder %s68, %s69
    %p80 = scmp.eq.s32.totalorder %s13, 0
    %p81 = por %p79, %p80
    %p82 = scmp.ne.s32.totalorder %s68, %s69
    %p83 = scmp.eq.s32.totalorder %s14, 1
    %p84 = por %p82, %p83
    %p86 = scmp.ne.s32.totalorder %s69, %s85
    %p87 = scmp.eq.s32.totalorder %s14, 0
    %p88 = por %p86, %p87
    %p89 = scmp.le.s32.totalorder 1, %s8
    %p90 = scmp.lt.s32.totalorder %s8, 3
    %p91 = pnand %p89, %p90
    %p92 = pneg %p91
    // Predicated region
    $region9: #{discriminator_forward.7} parent=5 // pred_check
      _
    $region10: #{discriminator_forward.7} parent=5 // pred_check_branch
      %94 = sbr.rel (%p91) target = $region12
    $region11: #{discriminator_forward.7} parent=5 // pred_region
      %s95 = ssub.s32 %s8, 1
      // Predicated region
      $region13: #{discriminator_forward.7} parent=11 // pred_check
        %p96 = pneg %p55
      $region14: #{discriminator_forward.7} parent=11 // pred_check_branch
        %98 = sbr.rel (%p96) target = $region16
      $region15: #{discriminator_forward.7} parent=11 // pred_region
        _
      $region16: #{discriminator_forward.7} parent=11 // pred_fallthru
        _
    $region12: #{discriminator_forward.7} parent=5 // pred_fallthru
      _
    %p99 = scmp.lt.s32.totalorder %s8, 2
    // Predicated region
    $region17: #{discriminator_forward.7} parent=5 // pred_check
      %p100 = pneg %p99
    $region18: #{discriminator_forward.7} parent=5 // pred_check_branch
      %102 = sbr.rel (%p100) target = $region20
    $region19: #{discriminator_forward.7} parent=5 // pred_region
      // Predicated region
      $region21: #{discriminator_forward.7} parent=19 // pred_check
        %p103 = pneg %p28
      $region22: #{discriminator_forward.7} parent=19 // pred_check_branch
        %105 = sbr.rel (%p103) target = $region24
      $region23: #{discriminator_forward.7} parent=19 // pred_region
        %s106 = smul.u32 128, %s8
        %p107 = scmp.lt.s32.totalorder %s106, 255
        %s108 = scalar_select %p107, %s106, 255
        %s109 = smul.addr %s108, 4
        %s110 = scalar_lea.vmem %s0, %s109
        %s111 = smul.u32 128, %s8
      $region24: #{discriminator_forward.7} parent=19 // pred_fallthru
        _
    $region20: #{discriminator_forward.7} parent=5 // pred_fallthru
      _
    %p112 = scmp.le.s32.totalorder 1, %s8
    %p113 = scmp.lt.s32.totalorder %s8, 3
    %p114 = pnand %p112, %p113
    %p115 = pneg %p114
    // Predicated region
    $region25: #{discriminator_forward.7} parent=5 // pred_check
      _
    $region26: #{discriminator_forward.7} parent=5 // pred_check_branch
      %117 = sbr.rel (%p114) target = $region28
    $region27: #{discriminator_forward.7} parent=5 // pred_region
      %s118 = ssub.s32 %s8, 1
      %s119 = smul.u32 128, %s13
      %p120 = scmp.lt.s32.totalorder %s119, 255
      %s121 = scalar_select %p120, %s119, 255
      %s122 = smul.addr %s121, 4
      %s123 = scalar_lea.vmem %s0, %s122
      %p124 = pneg %p34
      %p125 = pneg %p31
      %p126 = pneg %p55
      %p127 = pneg %p52
      %p128 = pneg %p81
      %p129 = pneg %p78
      %s130 = smul.u32 128, %s13
      %p131 = scmp.lt.s32.totalorder %s130, 255
      %s132 = scalar_select %p131, %s130, 255
      %s133 = smul.addr %s132, 4
      %s134 = scalar_lea.vmem %s2, %s133
      %s135 = smul.u32 128, %s13
      %p136 = scmp.lt.s32.totalorder %s135, 255
      %s137 = scalar_select %p136, %s135, 255
      %s138 = smul.addr %s137, 4
      %s139 = scalar_lea.vmem %s0, %s138
      %s140 = smul.u32 128, %s13
      %s141 = smul.u32 128, %s13
      %p142 = scmp.lt.s32.totalorder %s141, 255
      %s143 = scalar_select %p142, %s141, 255
      %s144 = smul.addr %s143, 4
      %s145 = scalar_lea.vmem %s2, %s144
      %s146 = smul.u32 128, %s13
      %v148 = vld [vmem:[%s139] sm:$0xf]
      %v149 = vld [vmem:[%s139 + $0x4] sm:$0xf]
      %v150 = vld [vmem:[%s139 + $0x8] sm:$0xf]
      %v151 = vld [vmem:[%s139 + $0xc] sm:$0xf]
      %v152 = vld [vmem:[%s139 + $0x10] sm:$0xf]
      %v153 = vld [vmem:[%s139 + $0x14] sm:$0xf]
      %v154 = vld [vmem:[%s139 + $0x18] sm:$0xf]
      %v155 = vld [vmem:[%s139 + $0x1c] sm:$0xf]
      %v156 = vld [vmem:[%s139 + $0x20] sm:$0xf]
      %v157 = vld [vmem:[%s139 + $0x24] sm:$0xf]
      %v158 = vld [vmem:[%s139 + $0x28] sm:$0xf]
      %v159 = vld [vmem:[%s139 + $0x2c] sm:$0xf]
      %v160 = vld [vmem:[%s139 + $0x30] sm:$0xf]
      %v161 = vld [vmem:[%s139 + $0x34] sm:$0xf]
      %v162 = vld [vmem:[%s139 + $0x38] sm:$0xf]
      %v163 = vld [vmem:[%s139 + $0x3c] sm:$0xf]
      %v164 = vld [vmem:[%s139 + $0x40] sm:$0xf]
      %v165 = vld [vmem:[%s139 + $0x44] sm:$0xf]
      %v166 = vld [vmem:[%s139 + $0x48] sm:$0xf]
      %v167 = vld [vmem:[%s139 + $0x4c] sm:$0xf]
      %v168 = vld [vmem:[%s139 + $0x50] sm:$0xf]
      %v169 = vld [vmem:[%s139 + $0x54] sm:$0xf]
      %v170 = vld [vmem:[%s139 + $0x58] sm:$0xf]
      %v171 = vld [vmem:[%s139 + $0x5c] sm:$0xf]
      %v172 = vld [vmem:[%s139 + $0x60] sm:$0xf]
      %v173 = vld [vmem:[%s139 + $0x64] sm:$0xf]
      %v174 = vld [vmem:[%s139 + $0x68] sm:$0xf]
      %v175 = vld [vmem:[%s139 + $0x6c] sm:$0xf]
      %v176 = vld [vmem:[%s139 + $0x70] sm:$0xf]
      %v177 = vld [vmem:[%s139 + $0x74] sm:$0xf]
      %v178 = vld [vmem:[%s139 + $0x78] sm:$0xf]
      %v179 = vld [vmem:[%s139 + $0x7c] sm:$0xf]
      %v180 = vld [vmem:[%s139 + $0x80] sm:$0xf]
      %v181 = vld [vmem:[%s139 + $0x84] sm:$0xf]
      %v182 = vld [vmem:[%s139 + $0x88] sm:$0xf]
      %v183 = vld [vmem:[%s139 + $0x8c] sm:$0xf]
      %v184 = vld [vmem:[%s139 + $0x90] sm:$0xf]
      %v185 = vld [vmem:[%s139 + $0x94] sm:$0xf]
      %v186 = vld [vmem:[%s139 + $0x98] sm:$0xf]
      %v187 = vld [vmem:[%s139 + $0x9c] sm:$0xf]
      %v188 = vld [vmem:[%s139 + $0xa0] sm:$0xf]
      %v189 = vld [vmem:[%s139 + $0xa4] sm:$0xf]
      %v190 = vld [vmem:[%s139 + $0xa8] sm:$0xf]
      %v191 = vld [vmem:[%s139 + $0xac] sm:$0xf]
      %v192 = vld [vmem:[%s139 + $0xb0] sm:$0xf]
      %v193 = vld [vmem:[%s139 + $0xb4] sm:$0xf]
      %v194 = vld [vmem:[%s139 + $0xb8] sm:$0xf]
      %v195 = vld [vmem:[%s139 + $0xbc] sm:$0xf]
      %v196 = vld [vmem:[%s139 + $0xc0] sm:$0xf]
      %v197 = vld [vmem:[%s139 + $0xc4] sm:$0xf]
      %v198 = vld [vmem:[%s139 + $0xc8] sm:$0xf]
      %v199 = vld [vmem:[%s139 + $0xcc] sm:$0xf]
      %v200 = vld [vmem:[%s139 + $0xd0] sm:$0xf]
      %v201 = vld [vmem:[%s139 + $0xd4] sm:$0xf]
      %v202 = vld [vmem:[%s139 + $0xd8] sm:$0xf]
      %v203 = vld [vmem:[%s139 + $0xdc] sm:$0xf]
      %v204 = vld [vmem:[%s139 + $0xe0] sm:$0xf]
      %v205 = vld [vmem:[%s139 + $0xe4] sm:$0xf]
      %v206 = vld [vmem:[%s139 + $0xe8] sm:$0xf]
      %v207 = vld [vmem:[%s139 + $0xec] sm:$0xf]
      %v208 = vld [vmem:[%s139 + $0xf0] sm:$0xf]
      %v209 = vld [vmem:[%s139 + $0xf4] sm:$0xf]
      %v210 = vld [vmem:[%s139 + $0xf8] sm:$0xf]
      %v211 = vld [vmem:[%s139 + $0xfc] sm:$0xf]
      %v212 = vld [vmem:[%s139 + $0x100] sm:$0xf]
      %v213 = vld [vmem:[%s139 + $0x104] sm:$0xf]
      %v214 = vld [vmem:[%s139 + $0x108] sm:$0xf]
      %v215 = vld [vmem:[%s139 + $0x10c] sm:$0xf]
      %v216 = vld [vmem:[%s139 + $0x110] sm:$0xf]
      %v217 = vld [vmem:[%s139 + $0x114] sm:$0xf]
      %v218 = vld [vmem:[%s139 + $0x118] sm:$0xf]
      %v219 = vld [vmem:[%s139 + $0x11c] sm:$0xf]
      %v220 = vld [vmem:[%s139 + $0x120] sm:$0xf]
      %v221 = vld [vmem:[%s139 + $0x124] sm:$0xf]
      %v222 = vld [vmem:[%s139 + $0x128] sm:$0xf]
      %v223 = vld [vmem:[%s139 + $0x12c] sm:$0xf]
      %v224 = vld [vmem:[%s139 + $0x130] sm:$0xf]
      %v225 = vld [vmem:[%s139 + $0x134] sm:$0xf]
      %v226 = vld [vmem:[%s139 + $0x138] sm:$0xf]
      %v227 = vld [vmem:[%s139 + $0x13c] sm:$0xf]
      %v228 = vld [vmem:[%s139 + $0x140] sm:$0xf]
      %v229 = vld [vmem:[%s139 + $0x144] sm:$0xf]
      %v230 = vld [vmem:[%s139 + $0x148] sm:$0xf]
      %v231 = vld [vmem:[%s139 + $0x14c] sm:$0xf]
      %v232 = vld [vmem:[%s139 + $0x150] sm:$0xf]
      %v233 = vld [vmem:[%s139 + $0x154] sm:$0xf]
      %v234 = vld [vmem:[%s139 + $0x158] sm:$0xf]
      %v235 = vld [vmem:[%s139 + $0x15c] sm:$0xf]
      %v236 = vld [vmem:[%s139 + $0x160] sm:$0xf]
      %v237 = vld [vmem:[%s139 + $0x164] sm:$0xf]
      %v238 = vld [vmem:[%s139 + $0x168] sm:$0xf]
      %v239 = vld [vmem:[%s139 + $0x16c] sm:$0xf]
      %v240 = vld [vmem:[%s139 + $0x170] sm:$0xf]
      %v241 = vld [vmem:[%s139 + $0x174] sm:$0xf]
      %v242 = vld [vmem:[%s139 + $0x178] sm:$0xf]
      %v243 = vld [vmem:[%s139 + $0x17c] sm:$0xf]
      %v244 = vld [vmem:[%s139 + $0x180] sm:$0xf]
      %v245 = vld [vmem:[%s139 + $0x184] sm:$0xf]
      %v246 = vld [vmem:[%s139 + $0x188] sm:$0xf]
      %v247 = vld [vmem:[%s139 + $0x18c] sm:$0xf]
      %v248 = vld [vmem:[%s139 + $0x190] sm:$0xf]
      %v249 = vld [vmem:[%s139 + $0x194] sm:$0xf]
      %v250 = vld [vmem:[%s139 + $0x198] sm:$0xf]
      %v251 = vld [vmem:[%s139 + $0x19c] sm:$0xf]
      %v252 = vld [vmem:[%s139 + $0x1a0] sm:$0xf]
      %v253 = vld [vmem:[%s139 + $0x1a4] sm:$0xf]
      %v254 = vld [vmem:[%s139 + $0x1a8] sm:$0xf]
      %v255 = vld [vmem:[%s139 + $0x1ac] sm:$0xf]
      %v256 = vld [vmem:[%s139 + $0x1b0] sm:$0xf]
      %v257 = vld [vmem:[%s139 + $0x1b4] sm:$0xf]
      %v258 = vld [vmem:[%s139 + $0x1b8] sm:$0xf]
      %v259 = vld [vmem:[%s139 + $0x1bc] sm:$0xf]
      %v260 = vld [vmem:[%s139 + $0x1c0] sm:$0xf]
      %v261 = vld [vmem:[%s139 + $0x1c4] sm:$0xf]
      %v262 = vld [vmem:[%s139 + $0x1c8] sm:$0xf]
      %v263 = vld [vmem:[%s139 + $0x1cc] sm:$0xf]
      %v264 = vld [vmem:[%s139 + $0x1d0] sm:$0xf]
      %v265 = vld [vmem:[%s139 + $0x1d4] sm:$0xf]
      %v266 = vld [vmem:[%s139 + $0x1d8] sm:$0xf]
      %v267 = vld [vmem:[%s139 + $0x1dc] sm:$0xf]
      %v268 = vld [vmem:[%s139 + $0x1e0] sm:$0xf]
      %v269 = vld [vmem:[%s139 + $0x1e4] sm:$0xf]
      %v270 = vld [vmem:[%s139 + $0x1e8] sm:$0xf]
      %v271 = vld [vmem:[%s139 + $0x1ec] sm:$0xf]
      %v272 = vld [vmem:[%s139 + $0x1f0] sm:$0xf]
      %v273 = vld [vmem:[%s139 + $0x1f4] sm:$0xf]
      %v274 = vld [vmem:[%s139 + $0x1f8] sm:$0xf]
      %v275 = vld [vmem:[%s139 + $0x1fc] sm:$0xf]
      %v276 = vld [vmem:[%s1] sm:$0xf]
      %v277 = vld [vmem:[%s1 + $0x4] sm:$0xf]
      %v278 = vld [vmem:[%s1 + $0x8] sm:$0xf]
      %v279 = vld [vmem:[%s1 + $0xc] sm:$0xf]
      %v280 = vld [vmem:[%s1 + $0x10] sm:$0xf]
      %v281 = vld [vmem:[%s1 + $0x14] sm:$0xf]
      %v410 = vunpack.c.l.b16 %v148
      %v411 = vunpack.c.l.b16 %v149
      %v412 = vunpack.c.l.b16 %v150
      %v413 = vunpack.c.l.b16 %v151
      %v414 = vunpack.c.l.b16 %v152
      %v415 = vunpack.c.l.b16 %v153
      %v416 = vunpack.c.l.b16 %v154
      %v417 = vunpack.c.l.b16 %v155
      %v418 = vunpack.c.l.b16 %v156
      %v419 = vunpack.c.l.b16 %v157
      %v420 = vunpack.c.l.b16 %v158
      %v421 = vunpack.c.l.b16 %v159
      %v422 = vunpack.c.l.b16 %v160
      %v423 = vunpack.c.l.b16 %v161
      %v424 = vunpack.c.l.b16 %v162
      %v425 = vunpack.c.l.b16 %v163
      %v426 = vunpack.c.l.b16 %v164
      %v427 = vunpack.c.l.b16 %v165
      %v428 = vunpack.c.l.b16 %v166
      %v429 = vunpack.c.l.b16 %v167
      %v430 = vunpack.c.l.b16 %v168
      %v431 = vunpack.c.l.b16 %v169
      %v432 = vunpack.c.l.b16 %v170
      %v433 = vunpack.c.l.b16 %v171
      %v434 = vunpack.c.l.b16 %v172
      %v435 = vunpack.c.l.b16 %v173
      %v436 = vunpack.c.l.b16 %v174
      %v437 = vunpack.c.l.b16 %v175
      %v438 = vunpack.c.l.b16 %v176
      %v439 = vunpack.c.l.b16 %v177
      %v440 = vunpack.c.l.b16 %v178
      %v441 = vunpack.c.l.b16 %v179
      %v442 = vunpack.c.l.b16 %v180
      %v443 = vunpack.c.l.b16 %v181
      %v444 = vunpack.c.l.b16 %v182
      %v445 = vunpack.c.l.b16 %v183
      %v446 = vunpack.c.l.b16 %v184
      %v447 = vunpack.c.l.b16 %v185
      %v448 = vunpack.c.l.b16 %v186
      %v449 = vunpack.c.l.b16 %v187
      %v450 = vunpack.c.l.b16 %v188
      %v451 = vunpack.c.l.b16 %v189
      %v452 = vunpack.c.l.b16 %v190
      %v453 = vunpack.c.l.b16 %v191
      %v454 = vunpack.c.l.b16 %v192
      %v455 = vunpack.c.l.b16 %v193
      %v456 = vunpack.c.l.b16 %v194
      %v457 = vunpack.c.l.b16 %v195
      %v458 = vunpack.c.l.b16 %v196
      %v459 = vunpack.c.l.b16 %v197
      %v460 = vunpack.c.l.b16 %v198
      %v461 = vunpack.c.l.b16 %v199
      %v462 = vunpack.c.l.b16 %v200
      %v463 = vunpack.c.l.b16 %v201
      %v464 = vunpack.c.l.b16 %v202
      %v465 = vunpack.c.l.b16 %v203
      %v466 = vunpack.c.l.b16 %v204
      %v467 = vunpack.c.l.b16 %v205
      %v468 = vunpack.c.l.b16 %v206
      %v469 = vunpack.c.l.b16 %v207
      %v470 = vunpack.c.l.b16 %v208
      %v471 = vunpack.c.l.b16 %v209
      %v472 = vunpack.c.l.b16 %v210
      %v473 = vunpack.c.l.b16 %v211
      %v474 = vunpack.c.l.b16 %v212
      %v475 = vunpack.c.l.b16 %v213
      %v476 = vunpack.c.l.b16 %v214
      %v477 = vunpack.c.l.b16 %v215
      %v478 = vunpack.c.l.b16 %v216
      %v479 = vunpack.c.l.b16 %v217
      %v480 = vunpack.c.l.b16 %v218
      %v481 = vunpack.c.l.b16 %v219
      %v482 = vunpack.c.l.b16 %v220
      %v483 = vunpack.c.l.b16 %v221
      %v484 = vunpack.c.l.b16 %v222
      %v485 = vunpack.c.l.b16 %v223
      %v486 = vunpack.c.l.b16 %v224
      %v487 = vunpack.c.l.b16 %v225
      %v488 = vunpack.c.l.b16 %v226
      %v489 = vunpack.c.l.b16 %v227
      %v490 = vunpack.c.l.b16 %v228
      %v491 = vunpack.c.l.b16 %v229
      %v492 = vunpack.c.l.b16 %v230
      %v493 = vunpack.c.l.b16 %v231
      %v494 = vunpack.c.l.b16 %v232
      %v495 = vunpack.c.l.b16 %v233
      %v496 = vunpack.c.l.b16 %v234
      %v497 = vunpack.c.l.b16 %v235
      %v498 = vunpack.c.l.b16 %v236
      %v499 = vunpack.c.l.b16 %v237
      %v500 = vunpack.c.l.b16 %v238
      %v501 = vunpack.c.l.b16 %v239
      %v502 = vunpack.c.l.b16 %v240
      %v503 = vunpack.c.l.b16 %v241
      %v504 = vunpack.c.l.b16 %v242
      %v505 = vunpack.c.l.b16 %v243
      %v506 = vunpack.c.l.b16 %v244
      %v507 = vunpack.c.l.b16 %v245
      %v508 = vunpack.c.l.b16 %v246
      %v509 = vunpack.c.l.b16 %v247
      %v510 = vunpack.c.l.b16 %v248
      %v511 = vunpack.c.l.b16 %v249
      %v512 = vunpack.c.l.b16 %v250
      %v513 = vunpack.c.l.b16 %v251
      %v514 = vunpack.c.l.b16 %v252
      %v515 = vunpack.c.l.b16 %v253
      %v516 = vunpack.c.l.b16 %v254
      %v517 = vunpack.c.l.b16 %v255
      %v518 = vunpack.c.l.b16 %v256
      %v519 = vunpack.c.l.b16 %v257
      %v520 = vunpack.c.l.b16 %v258
      %v521 = vunpack.c.l.b16 %v259
      %v522 = vunpack.c.l.b16 %v260
      %v523 = vunpack.c.l.b16 %v261
      %v524 = vunpack.c.l.b16 %v262
      %v525 = vunpack.c.l.b16 %v263
      %v526 = vunpack.c.l.b16 %v264
      %v527 = vunpack.c.l.b16 %v265
      %v528 = vunpack.c.l.b16 %v266
      %v529 = vunpack.c.l.b16 %v267
      %v530 = vunpack.c.l.b16 %v268
      %v531 = vunpack.c.l.b16 %v269
      %v532 = vunpack.c.l.b16 %v270
      %v533 = vunpack.c.l.b16 %v271
      %v534 = vunpack.c.l.b16 %v272
      %v535 = vunpack.c.l.b16 %v273
      %v536 = vunpack.c.l.b16 %v274
      %v537 = vunpack.c.l.b16 %v275
      %v538 = vpack.c.b16 %v411, %v410
      %v539 = vpack.c.b16 %v413, %v412
      %v540 = vpack.c.b16 %v415, %v414
      %v541 = vpack.c.b16 %v417, %v416
      %v542 = vpack.c.b16 %v419, %v418
      %v543 = vpack.c.b16 %v421, %v420
      %v544 = vpack.c.b16 %v423, %v422
      %v545 = vpack.c.b16 %v425, %v424
      %v546 = vpack.c.b16 %v427, %v426
      %v547 = vpack.c.b16 %v429, %v428
      %v548 = vpack.c.b16 %v431, %v430
      %v549 = vpack.c.b16 %v433, %v432
      %v550 = vpack.c.b16 %v435, %v434
      %v551 = vpack.c.b16 %v437, %v436
      %v552 = vpack.c.b16 %v439, %v438
      %v553 = vpack.c.b16 %v441, %v440
      %v554 = vpack.c.b16 %v443, %v442
      %v555 = vpack.c.b16 %v445, %v444
      %v556 = vpack.c.b16 %v447, %v446
      %v557 = vpack.c.b16 %v449, %v448
      %v558 = vpack.c.b16 %v451, %v450
      %v559 = vpack.c.b16 %v453, %v452
      %v560 = vpack.c.b16 %v455, %v454
      %v561 = vpack.c.b16 %v457, %v456
      %v562 = vpack.c.b16 %v459, %v458
      %v563 = vpack.c.b16 %v461, %v460
      %v564 = vpack.c.b16 %v463, %v462
      %v565 = vpack.c.b16 %v465, %v464
      %v566 = vpack.c.b16 %v467, %v466
      %v567 = vpack.c.b16 %v469, %v468
      %v568 = vpack.c.b16 %v471, %v470
      %v569 = vpack.c.b16 %v473, %v472
      %v570 = vpack.c.b16 %v475, %v474
      %v571 = vpack.c.b16 %v477, %v476
      %v572 = vpack.c.b16 %v479, %v478
      %v573 = vpack.c.b16 %v481, %v480
      %v574 = vpack.c.b16 %v483, %v482
      %v575 = vpack.c.b16 %v485, %v484
      %v576 = vpack.c.b16 %v487, %v486
      %v577 = vpack.c.b16 %v489, %v488
      %v578 = vpack.c.b16 %v491, %v490
      %v579 = vpack.c.b16 %v493, %v492
      %v580 = vpack.c.b16 %v495, %v494
      %v581 = vpack.c.b16 %v497, %v496
      %v582 = vpack.c.b16 %v499, %v498
      %v583 = vpack.c.b16 %v501, %v500
      %v584 = vpack.c.b16 %v503, %v502
      %v585 = vpack.c.b16 %v505, %v504
      %v586 = vpack.c.b16 %v507, %v506
      %v587 = vpack.c.b16 %v509, %v508
      %v588 = vpack.c.b16 %v511, %v510
      %v589 = vpack.c.b16 %v513, %v512
      %v590 = vpack.c.b16 %v515, %v514
      %v591 = vpack.c.b16 %v517, %v516
      %v592 = vpack.c.b16 %v519, %v518
      %v593 = vpack.c.b16 %v521, %v520
      %v594 = vpack.c.b16 %v523, %v522
      %v595 = vpack.c.b16 %v525, %v524
      %v596 = vpack.c.b16 %v527, %v526
      %v597 = vpack.c.b16 %v529, %v528
      %v598 = vpack.c.b16 %v531, %v530
      %v599 = vpack.c.b16 %v533, %v532
      %v600 = vpack.c.b16 %v535, %v534
      %v601 = vpack.c.b16 %v537, %v536
      %v608 = vunpack.c.l.b16 %v276
      %v609 = vunpack.c.l.b16 %v277
      %v610 = vunpack.c.l.b16 %v278
      %v611 = vunpack.c.l.b16 %v279
      %v612 = vunpack.c.l.b16 %v280
      %v613 = vunpack.c.l.b16 %v281
      %v614 = vpack.c.b16 %v609, %v608
      %v615 = vpack.c.b16 %v611, %v610
      %v616 = vpack.c.b16 %v613, %v612
      %vm620 = vcmask 392192
      %v622 = vsel %vm620, %v538, 0
      %v625 = vsel %vm620, %v539, 0
      %v628 = vsel %vm620, %v540, 0
      %v631 = vsel %vm620, %v541, 0
      %v634 = vsel %vm620, %v542, 0
      %v637 = vsel %vm620, %v543, 0
      %v640 = vsel %vm620, %v544, 0
      %v643 = vsel %vm620, %v545, 0
      %v646 = vsel %vm620, %v546, 0
      %v649 = vsel %vm620, %v547, 0
      %v652 = vsel %vm620, %v548, 0
      %v655 = vsel %vm620, %v549, 0
      %v658 = vsel %vm620, %v550, 0
      %v661 = vsel %vm620, %v551, 0
      %v664 = vsel %vm620, %v552, 0
      %v667 = vsel %vm620, %v553, 0
      %v670 = vsel %vm620, %v554, 0
      %v673 = vsel %vm620, %v555, 0
      %v676 = vsel %vm620, %v556, 0
      %v679 = vsel %vm620, %v557, 0
      %v682 = vsel %vm620, %v558, 0
      %v685 = vsel %vm620, %v559, 0
      %v688 = vsel %vm620, %v560, 0
      %v691 = vsel %vm620, %v561, 0
      %v694 = vsel %vm620, %v562, 0
      %v697 = vsel %vm620, %v563, 0
      %v700 = vsel %vm620, %v564, 0
      %v703 = vsel %vm620, %v565, 0
      %v706 = vsel %vm620, %v566, 0
      %v709 = vsel %vm620, %v567, 0
      %v712 = vsel %vm620, %v568, 0
      %v715 = vsel %vm620, %v569, 0
      %v718 = vsel %vm620, %v570, 0
      %v721 = vsel %vm620, %v571, 0
      %v724 = vsel %vm620, %v572, 0
      %v727 = vsel %vm620, %v573, 0
      %v730 = vsel %vm620, %v574, 0
      %v733 = vsel %vm620, %v575, 0
      %v736 = vsel %vm620, %v576, 0
      %v739 = vsel %vm620, %v577, 0
      %v742 = vsel %vm620, %v578, 0
      %v745 = vsel %vm620, %v579, 0
      %v748 = vsel %vm620, %v580, 0
      %v751 = vsel %vm620, %v581, 0
      %v754 = vsel %vm620, %v582, 0
      %v757 = vsel %vm620, %v583, 0
      %v760 = vsel %vm620, %v584, 0
      %v763 = vsel %vm620, %v585, 0
      %v766 = vsel %vm620, %v586, 0
      %v769 = vsel %vm620, %v587, 0
      %v772 = vsel %vm620, %v588, 0
      %v775 = vsel %vm620, %v589, 0
      %v778 = vsel %vm620, %v590, 0
      %v781 = vsel %vm620, %v591, 0
      %v784 = vsel %vm620, %v592, 0
      %v787 = vsel %vm620, %v593, 0
      %v790 = vsel %vm620, %v594, 0
      %v793 = vsel %vm620, %v595, 0
      %v796 = vsel %vm620, %v596, 0
      %v799 = vsel %vm620, %v597, 0
      %v802 = vsel %vm620, %v598, 0
      %v805 = vsel %vm620, %v599, 0
      %v808 = vsel %vm620, %v600, 0
      %v811 = vsel %vm620, %v601, 0
      %813 = vmatprep.subr.bf16.mxu0 0
      %814 = vmatpush1.bf16.msra.mxu0 %v614
      %815 = vmatprep.subr.bf16.mxu0 0
      %816 = vmatpush1.bf16.msra.mxu0 %v615
      %817 = vmatprep.subr.bf16.mxu0 0
      %818 = vmatpush1.bf16.msra.mxu0 %v616
      %819 = vmatprep.subr.bf16.mxu0 0
      %820 = vmatpush1.bf16.msra.mxu0 0
      %821 = vmatprep.subr.bf16.mxu0 0
      %822 = vmatpush1.bf16.msra.mxu0 0
      %823 = vmatprep.subr.bf16.mxu0 0
      %824 = vmatpush1.bf16.msra.mxu0 0
      %825 = vmatprep.subr.bf16.mxu0 0
      %826 = vmatpush1.bf16.msra.mxu0 0
      %827 = vmatprep.subr.bf16.mxu0 0
      %828 = vmatpush1.bf16.msra.mxu0 0
      %829 = vmatprep.subr.bf16.mxu0 0
      %830 = vmatpush1.bf16.msra.mxu0 0
      %831 = vmatprep.subr.bf16.mxu0 0
      %832 = vmatpush1.bf16.msra.mxu0 0
      %833 = vmatprep.subr.bf16.mxu0 0
      %834 = vmatpush1.bf16.msra.mxu0 0
      %835 = vmatprep.subr.bf16.mxu0 0
      %836 = vmatpush1.bf16.msra.mxu0 0
      %837 = vmatprep.subr.bf16.mxu0 0
      %838 = vmatpush1.bf16.msra.mxu0 0
      %839 = vmatprep.subr.bf16.mxu0 0
      %840 = vmatpush1.bf16.msra.mxu0 0
      %841 = vmatprep.subr.bf16.mxu0 0
      %842 = vmatpush1.bf16.msra.mxu0 0
      %843 = vmatprep.subr.bf16.mxu0 0
      %844 = vmatpush1.bf16.msra.mxu0 0
      %845 = vmatprep.mubr.bf16.mxu0 0
      %846 = vmatmul.mubr.bf16.gmra.mrb[0].mxu0 %v622
      %v847 = vpop.f32.mrb[0].mxu0
      %v848 = vadd.f32 0.0, %v847
      %v849 = vpop.f32.mrb[0].mxu0
      %v850 = vpop.f32.mrb[0].mxu0
      %v851 = vadd.f32 0.0, %v850
      %v852 = vpop.f32.mrb[0].mxu0
      %853 = vmatprep.mubr.bf16.mxu0 0
      %854 = vmatmul.mubr.bf16.gmra.mrb[0].mxu0 %v625
      %v855 = vpop.f32.mrb[0].mxu0
      %v856 = vadd.f32 0.0, %v855
      %v857 = vpop.f32.mrb[0].mxu0
      %v858 = vpop.f32.mrb[0].mxu0
      %v859 = vadd.f32 0.0, %v858
      %v860 = vpop.f32.mrb[0].mxu0
      %861 = vmatprep.mubr.bf16.mxu0 0
      %862 = vmatmul.mubr.bf16.gmra.mrb[0].mxu0 %v628
      %v863 = vpop.f32.mrb[0].mxu0
      %v864 = vadd.f32 0.0, %v863
      %v865 = vpop.f32.mrb[0].mxu0
      %v866 = vpop.f32.mrb[0].mxu0
      %v867 = vadd.f32 0.0, %v866
      %v868 = vpop.f32.mrb[0].mxu0
      %869 = vmatprep.mubr.bf16.mxu0 0
      %870 = vmatmul.mubr.bf16.gmra.mrb[0].mxu0 %v631
      %v871 = vpop.f32.mrb[0].mxu0
      %v872 = vadd.f32 0.0, %v871
      %v873 = vpop.f32.mrb[0].mxu0
      %v874 = vpop.f32.mrb[0].mxu0
      %v875 = vadd.f32 0.0, %v874
      %v876 = vpop.f32.mrb[0].mxu0
      %877 = vmatprep.mubr.bf16.mxu0 0
      %878 = vmatmul.mubr.bf16.gmra.mrb[0].mxu0 %v634
      %v879 = vpop.f32.mrb[0].mxu0
      %v880 = vadd.f32 0.0, %v879
      %v881 = vpop.f32.mrb[0].mxu0
      %v882 = vpop.f32.mrb[0].mxu0
      %v883 = vadd.f32 0.0, %v882
      %v884 = vpop.f32.mrb[0].mxu0
      %885 = vmatprep.mubr.bf16.mxu0 0
      %886 = vmatmul.mubr.bf16.gmra.mrb[0].mxu0 %v637
      %v887 = vpop.f32.mrb[0].mxu0
      %v888 = vadd.f32 0.0, %v887
      %v889 = vpop.f32.mrb[0].mxu0
      %v890 = vpop.f32.mrb[0].mxu0
      %v891 = vadd.f32 0.0, %v890
      %v892 = vpop.f32.mrb[0].mxu0
      %893 = vmatprep.mubr.bf16.mxu0 0
      %894 = vmatmul.mubr.bf16.gmra.mrb[0].mxu0 %v640
      %v895 = vpop.f32.mrb[0].mxu0
      %v896 = vadd.f32 0.0, %v895
      %v897 = vpop.f32.mrb[0].mxu0
      %v898 = vpop.f32.mrb[0].mxu0
      %v899 = vadd.f32 0.0, %v898
      %v900 = vpop.f32.mrb[0].mxu0
      %901 = vmatprep.mubr.bf16.mxu0 0
      %902 = vmatmul.mubr.bf16.gmra.mrb[0].mxu0 %v643
      %v903 = vpop.f32.mrb[0].mxu0
      %v904 = vadd.f32 0.0, %v903
      %v905 = vpop.f32.mrb[0].mxu0
      %v906 = vpop.f32.mrb[0].mxu0
      %v907 = vadd.f32 0.0, %v906
      %v908 = vpop.f32.mrb[0].mxu0
      %909 = vmatprep.mubr.bf16.mxu0 0
      %910 = vmatmul.mubr.bf16.gmra.mrb[0].mxu0 %v646
      %v911 = vpop.f32.mrb[0].mxu0
      %v912 = vadd.f32 0.0, %v911
      %v913 = vpop.f32.mrb[0].mxu0
      %v914 = vpop.f32.mrb[0].mxu0
      %v915 = vadd.f32 0.0, %v914
      %v916 = vpop.f32.mrb[0].mxu0
      %917 = vmatprep.mubr.bf16.mxu0 0
      %918 = vmatmul.mubr.bf16.gmra.mrb[0].mxu0 %v649
      %v919 = vpop.f32.mrb[0].mxu0
      %v920 = vadd.f32 0.0, %v919
      %v921 = vpop.f32.mrb[0].mxu0
      %v922 = vpop.f32.mrb[0].mxu0
      %v923 = vadd.f32 0.0, %v922
      %v924 = vpop.f32.mrb[0].mxu0
      %925 = vmatprep.mubr.bf16.mxu0 0
      %926 = vmatmul.mubr.bf16.gmra.mrb[0].mxu0 %v652
      %v927 = vpop.f32.mrb[0].mxu0
      %v928 = vadd.f32 0.0, %v927
      %v929 = vpop.f32.mrb[0].mxu0
      %v930 = vpop.f32.mrb[0].mxu0
      %v931 = vadd.f32 0.0, %v930
      %v932 = vpop.f32.mrb[0].mxu0
      %933 = vmatprep.mubr.bf16.mxu0 0
      %934 = vmatmul.mubr.bf16.gmra.mrb[0].mxu0 %v655
      %v935 = vpop.f32.mrb[0].mxu0
      %v936 = vadd.f32 0.0, %v935
      %v937 = vpop.f32.mrb[0].mxu0
      %v938 = vpop.f32.mrb[0].mxu0
      %v939 = vadd.f32 0.0, %v938
      %v940 = vpop.f32.mrb[0].mxu0
      %941 = vmatprep.mubr.bf16.mxu0 0
      %942 = vmatmul.mubr.bf16.gmra.mrb[0].mxu0 %v658
      %v943 = vpop.f32.mrb[0].mxu0
      %v944 = vadd.f32 0.0, %v943
      %v945 = vpop.f32.mrb[0].mxu0
      %v946 = vpop.f32.mrb[0].mxu0
      %v947 = vadd.f32 0.0, %v946
      %v948 = vpop.f32.mrb[0].mxu0
      %949 = vmatprep.mubr.bf16.mxu0 0
      %950 = vmatmul.mubr.bf16.gmra.mrb[0].mxu0 %v661
      %v951 = vpop.f32.mrb[0].mxu0
      %v952 = vadd.f32 0.0, %v951
      %v953 = vpop.f32.mrb[0].mxu0
      %v954 = vpop.f32.mrb[0].mxu0
      %v955 = vadd.f32 0.0, %v954
      %v956 = vpop.f32.mrb[0].mxu0
      %957 = vmatprep.mubr.bf16.mxu0 0
      %958 = vmatmul.mubr.bf16.gmra.mrb[0].mxu0 %v664
      %v959 = vpop.f32.mrb[0].mxu0
      %v960 = vadd.f32 0.0, %v959
      %v961 = vpop.f32.mrb[0].mxu0
      %v962 = vpop.f32.mrb[0].mxu0
      %v963 = vadd.f32 0.0, %v962
      %v964 = vpop.f32.mrb[0].mxu0
      %965 = vmatprep.mubr.bf16.mxu0 0
      %966 = vmatmul.mubr.bf16.gmra.mrb[0].mxu0 %v667
      %v967 = vpop.f32.mrb[0].mxu0
      %v968 = vadd.f32 0.0, %v967
      %v969 = vpop.f32.mrb[0].mxu0
      %v970 = vpop.f32.mrb[0].mxu0
      %v971 = vadd.f32 0.0, %v970
      %v972 = vpop.f32.mrb[0].mxu0
      %973 = vmatprep.mubr.bf16.mxu0 0
      %974 = vmatmul.mubr.bf16.gmra.mrb[0].mxu0 %v670
      %v975 = vpop.f32.mrb[0].mxu0
      %v976 = vadd.f32 0.0, %v975
      %v977 = vpop.f32.mrb[0].mxu0
      %v978 = vpop.f32.mrb[0].mxu0
      %v979 = vadd.f32 0.0, %v978
      %v980 = vpop.f32.mrb[0].mxu0
      %981 = vmatprep.mubr.bf16.mxu0 0
      %982 = vmatmul.mubr.bf16.gmra.mrb[0].mxu0 %v673
      %v983 = vpop.f32.mrb[0].mxu0
      %v984 = vadd.f32 0.0, %v983
      %v985 = vpop.f32.mrb[0].mxu0
      %v986 = vpop.f32.mrb[0].mxu0
      %v987 = vadd.f32 0.0, %v986
      %v988 = vpop.f32.mrb[0].mxu0
      %989 = vmatprep.mubr.bf16.mxu0 0
      %990 = vmatmul.mubr.bf16.gmra.mrb[0].mxu0 %v676
      %v991 = vpop.f32.mrb[0].mxu0
      %v992 = vadd.f32 0.0, %v991
      %v993 = vpop.f32.mrb[0].mxu0
      %v994 = vpop.f32.mrb[0].mxu0
      %v995 = vadd.f32 0.0, %v994
      %v996 = vpop.f32.mrb[0].mxu0
      %997 = vmatprep.mubr.bf16.mxu0 0
      %998 = vmatmul.mubr.bf16.gmra.mrb[0].mxu0 %v679
      %v999 = vpop.f32.mrb[0].mxu0
      %v1000 = vadd.f32 0.0, %v999
      %v1001 = vpop.f32.mrb[0].mxu0
      %v1002 = vpop.f32.mrb[0].mxu0
      %v1003 = vadd.f32 0.0, %v1002
      %v1004 = vpop.f32.mrb[0].mxu0
      %1005 = vmatprep.mubr.bf16.mxu0 0
      %1006 = vmatmul.mubr.bf16.gmra.mrb[0].mxu0 %v682
      %v1007 = vpop.f32.mrb[0].mxu0
      %v1008 = vadd.f32 0.0, %v1007
      %v1009 = vpop.f32.mrb[0].mxu0
      %v1010 = vpop.f32.mrb[0].mxu0
      %v1011 = vadd.f32 0.0, %v1010
      %v1012 = vpop.f32.mrb[0].mxu0
      %1013 = vmatprep.mubr.bf16.mxu0 0
      %1014 = vmatmul.mubr.bf16.gmra.mrb[0].mxu0 %v685
      %v1015 = vpop.f32.mrb[0].mxu0
      %v1016 = vadd.f32 0.0, %v1015
      %v1017 = vpop.f32.mrb[0].mxu0
      %v1018 = vpop.f32.mrb[0].mxu0
      %v1019 = vadd.f32 0.0, %v1018
      %v1020 = vpop.f32.mrb[0].mxu0
      %1021 = vmatprep.mubr.bf16.mxu0 0
      %1022 = vmatmul.mubr.bf16.gmra.mrb[0].mxu0 %v688
      %v1023 = vpop.f32.mrb[0].mxu0
      %v1024 = vadd.f32 0.0, %v1023
      %v1025 = vpop.f32.mrb[0].mxu0
      %v1026 = vpop.f32.mrb[0].mxu0
      %v1027 = vadd.f32 0.0, %v1026
      %v1028 = vpop.f32.mrb[0].mxu0
      %1029 = vmatprep.mubr.bf16.mxu0 0
      %1030 = vmatmul.mubr.bf16.gmra.mrb[0].mxu0 %v691
      %v1031 = vpop.f32.mrb[0].mxu0
      %v1032 = vadd.f32 0.0, %v1031
      %v1033 = vpop.f32.mrb[0].mxu0
      %v1034 = vpop.f32.mrb[0].mxu0
      %v1035 = vadd.f32 0.0, %v1034
      %v1036 = vpop.f32.mrb[0].mxu0
      %1037 = vmatprep.mubr.bf16.mxu0 0
      %1038 = vmatmul.mubr.bf16.gmra.mrb[0].mxu0 %v694
      %v1039 = vpop.f32.mrb[0].mxu0
      %v1040 = vadd.f32 0.0, %v1039
      %v1041 = vpop.f32.mrb[0].mxu0
      %v1042 = vpop.f32.mrb[0].mxu0
      %v1043 = vadd.f32 0.0, %v1042
      %v1044 = vpop.f32.mrb[0].mxu0
      %1045 = vmatprep.mubr.bf16.mxu0 0
      %1046 = vmatmul.mubr.bf16.gmra.mrb[0].mxu0 %v697
      %v1047 = vpop.f32.mrb[0].mxu0
      %v1048 = vadd.f32 0.0, %v1047
      %v1049 = vpop.f32.mrb[0].mxu0
      %v1050 = vpop.f32.mrb[0].mxu0
      %v1051 = vadd.f32 0.0, %v1050
      %v1052 = vpop.f32.mrb[0].mxu0
      %1053 = vmatprep.mubr.bf16.mxu0 0
      %1054 = vmatmul.mubr.bf16.gmra.mrb[0].mxu0 %v700
      %v1055 = vpop.f32.mrb[0].mxu0
      %v1056 = vadd.f32 0.0, %v1055
      %v1057 = vpop.f32.mrb[0].mxu0
      %v1058 = vpop.f32.mrb[0].mxu0
      %v1059 = vadd.f32 0.0, %v1058
      %v1060 = vpop.f32.mrb[0].mxu0
      %1061 = vmatprep.mubr.bf16.mxu0 0
      %1062 = vmatmul.mubr.bf16.gmra.mrb[0].mxu0 %v703
      %v1063 = vpop.f32.mrb[0].mxu0
      %v1064 = vadd.f32 0.0, %v1063
      %v1065 = vpop.f32.mrb[0].mxu0
      %v1066 = vpop.f32.mrb[0].mxu0
      %v1067 = vadd.f32 0.0, %v1066
      %v1068 = vpop.f32.mrb[0].mxu0
      %1069 = vmatprep.mubr.bf16.mxu0 0
      %1070 = vmatmul.mubr.bf16.gmra.mrb[0].mxu0 %v706
      %v1071 = vpop.f32.mrb[0].mxu0
      %v1072 = vadd.f32 0.0, %v1071
      %v1073 = vpop.f32.mrb[0].mxu0
      %v1074 = vpop.f32.mrb[0].mxu0
      %v1075 = vadd.f32 0.0, %v1074
      %v1076 = vpop.f32.mrb[0].mxu0
      %1077 = vmatprep.mubr.bf16.mxu0 0
      %1078 = vmatmul.mubr.bf16.gmra.mrb[0].mxu0 %v709
      %v1079 = vpop.f32.mrb[0].mxu0
      %v1080 = vadd.f32 0.0, %v1079
      %v1081 = vpop.f32.mrb[0].mxu0
      %v1082 = vpop.f32.mrb[0].mxu0
      %v1083 = vadd.f32 0.0, %v1082
      %v1084 = vpop.f32.mrb[0].mxu0
      %1085 = vmatprep.mubr.bf16.mxu0 0
      %1086 = vmatmul.mubr.bf16.gmra.mrb[0].mxu0 %v712
      %v1087 = vpop.f32.mrb[0].mxu0
      %v1088 = vadd.f32 0.0, %v1087
      %v1089 = vpop.f32.mrb[0].mxu0
      %v1090 = vpop.f32.mrb[0].mxu0
      %v1091 = vadd.f32 0.0, %v1090
      %v1092 = vpop.f32.mrb[0].mxu0
      %1093 = vmatprep.mubr.bf16.mxu0 0
      %1094 = vmatmul.mubr.bf16.gmra.mrb[0].mxu0 %v715
      %v1095 = vpop.f32.mrb[0].mxu0
      %v1096 = vadd.f32 0.0, %v1095
      %v1097 = vpop.f32.mrb[0].mxu0
      %v1098 = vpop.f32.mrb[0].mxu0
      %v1099 = vadd.f32 0.0, %v1098
      %v1100 = vpop.f32.mrb[0].mxu0
      %1101 = vmatprep.mubr.bf16.mxu0 0
      %1102 = vmatmul.mubr.bf16.gmra.mrb[0].mxu0 %v718
      %v1103 = vpop.f32.mrb[0].mxu0
      %v1104 = vadd.f32 0.0, %v1103
      %v1105 = vpop.f32.mrb[0].mxu0
      %v1106 = vpop.f32.mrb[0].mxu0
      %v1107 = vadd.f32 0.0, %v1106
      %v1108 = vpop.f32.mrb[0].mxu0
      %1109 = vmatprep.mubr.bf16.mxu0 0
      %1110 = vmatmul.mubr.bf16.gmra.mrb[0].mxu0 %v721
      %v1111 = vpop.f32.mrb[0].mxu0
      %v1112 = vadd.f32 0.0, %v1111
      %v1113 = vpop.f32.mrb[0].mxu0
      %v1114 = vpop.f32.mrb[0].mxu0
      %v1115 = vadd.f32 0.0, %v1114
      %v1116 = vpop.f32.mrb[0].mxu0
      %1117 = vmatprep.mubr.bf16.mxu0 0
      %1118 = vmatmul.mubr.bf16.gmra.mrb[0].mxu0 %v724
      %v1119 = vpop.f32.mrb[0].mxu0
      %v1120 = vadd.f32 0.0, %v1119
      %v1121 = vpop.f32.mrb[0].mxu0
      %v1122 = vpop.f32.mrb[0].mxu0
      %v1123 = vadd.f32 0.0, %v1122
      %v1124 = vpop.f32.mrb[0].mxu0
      %1125 = vmatprep.mubr.bf16.mxu0 0
      %1126 = vmatmul.mubr.bf16.gmra.mrb[0].mxu0 %v727
      %v1127 = vpop.f32.mrb[0].mxu0
      %v1128 = vadd.f32 0.0, %v1127
      %v1129 = vpop.f32.mrb[0].mxu0
      %v1130 = vpop.f32.mrb[0].mxu0
      %v1131 = vadd.f32 0.0, %v1130
      %v1132 = vpop.f32.mrb[0].mxu0
      %1133 = vmatprep.mubr.bf16.mxu0 0
      %1134 = vmatmul.mubr.bf16.gmra.mrb[0].mxu0 %v730
      %v1135 = vpop.f32.mrb[0].mxu0
      %v1136 = vadd.f32 0.0, %v1135
      %v1137 = vpop.f32.mrb[0].mxu0
      %v1138 = vpop.f32.mrb[0].mxu0
      %v1139 = vadd.f32 0.0, %v1138
      %v1140 = vpop.f32.mrb[0].mxu0
      %1141 = vmatprep.mubr.bf16.mxu0 0
      %1142 = vmatmul.mubr.bf16.gmra.mrb[0].mxu0 %v733
      %v1143 = vpop.f32.mrb[0].mxu0
      %v1144 = vadd.f32 0.0, %v1143
      %v1145 = vpop.f32.mrb[0].mxu0
      %v1146 = vpop.f32.mrb[0].mxu0
      %v1147 = vadd.f32 0.0, %v1146
      %v1148 = vpop.f32.mrb[0].mxu0
      %1149 = vmatprep.mubr.bf16.mxu0 0
      %1150 = vmatmul.mubr.bf16.gmra.mrb[0].mxu0 %v736
      %v1151 = vpop.f32.mrb[0].mxu0
      %v1152 = vadd.f32 0.0, %v1151
      %v1153 = vpop.f32.mrb[0].mxu0
      %v1154 = vpop.f32.mrb[0].mxu0
      %v1155 = vadd.f32 0.0, %v1154
      %v1156 = vpop.f32.mrb[0].mxu0
      %1157 = vmatprep.mubr.bf16.mxu0 0
      %1158 = vmatmul.mubr.bf16.gmra.mrb[0].mxu0 %v739
      %v1159 = vpop.f32.mrb[0].mxu0
      %v1160 = vadd.f32 0.0, %v1159
      %v1161 = vpop.f32.mrb[0].mxu0
      %v1162 = vpop.f32.mrb[0].mxu0
      %v1163 = vadd.f32 0.0, %v1162
      %v1164 = vpop.f32.mrb[0].mxu0
      %1165 = vmatprep.mubr.bf16.mxu0 0
      %1166 = vmatmul.mubr.bf16.gmra.mrb[0].mxu0 %v742
      %v1167 = vpop.f32.mrb[0].mxu0
      %v1168 = vadd.f32 0.0, %v1167
      %v1169 = vpop.f32.mrb[0].mxu0
      %v1170 = vpop.f32.mrb[0].mxu0
      %v1171 = vadd.f32 0.0, %v1170
      %v1172 = vpop.f32.mrb[0].mxu0
      %1173 = vmatprep.mubr.bf16.mxu0 0
      %1174 = vmatmul.mubr.bf16.gmra.mrb[0].mxu0 %v745
      %v1175 = vpop.f32.mrb[0].mxu0
      %v1176 = vadd.f32 0.0, %v1175
      %v1177 = vpop.f32.mrb[0].mxu0
      %v1178 = vpop.f32.mrb[0].mxu0
      %v1179 = vadd.f32 0.0, %v1178
      %v1180 = vpop.f32.mrb[0].mxu0
      %1181 = vmatprep.mubr.bf16.mxu0 0
      %1182 = vmatmul.mubr.bf16.gmra.mrb[0].mxu0 %v748
      %v1183 = vpop.f32.mrb[0].mxu0
      %v1184 = vadd.f32 0.0, %v1183
      %v1185 = vpop.f32.mrb[0].mxu0
      %v1186 = vpop.f32.mrb[0].mxu0
      %v1187 = vadd.f32 0.0, %v1186
      %v1188 = vpop.f32.mrb[0].mxu0
      %1189 = vmatprep.mubr.bf16.mxu0 0
      %1190 = vmatmul.mubr.bf16.gmra.mrb[0].mxu0 %v751
      %v1191 = vpop.f32.mrb[0].mxu0
      %v1192 = vadd.f32 0.0, %v1191
      %v1193 = vpop.f32.mrb[0].mxu0
      %v1194 = vpop.f32.mrb[0].mxu0
      %v1195 = vadd.f32 0.0, %v1194
      %v1196 = vpop.f32.mrb[0].mxu0
      %1197 = vmatprep.mubr.bf16.mxu0 0
      %1198 = vmatmul.mubr.bf16.gmra.mrb[0].mxu0 %v754
      %v1199 = vpop.f32.mrb[0].mxu0
      %v1200 = vadd.f32 0.0, %v1199
      %v1201 = vpop.f32.mrb[0].mxu0
      %v1202 = vpop.f32.mrb[0].mxu0
      %v1203 = vadd.f32 0.0, %v1202
      %v1204 = vpop.f32.mrb[0].mxu0
      %1205 = vmatprep.mubr.bf16.mxu0 0
      %1206 = vmatmul.mubr.bf16.gmra.mrb[0].mxu0 %v757
      %v1207 = vpop.f32.mrb[0].mxu0
      %v1208 = vadd.f32 0.0, %v1207
      %v1209 = vpop.f32.mrb[0].mxu0
      %v1210 = vpop.f32.mrb[0].mxu0
      %v1211 = vadd.f32 0.0, %v1210
      %v1212 = vpop.f32.mrb[0].mxu0
      %1213 = vmatprep.mubr.bf16.mxu0 0
      %1214 = vmatmul.mubr.bf16.gmra.mrb[0].mxu0 %v760
      %v1215 = vpop.f32.mrb[0].mxu0
      %v1216 = vadd.f32 0.0, %v1215
      %v1217 = vpop.f32.mrb[0].mxu0
      %v1218 = vpop.f32.mrb[0].mxu0
      %v1219 = vadd.f32 0.0, %v1218
      %v1220 = vpop.f32.mrb[0].mxu0
      %1221 = vmatprep.mubr.bf16.mxu0 0
      %1222 = vmatmul.mubr.bf16.gmra.mrb[0].mxu0 %v763
      %v1223 = vpop.f32.mrb[0].mxu0
      %v1224 = vadd.f32 0.0, %v1223
      %v1225 = vpop.f32.mrb[0].mxu0
      %v1226 = vpop.f32.mrb[0].mxu0
      %v1227 = vadd.f32 0.0, %v1226
      %v1228 = vpop.f32.mrb[0].mxu0
      %1229 = vmatprep.mubr.bf16.mxu0 0
      %1230 = vmatmul.mubr.bf16.gmra.mrb[0].mxu0 %v766
      %v1231 = vpop.f32.mrb[0].mxu0
      %v1232 = vadd.f32 0.0, %v1231
      %v1233 = vpop.f32.mrb[0].mxu0
      %v1234 = vpop.f32.mrb[0].mxu0
      %v1235 = vadd.f32 0.0, %v1234
      %v1236 = vpop.f32.mrb[0].mxu0
      %1237 = vmatprep.mubr.bf16.mxu0 0
      %1238 = vmatmul.mubr.bf16.gmra.mrb[0].mxu0 %v769
      %v1239 = vpop.f32.mrb[0].mxu0
      %v1240 = vadd.f32 0.0, %v1239
      %v1241 = vpop.f32.mrb[0].mxu0
      %v1242 = vpop.f32.mrb[0].mxu0
      %v1243 = vadd.f32 0.0, %v1242
      %v1244 = vpop.f32.mrb[0].mxu0
      %1245 = vmatprep.mubr.bf16.mxu0 0
      %1246 = vmatmul.mubr.bf16.gmra.mrb[0].mxu0 %v772
      %v1247 = vpop.f32.mrb[0].mxu0
      %v1248 = vadd.f32 0.0, %v1247
      %v1249 = vpop.f32.mrb[0].mxu0
      %v1250 = vpop.f32.mrb[0].mxu0
      %v1251 = vadd.f32 0.0, %v1250
      %v1252 = vpop.f32.mrb[0].mxu0
      %1253 = vmatprep.mubr.bf16.mxu0 0
      %1254 = vmatmul.mubr.bf16.gmra.mrb[0].mxu0 %v775
      %v1255 = vpop.f32.mrb[0].mxu0
      %v1256 = vadd.f32 0.0, %v1255
      %v1257 = vpop.f32.mrb[0].mxu0
      %v1258 = vpop.f32.mrb[0].mxu0
      %v1259 = vadd.f32 0.0, %v1258
      %v1260 = vpop.f32.mrb[0].mxu0
      %1261 = vmatprep.mubr.bf16.mxu0 0
      %1262 = vmatmul.mubr.bf16.gmra.mrb[0].mxu0 %v778
      %v1263 = vpop.f32.mrb[0].mxu0
      %v1264 = vadd.f32 0.0, %v1263
      %v1265 = vpop.f32.mrb[0].mxu0
      %v1266 = vpop.f32.mrb[0].mxu0
      %v1267 = vadd.f32 0.0, %v1266
      %v1268 = vpop.f32.mrb[0].mxu0
      %1269 = vmatprep.mubr.bf16.mxu0 0
      %1270 = vmatmul.mubr.bf16.gmra.mrb[0].mxu0 %v781
      %v1271 = vpop.f32.mrb[0].mxu0
      %v1272 = vadd.f32 0.0, %v1271
      %v1273 = vpop.f32.mrb[0].mxu0
      %v1274 = vpop.f32.mrb[0].mxu0
      %v1275 = vadd.f32 0.0, %v1274
      %v1276 = vpop.f32.mrb[0].mxu0
      %1277 = vmatprep.mubr.bf16.mxu0 0
      %1278 = vmatmul.mubr.bf16.gmra.mrb[0].mxu0 %v784
      %v1279 = vpop.f32.mrb[0].mxu0
      %v1280 = vadd.f32 0.0, %v1279
      %v1281 = vpop.f32.mrb[0].mxu0
      %v1282 = vpop.f32.mrb[0].mxu0
      %v1283 = vadd.f32 0.0, %v1282
      %v1284 = vpop.f32.mrb[0].mxu0
      %1285 = vmatprep.mubr.bf16.mxu0 0
      %1286 = vmatmul.mubr.bf16.gmra.mrb[0].mxu0 %v787
      %v1287 = vpop.f32.mrb[0].mxu0
      %v1288 = vadd.f32 0.0, %v1287
      %v1289 = vpop.f32.mrb[0].mxu0
      %v1290 = vpop.f32.mrb[0].mxu0
      %v1291 = vadd.f32 0.0, %v1290
      %v1292 = vpop.f32.mrb[0].mxu0
      %1293 = vmatprep.mubr.bf16.mxu0 0
      %1294 = vmatmul.mubr.bf16.gmra.mrb[0].mxu0 %v790
      %v1295 = vpop.f32.mrb[0].mxu0
      %v1296 = vadd.f32 0.0, %v1295
      %v1297 = vpop.f32.mrb[0].mxu0
      %v1298 = vpop.f32.mrb[0].mxu0
      %v1299 = vadd.f32 0.0, %v1298
      %v1300 = vpop.f32.mrb[0].mxu0
      %1301 = vmatprep.mubr.bf16.mxu0 0
      %1302 = vmatmul.mubr.bf16.gmra.mrb[0].mxu0 %v793
      %v1303 = vpop.f32.mrb[0].mxu0
      %v1304 = vadd.f32 0.0, %v1303
      %v1305 = vpop.f32.mrb[0].mxu0
      %v1306 = vpop.f32.mrb[0].mxu0
      %v1307 = vadd.f32 0.0, %v1306
      %v1308 = vpop.f32.mrb[0].mxu0
      %1309 = vmatprep.mubr.bf16.mxu0 0
      %1310 = vmatmul.mubr.bf16.gmra.mrb[0].mxu0 %v796
      %v1311 = vpop.f32.mrb[0].mxu0
      %v1312 = vadd.f32 0.0, %v1311
      %v1313 = vpop.f32.mrb[0].mxu0
      %v1314 = vpop.f32.mrb[0].mxu0
      %v1315 = vadd.f32 0.0, %v1314
      %v1316 = vpop.f32.mrb[0].mxu0
      %1317 = vmatprep.mubr.bf16.mxu0 0
      %1318 = vmatmul.mubr.bf16.gmra.mrb[0].mxu0 %v799
      %v1319 = vpop.f32.mrb[0].mxu0
      %v1320 = vadd.f32 0.0, %v1319
      %v1321 = vpop.f32.mrb[0].mxu0
      %v1322 = vpop.f32.mrb[0].mxu0
      %v1323 = vadd.f32 0.0, %v1322
      %v1324 = vpop.f32.mrb[0].mxu0
      %1325 = vmatprep.mubr.bf16.mxu0 0
      %1326 = vmatmul.mubr.bf16.gmra.mrb[0].mxu0 %v802
      %v1327 = vpop.f32.mrb[0].mxu0
      %v1328 = vadd.f32 0.0, %v1327
      %v1329 = vpop.f32.mrb[0].mxu0
      %v1330 = vpop.f32.mrb[0].mxu0
      %v1331 = vadd.f32 0.0, %v1330
      %v1332 = vpop.f32.mrb[0].mxu0
      %1333 = vmatprep.mubr.bf16.mxu0 0
      %1334 = vmatmul.mubr.bf16.gmra.mrb[0].mxu0 %v805
      %v1335 = vpop.f32.mrb[0].mxu0
      %v1336 = vadd.f32 0.0, %v1335
      %v1337 = vpop.f32.mrb[0].mxu0
      %v1338 = vpop.f32.mrb[0].mxu0
      %v1339 = vadd.f32 0.0, %v1338
      %v1340 = vpop.f32.mrb[0].mxu0
      %1341 = vmatprep.mubr.bf16.mxu0 0
      %1342 = vmatmul.mubr.bf16.gmra.mrb[0].mxu0 %v808
      %v1343 = vpop.f32.mrb[0].mxu0
      %v1344 = vadd.f32 0.0, %v1343
      %v1345 = vpop.f32.mrb[0].mxu0
      %v1346 = vpop.f32.mrb[0].mxu0
      %v1347 = vadd.f32 0.0, %v1346
      %v1348 = vpop.f32.mrb[0].mxu0
      %1349 = vmatprep.mubr.bf16.mxu0 0
      %1350 = vmatmul.mubr.bf16.gmra.mrb[0].mxu0 %v811
      %v1351 = vpop.f32.mrb[0].mxu0
      %v1352 = vadd.f32 0.0, %v1351
      %v1353 = vpop.f32.mrb[0].mxu0
      %v1354 = vpop.f32.mrb[0].mxu0
      %v1355 = vadd.f32 0.0, %v1354
      %v1356 = vpop.f32.mrb[0].mxu0
      %1357 = vdwg.mxu0
      %vm1358 = vcmp.ge.f32.partialorder %v848, 0.0
      %vm1359 = vcmp.ge.f32.partialorder %v851, 0.0
      %vm1360 = vcmp.ge.f32.partialorder %v856, 0.0
      %vm1361 = vcmp.ge.f32.partialorder %v859, 0.0
      %vm1362 = vcmp.ge.f32.partialorder %v864, 0.0
      %vm1363 = vcmp.ge.f32.partialorder %v867, 0.0
      %vm1364 = vcmp.ge.f32.partialorder %v872, 0.0
      %vm1365 = vcmp.ge.f32.partialorder %v875, 0.0
      %vm1366 = vcmp.ge.f32.partialorder %v880, 0.0
      %vm1367 = vcmp.ge.f32.partialorder %v883, 0.0
      %vm1368 = vcmp.ge.f32.partialorder %v888, 0.0
      %vm1369 = vcmp.ge.f32.partialorder %v891, 0.0
      %vm1370 = vcmp.ge.f32.partialorder %v896, 0.0
      %vm1371 = vcmp.ge.f32.partialorder %v899, 0.0
      %vm1372 = vcmp.ge.f32.partialorder %v904, 0.0
      %vm1373 = vcmp.ge.f32.partialorder %v907, 0.0
      %vm1374 = vcmp.ge.f32.partialorder %v912, 0.0
      %vm1375 = vcmp.ge.f32.partialorder %v915, 0.0
      %vm1376 = vcmp.ge.f32.partialorder %v920, 0.0
      %vm1377 = vcmp.ge.f32.partialorder %v923, 0.0
      %vm1378 = vcmp.ge.f32.partialorder %v928, 0.0
      %vm1379 = vcmp.ge.f32.partialorder %v931, 0.0
      %vm1380 = vcmp.ge.f32.partialorder %v936, 0.0
      %vm1381 = vcmp.ge.f32.partialorder %v939, 0.0
      %vm1382 = vcmp.ge.f32.partialorder %v944, 0.0
      %vm1383 = vcmp.ge.f32.partialorder %v947, 0.0
      %vm1384 = vcmp.ge.f32.partialorder %v952, 0.0
      %vm1385 = vcmp.ge.f32.partialorder %v955, 0.0
      %vm1386 = vcmp.ge.f32.partialorder %v960, 0.0
      %vm1387 = vcmp.ge.f32.partialorder %v963, 0.0
      %vm1388 = vcmp.ge.f32.partialorder %v968, 0.0
      %vm1389 = vcmp.ge.f32.partialorder %v971, 0.0
      %vm1390 = vcmp.ge.f32.partialorder %v976, 0.0
      %vm1391 = vcmp.ge.f32.partialorder %v979, 0.0
      %vm1392 = vcmp.ge.f32.partialorder %v984, 0.0
      %vm1393 = vcmp.ge.f32.partialorder %v987, 0.0
      %vm1394 = vcmp.ge.f32.partialorder %v992, 0.0
      %vm1395 = vcmp.ge.f32.partialorder %v995, 0.0
      %vm1396 = vcmp.ge.f32.partialorder %v1000, 0.0
      %vm1397 = vcmp.ge.f32.partialorder %v1003, 0.0
      %vm1398 = vcmp.ge.f32.partialorder %v1008, 0.0
      %vm1399 = vcmp.ge.f32.partialorder %v1011, 0.0
      %vm1400 = vcmp.ge.f32.partialorder %v1016, 0.0
      %vm1401 = vcmp.ge.f32.partialorder %v1019, 0.0
      %vm1402 = vcmp.ge.f32.partialorder %v1024, 0.0
      %vm1403 = vcmp.ge.f32.partialorder %v1027, 0.0
      %vm1404 = vcmp.ge.f32.partialorder %v1032, 0.0
      %vm1405 = vcmp.ge.f32.partialorder %v1035, 0.0
      %vm1406 = vcmp.ge.f32.partialorder %v1040, 0.0
      %vm1407 = vcmp.ge.f32.partialorder %v1043, 0.0
      %vm1408 = vcmp.ge.f32.partialorder %v1048, 0.0
      %vm1409 = vcmp.ge.f32.partialorder %v1051, 0.0
      %vm1410 = vcmp.ge.f32.partialorder %v1056, 0.0
      %vm1411 = vcmp.ge.f32.partialorder %v1059, 0.0
      %vm1412 = vcmp.ge.f32.partialorder %v1064, 0.0
      %vm1413 = vcmp.ge.f32.partialorder %v1067, 0.0
      %vm1414 = vcmp.ge.f32.partialorder %v1072, 0.0
      %vm1415 = vcmp.ge.f32.partialorder %v1075, 0.0
      %vm1416 = vcmp.ge.f32.partialorder %v1080, 0.0
      %vm1417 = vcmp.ge.f32.partialorder %v1083, 0.0
      %vm1418 = vcmp.ge.f32.partialorder %v1088, 0.0
      %vm1419 = vcmp.ge.f32.partialorder %v1091, 0.0
      %vm1420 = vcmp.ge.f32.partialorder %v1096, 0.0
      %vm1421 = vcmp.ge.f32.partialorder %v1099, 0.0
      %vm1422 = vcmp.ge.f32.partialorder %v1104, 0.0
      %vm1423 = vcmp.ge.f32.partialorder %v1107, 0.0
      %vm1424 = vcmp.ge.f32.partialorder %v1112, 0.0
      %vm1425 = vcmp.ge.f32.partialorder %v1115, 0.0
      %vm1426 = vcmp.ge.f32.partialorder %v1120, 0.0
      %vm1427 = vcmp.ge.f32.partialorder %v1123, 0.0
      %vm1428 = vcmp.ge.f32.partialorder %v1128, 0.0
      %vm1429 = vcmp.ge.f32.partialorder %v1131, 0.0
      %vm1430 = vcmp.ge.f32.partialorder %v1136, 0.0
      %vm1431 = vcmp.ge.f32.partialorder %v1139, 0.0
      %vm1432 = vcmp.ge.f32.partialorder %v1144, 0.0
      %vm1433 = vcmp.ge.f32.partialorder %v1147, 0.0
      %vm1434 = vcmp.ge.f32.partialorder %v1152, 0.0
      %vm1435 = vcmp.ge.f32.partialorder %v1155, 0.0
      %vm1436 = vcmp.ge.f32.partialorder %v1160, 0.0
      %vm1437 = vcmp.ge.f32.partialorder %v1163, 0.0
      %vm1438 = vcmp.ge.f32.partialorder %v1168, 0.0
      %vm1439 = vcmp.ge.f32.partialorder %v1171, 0.0
      %vm1440 = vcmp.ge.f32.partialorder %v1176, 0.0
      %vm1441 = vcmp.ge.f32.partialorder %v1179, 0.0
      %vm1442 = vcmp.ge.f32.partialorder %v1184, 0.0
      %vm1443 = vcmp.ge.f32.partialorder %v1187, 0.0
      %vm1444 = vcmp.ge.f32.partialorder %v1192, 0.0
      %vm1445 = vcmp.ge.f32.partialorder %v1195, 0.0
      %vm1446 = vcmp.ge.f32.partialorder %v1200, 0.0
      %vm1447 = vcmp.ge.f32.partialorder %v1203, 0.0
      %vm1448 = vcmp.ge.f32.partialorder %v1208, 0.0
      %vm1449 = vcmp.ge.f32.partialorder %v1211, 0.0
      %vm1450 = vcmp.ge.f32.partialorder %v1216, 0.0
      %vm1451 = vcmp.ge.f32.partialorder %v1219, 0.0
      %vm1452 = vcmp.ge.f32.partialorder %v1224, 0.0
      %vm1453 = vcmp.ge.f32.partialorder %v1227, 0.0
      %vm1454 = vcmp.ge.f32.partialorder %v1232, 0.0
      %vm1455 = vcmp.ge.f32.partialorder %v1235, 0.0
      %vm1456 = vcmp.ge.f32.partialorder %v1240, 0.0
      %vm1457 = vcmp.ge.f32.partialorder %v1243, 0.0
      %vm1458 = vcmp.ge.f32.partialorder %v1248, 0.0
      %vm1459 = vcmp.ge.f32.partialorder %v1251, 0.0
      %vm1460 = vcmp.ge.f32.partialorder %v1256, 0.0
      %vm1461 = vcmp.ge.f32.partialorder %v1259, 0.0
      %vm1462 = vcmp.ge.f32.partialorder %v1264, 0.0
      %vm1463 = vcmp.ge.f32.partialorder %v1267, 0.0
      %vm1464 = vcmp.ge.f32.partialorder %v1272, 0.0
      %vm1465 = vcmp.ge.f32.partialorder %v1275, 0.0
      %vm1466 = vcmp.ge.f32.partialorder %v1280, 0.0
      %vm1467 = vcmp.ge.f32.partialorder %v1283, 0.0
      %vm1468 = vcmp.ge.f32.partialorder %v1288, 0.0
      %vm1469 = vcmp.ge.f32.partialorder %v1291, 0.0
      %vm1470 = vcmp.ge.f32.partialorder %v1296, 0.0
      %vm1471 = vcmp.ge.f32.partialorder %v1299, 0.0
      %vm1472 = vcmp.ge.f32.partialorder %v1304, 0.0
      %vm1473 = vcmp.ge.f32.partialorder %v1307, 0.0
      %vm1474 = vcmp.ge.f32.partialorder %v1312, 0.0
      %vm1475 = vcmp.ge.f32.partialorder %v1315, 0.0
      %vm1476 = vcmp.ge.f32.partialorder %v1320, 0.0
      %vm1477 = vcmp.ge.f32.partialorder %v1323, 0.0
      %vm1478 = vcmp.ge.f32.partialorder %v1328, 0.0
      %vm1479 = vcmp.ge.f32.partialorder %v1331, 0.0
      %vm1480 = vcmp.ge.f32.partialorder %v1336, 0.0
      %vm1481 = vcmp.ge.f32.partialorder %v1339, 0.0
      %vm1482 = vcmp.ge.f32.partialorder %v1344, 0.0
      %vm1483 = vcmp.ge.f32.partialorder %v1347, 0.0
      %vm1484 = vcmp.ge.f32.partialorder %v1352, 0.0
      %vm1485 = vcmp.ge.f32.partialorder %v1355, 0.0
      %v1486 = vmul.f32 %v848, 0.2
      %v1487 = vmul.f32 %v851, 0.2
      %v1488 = vmul.f32 %v856, 0.2
      %v1489 = vmul.f32 %v859, 0.2
      %v1490 = vmul.f32 %v864, 0.2
      %v1491 = vmul.f32 %v867, 0.2
      %v1492 = vmul.f32 %v872, 0.2
      %v1493 = vmul.f32 %v875, 0.2
      %v1494 = vmul.f32 %v880, 0.2
      %v1495 = vmul.f32 %v883, 0.2
      %v1496 = vmul.f32 %v888, 0.2
      %v1497 = vmul.f32 %v891, 0.2
      %v1498 = vmul.f32 %v896, 0.2
      %v1499 = vmul.f32 %v899, 0.2
      %v1500 = vmul.f32 %v904, 0.2
      %v1501 = vmul.f32 %v907, 0.2
      %v1502 = vmul.f32 %v912, 0.2
      %v1503 = vmul.f32 %v915, 0.2
      %v1504 = vmul.f32 %v920, 0.2
      %v1505 = vmul.f32 %v923, 0.2
      %v1506 = vmul.f32 %v928, 0.2
      %v1507 = vmul.f32 %v931, 0.2
      %v1508 = vmul.f32 %v936, 0.2
      %v1509 = vmul.f32 %v939, 0.2
      %v1510 = vmul.f32 %v944, 0.2
      %v1511 = vmul.f32 %v947, 0.2
      %v1512 = vmul.f32 %v952, 0.2
      %v1513 = vmul.f32 %v955, 0.2
      %v1514 = vmul.f32 %v960, 0.2
      %v1515 = vmul.f32 %v963, 0.2
      %v1516 = vmul.f32 %v968, 0.2
      %v1517 = vmul.f32 %v971, 0.2
      %v1518 = vmul.f32 %v976, 0.2
      %v1519 = vmul.f32 %v979, 0.2
      %v1520 = vmul.f32 %v984, 0.2
      %v1521 = vmul.f32 %v987, 0.2
      %v1522 = vmul.f32 %v992, 0.2
      %v1523 = vmul.f32 %v995, 0.2
      %v1524 = vmul.f32 %v1000, 0.2
      %v1525 = vmul.f32 %v1003, 0.2
      %v1526 = vmul.f32 %v1008, 0.2
      %v1527 = vmul.f32 %v1011, 0.2
      %v1528 = vmul.f32 %v1016, 0.2
      %v1529 = vmul.f32 %v1019, 0.2
      %v1530 = vmul.f32 %v1024, 0.2
      %v1531 = vmul.f32 %v1027, 0.2
      %v1532 = vmul.f32 %v1032, 0.2
      %v1533 = vmul.f32 %v1035, 0.2
      %v1534 = vmul.f32 %v1040, 0.2
      %v1535 = vmul.f32 %v1043, 0.2
      %v1536 = vmul.f32 %v1048, 0.2
      %v1537 = vmul.f32 %v1051, 0.2
      %v1538 = vmul.f32 %v1056, 0.2
      %v1539 = vmul.f32 %v1059, 0.2
      %v1540 = vmul.f32 %v1064, 0.2
      %v1541 = vmul.f32 %v1067, 0.2
      %v1542 = vmul.f32 %v1072, 0.2
      %v1543 = vmul.f32 %v1075, 0.2
      %v1544 = vmul.f32 %v1080, 0.2
      %v1545 = vmul.f32 %v1083, 0.2
      %v1546 = vmul.f32 %v1088, 0.2
      %v1547 = vmul.f32 %v1091, 0.2
      %v1548 = vmul.f32 %v1096, 0.2
      %v1549 = vmul.f32 %v1099, 0.2
      %v1550 = vmul.f32 %v1104, 0.2
      %v1551 = vmul.f32 %v1107, 0.2
      %v1552 = vmul.f32 %v1112, 0.2
      %v1553 = vmul.f32 %v1115, 0.2
      %v1554 = vmul.f32 %v1120, 0.2
      %v1555 = vmul.f32 %v1123, 0.2
      %v1556 = vmul.f32 %v1128, 0.2
      %v1557 = vmul.f32 %v1131, 0.2
      %v1558 = vmul.f32 %v1136, 0.2
      %v1559 = vmul.f32 %v1139, 0.2
      %v1560 = vmul.f32 %v1144, 0.2
      %v1561 = vmul.f32 %v1147, 0.2
      %v1562 = vmul.f32 %v1152, 0.2
      %v1563 = vmul.f32 %v1155, 0.2
      %v1564 = vmul.f32 %v1160, 0.2
      %v1565 = vmul.f32 %v1163, 0.2
      %v1566 = vmul.f32 %v1168, 0.2
      %v1567 = vmul.f32 %v1171, 0.2
      %v1568 = vmul.f32 %v1176, 0.2
      %v1569 = vmul.f32 %v1179, 0.2
      %v1570 = vmul.f32 %v1184, 0.2
      %v1571 = vmul.f32 %v1187, 0.2
      %v1572 = vmul.f32 %v1192, 0.2
      %v1573 = vmul.f32 %v1195, 0.2
      %v1574 = vmul.f32 %v1200, 0.2
      %v1575 = vmul.f32 %v1203, 0.2
      %v1576 = vmul.f32 %v1208, 0.2
      %v1577 = vmul.f32 %v1211, 0.2
      %v1578 = vmul.f32 %v1216, 0.2
      %v1579 = vmul.f32 %v1219, 0.2
      %v1580 = vmul.f32 %v1224, 0.2
      %v1581 = vmul.f32 %v1227, 0.2
      %v1582 = vmul.f32 %v1232, 0.2
      %v1583 = vmul.f32 %v1235, 0.2
      %v1584 = vmul.f32 %v1240, 0.2
      %v1585 = vmul.f32 %v1243, 0.2
      %v1586 = vmul.f32 %v1248, 0.2
      %v1587 = vmul.f32 %v1251, 0.2
      %v1588 = vmul.f32 %v1256, 0.2
      %v1589 = vmul.f32 %v1259, 0.2
      %v1590 = vmul.f32 %v1264, 0.2
      %v1591 = vmul.f32 %v1267, 0.2
      %v1592 = vmul.f32 %v1272, 0.2
      %v1593 = vmul.f32 %v1275, 0.2
      %v1594 = vmul.f32 %v1280, 0.2
      %v1595 = vmul.f32 %v1283, 0.2
      %v1596 = vmul.f32 %v1288, 0.2
      %v1597 = vmul.f32 %v1291, 0.2
      %v1598 = vmul.f32 %v1296, 0.2
      %v1599 = vmul.f32 %v1299, 0.2
      %v1600 = vmul.f32 %v1304, 0.2
      %v1601 = vmul.f32 %v1307, 0.2
      %v1602 = vmul.f32 %v1312, 0.2
      %v1603 = vmul.f32 %v1315, 0.2
      %v1604 = vmul.f32 %v1320, 0.2
      %v1605 = vmul.f32 %v1323, 0.2
      %v1606 = vmul.f32 %v1328, 0.2
      %v1607 = vmul.f32 %v1331, 0.2
      %v1608 = vmul.f32 %v1336, 0.2
      %v1609 = vmul.f32 %v1339, 0.2
      %v1610 = vmul.f32 %v1344, 0.2
      %v1611 = vmul.f32 %v1347, 0.2
      %v1612 = vmul.f32 %v1352, 0.2
      %v1613 = vmul.f32 %v1355, 0.2
      %v1614 = vsel %vm1358, %v848, %v1486
      %v1615 = vsel %vm1359, %v851, %v1487
      %v1616 = vsel %vm1360, %v856, %v1488
      %v1617 = vsel %vm1361, %v859, %v1489
      %v1618 = vsel %vm1362, %v864, %v1490
      %v1619 = vsel %vm1363, %v867, %v1491
      %v1620 = vsel %vm1364, %v872, %v1492
      %v1621 = vsel %vm1365, %v875, %v1493
      %v1622 = vsel %vm1366, %v880, %v1494
      %v1623 = vsel %vm1367, %v883, %v1495
      %v1624 = vsel %vm1368, %v888, %v1496
      %v1625 = vsel %vm1369, %v891, %v1497
      %v1626 = vsel %vm1370, %v896, %v1498
      %v1627 = vsel %vm1371, %v899, %v1499
      %v1628 = vsel %vm1372, %v904, %v1500
      %v1629 = vsel %vm1373, %v907, %v1501
      %v1630 = vsel %vm1374, %v912, %v1502
      %v1631 = vsel %vm1375, %v915, %v1503
      %v1632 = vsel %vm1376, %v920, %v1504
      %v1633 = vsel %vm1377, %v923, %v1505
      %v1634 = vsel %vm1378, %v928, %v1506
      %v1635 = vsel %vm1379, %v931, %v1507
      %v1636 = vsel %vm1380, %v936, %v1508
      %v1637 = vsel %vm1381, %v939, %v1509
      %v1638 = vsel %vm1382, %v944, %v1510
      %v1639 = vsel %vm1383, %v947, %v1511
      %v1640 = vsel %vm1384, %v952, %v1512
      %v1641 = vsel %vm1385, %v955, %v1513
      %v1642 = vsel %vm1386, %v960, %v1514
      %v1643 = vsel %vm1387, %v963, %v1515
      %v1644 = vsel %vm1388, %v968, %v1516
      %v1645 = vsel %vm1389, %v971, %v1517
      %v1646 = vsel %vm1390, %v976, %v1518
      %v1647 = vsel %vm1391, %v979, %v1519
      %v1648 = vsel %vm1392, %v984, %v1520
      %v1649 = vsel %vm1393, %v987, %v1521
      %v1650 = vsel %vm1394, %v992, %v1522
      %v1651 = vsel %vm1395, %v995, %v1523
      %v1652 = vsel %vm1396, %v1000, %v1524
      %v1653 = vsel %vm1397, %v1003, %v1525
      %v1654 = vsel %vm1398, %v1008, %v1526
      %v1655 = vsel %vm1399, %v1011, %v1527
      %v1656 = vsel %vm1400, %v1016, %v1528
      %v1657 = vsel %vm1401, %v1019, %v1529
      %v1658 = vsel %vm1402, %v1024, %v1530
      %v1659 = vsel %vm1403, %v1027, %v1531
      %v1660 = vsel %vm1404, %v1032, %v1532
      %v1661 = vsel %vm1405, %v1035, %v1533
      %v1662 = vsel %vm1406, %v1040, %v1534
      %v1663 = vsel %vm1407, %v1043, %v1535
      %v1664 = vsel %vm1408, %v1048, %v1536
      %v1665 = vsel %vm1409, %v1051, %v1537
      %v1666 = vsel %vm1410, %v1056, %v1538
      %v1667 = vsel %vm1411, %v1059, %v1539
      %v1668 = vsel %vm1412, %v1064, %v1540
      %v1669 = vsel %vm1413, %v1067, %v1541
      %v1670 = vsel %vm1414, %v1072, %v1542
      %v1671 = vsel %vm1415, %v1075, %v1543
      %v1672 = vsel %vm1416, %v1080, %v1544
      %v1673 = vsel %vm1417, %v1083, %v1545
      %v1674 = vsel %vm1418, %v1088, %v1546
      %v1675 = vsel %vm1419, %v1091, %v1547
      %v1676 = vsel %vm1420, %v1096, %v1548
      %v1677 = vsel %vm1421, %v1099, %v1549
      %v1678 = vsel %vm1422, %v1104, %v1550
      %v1679 = vsel %vm1423, %v1107, %v1551
      %v1680 = vsel %vm1424, %v1112, %v1552
      %v1681 = vsel %vm1425, %v1115, %v1553
      %v1682 = vsel %vm1426, %v1120, %v1554
      %v1683 = vsel %vm1427, %v1123, %v1555
      %v1684 = vsel %vm1428, %v1128, %v1556
      %v1685 = vsel %vm1429, %v1131, %v1557
      %v1686 = vsel %vm1430, %v1136, %v1558
      %v1687 = vsel %vm1431, %v1139, %v1559
      %v1688 = vsel %vm1432, %v1144, %v1560
      %v1689 = vsel %vm1433, %v1147, %v1561
      %v1690 = vsel %vm1434, %v1152, %v1562
      %v1691 = vsel %vm1435, %v1155, %v1563
      %v1692 = vsel %vm1436, %v1160, %v1564
      %v1693 = vsel %vm1437, %v1163, %v1565
      %v1694 = vsel %vm1438, %v1168, %v1566
      %v1695 = vsel %vm1439, %v1171, %v1567
      %v1696 = vsel %vm1440, %v1176, %v1568
      %v1697 = vsel %vm1441, %v1179, %v1569
      %v1698 = vsel %vm1442, %v1184, %v1570
      %v1699 = vsel %vm1443, %v1187, %v1571
      %v1700 = vsel %vm1444, %v1192, %v1572
      %v1701 = vsel %vm1445, %v1195, %v1573
      %v1702 = vsel %vm1446, %v1200, %v1574
      %v1703 = vsel %vm1447, %v1203, %v1575
      %v1704 = vsel %vm1448, %v1208, %v1576
      %v1705 = vsel %vm1449, %v1211, %v1577
      %v1706 = vsel %vm1450, %v1216, %v1578
      %v1707 = vsel %vm1451, %v1219, %v1579
      %v1708 = vsel %vm1452, %v1224, %v1580
      %v1709 = vsel %vm1453, %v1227, %v1581
      %v1710 = vsel %vm1454, %v1232, %v1582
      %v1711 = vsel %vm1455, %v1235, %v1583
      %v1712 = vsel %vm1456, %v1240, %v1584
      %v1713 = vsel %vm1457, %v1243, %v1585
      %v1714 = vsel %vm1458, %v1248, %v1586
      %v1715 = vsel %vm1459, %v1251, %v1587
      %v1716 = vsel %vm1460, %v1256, %v1588
      %v1717 = vsel %vm1461, %v1259, %v1589
      %v1718 = vsel %vm1462, %v1264, %v1590
      %v1719 = vsel %vm1463, %v1267, %v1591
      %v1720 = vsel %vm1464, %v1272, %v1592
      %v1721 = vsel %vm1465, %v1275, %v1593
      %v1722 = vsel %vm1466, %v1280, %v1594
      %v1723 = vsel %vm1467, %v1283, %v1595
      %v1724 = vsel %vm1468, %v1288, %v1596
      %v1725 = vsel %vm1469, %v1291, %v1597
      %v1726 = vsel %vm1470, %v1296, %v1598
      %v1727 = vsel %vm1471, %v1299, %v1599
      %v1728 = vsel %vm1472, %v1304, %v1600
      %v1729 = vsel %vm1473, %v1307, %v1601
      %v1730 = vsel %vm1474, %v1312, %v1602
      %v1731 = vsel %vm1475, %v1315, %v1603
      %v1732 = vsel %vm1476, %v1320, %v1604
      %v1733 = vsel %vm1477, %v1323, %v1605
      %v1734 = vsel %vm1478, %v1328, %v1606
      %v1735 = vsel %vm1479, %v1331, %v1607
      %v1736 = vsel %vm1480, %v1336, %v1608
      %v1737 = vsel %vm1481, %v1339, %v1609
      %v1738 = vsel %vm1482, %v1344, %v1610
      %v1739 = vsel %vm1483, %v1347, %v1611
      %v1740 = vsel %vm1484, %v1352, %v1612
      %v1741 = vsel %vm1485, %v1355, %v1613
      %v1742 = vpack.c.bf16 %v1615, %v1614
      %v1743 = vpack.c.bf16 %v1617, %v1616
      %v1744 = vpack.c.bf16 %v1619, %v1618
      %v1745 = vpack.c.bf16 %v1621, %v1620
      %v1746 = vpack.c.bf16 %v1623, %v1622
      %v1747 = vpack.c.bf16 %v1625, %v1624
      %v1748 = vpack.c.bf16 %v1627, %v1626
      %v1749 = vpack.c.bf16 %v1629, %v1628
      %v1750 = vpack.c.bf16 %v1631, %v1630
      %v1751 = vpack.c.bf16 %v1633, %v1632
      %v1752 = vpack.c.bf16 %v1635, %v1634
      %v1753 = vpack.c.bf16 %v1637, %v1636
      %v1754 = vpack.c.bf16 %v1639, %v1638
      %v1755 = vpack.c.bf16 %v1641, %v1640
      %v1756 = vpack.c.bf16 %v1643, %v1642
      %v1757 = vpack.c.bf16 %v1645, %v1644
      %v1758 = vpack.c.bf16 %v1647, %v1646
      %v1759 = vpack.c.bf16 %v1649, %v1648
      %v1760 = vpack.c.bf16 %v1651, %v1650
      %v1761 = vpack.c.bf16 %v1653, %v1652
      %v1762 = vpack.c.bf16 %v1655, %v1654
      %v1763 = vpack.c.bf16 %v1657, %v1656
      %v1764 = vpack.c.bf16 %v1659, %v1658
      %v1765 = vpack.c.bf16 %v1661, %v1660
      %v1766 = vpack.c.bf16 %v1663, %v1662
      %v1767 = vpack.c.bf16 %v1665, %v1664
      %v1768 = vpack.c.bf16 %v1667, %v1666
      %v1769 = vpack.c.bf16 %v1669, %v1668
      %v1770 = vpack.c.bf16 %v1671, %v1670
      %v1771 = vpack.c.bf16 %v1673, %v1672
      %v1772 = vpack.c.bf16 %v1675, %v1674
      %v1773 = vpack.c.bf16 %v1677, %v1676
      %v1774 = vpack.c.bf16 %v1679, %v1678
      %v1775 = vpack.c.bf16 %v1681, %v1680
      %v1776 = vpack.c.bf16 %v1683, %v1682
      %v1777 = vpack.c.bf16 %v1685, %v1684
      %v1778 = vpack.c.bf16 %v1687, %v1686
      %v1779 = vpack.c.bf16 %v1689, %v1688
      %v1780 = vpack.c.bf16 %v1691, %v1690
      %v1781 = vpack.c.bf16 %v1693, %v1692
      %v1782 = vpack.c.bf16 %v1695, %v1694
      %v1783 = vpack.c.bf16 %v1697, %v1696
      %v1784 = vpack.c.bf16 %v1699, %v1698
      %v1785 = vpack.c.bf16 %v1701, %v1700
      %v1786 = vpack.c.bf16 %v1703, %v1702
      %v1787 = vpack.c.bf16 %v1705, %v1704
      %v1788 = vpack.c.bf16 %v1707, %v1706
      %v1789 = vpack.c.bf16 %v1709, %v1708
      %v1790 = vpack.c.bf16 %v1711, %v1710
      %v1791 = vpack.c.bf16 %v1713, %v1712
      %v1792 = vpack.c.bf16 %v1715, %v1714
      %v1793 = vpack.c.bf16 %v1717, %v1716
      %v1794 = vpack.c.bf16 %v1719, %v1718
      %v1795 = vpack.c.bf16 %v1721, %v1720
      %v1796 = vpack.c.bf16 %v1723, %v1722
      %v1797 = vpack.c.bf16 %v1725, %v1724
      %v1798 = vpack.c.bf16 %v1727, %v1726
      %v1799 = vpack.c.bf16 %v1729, %v1728
      %v1800 = vpack.c.bf16 %v1731, %v1730
      %v1801 = vpack.c.bf16 %v1733, %v1732
      %v1802 = vpack.c.bf16 %v1735, %v1734
      %v1803 = vpack.c.bf16 %v1737, %v1736
      %v1804 = vpack.c.bf16 %v1739, %v1738
      %v1805 = vpack.c.bf16 %v1741, %v1740
      %v1870 = vunpack.c.l.b16 %v1742
      %v1871 = vunpack.c.h.b16 %v1742
      %v1872 = vunpack.c.l.b16 %v1743
      %v1873 = vunpack.c.h.b16 %v1743
      %v1874 = vunpack.c.l.b16 %v1744
      %v1875 = vunpack.c.h.b16 %v1744
      %v1876 = vunpack.c.l.b16 %v1745
      %v1877 = vunpack.c.h.b16 %v1745
      %v1878 = vunpack.c.l.b16 %v1746
      %v1879 = vunpack.c.h.b16 %v1746
      %v1880 = vunpack.c.l.b16 %v1747
      %v1881 = vunpack.c.h.b16 %v1747
      %v1882 = vunpack.c.l.b16 %v1748
      %v1883 = vunpack.c.h.b16 %v1748
      %v1884 = vunpack.c.l.b16 %v1749
      %v1885 = vunpack.c.h.b16 %v1749
      %v1886 = vunpack.c.l.b16 %v1750
      %v1887 = vunpack.c.h.b16 %v1750
      %v1888 = vunpack.c.l.b16 %v1751
      %v1889 = vunpack.c.h.b16 %v1751
      %v1890 = vunpack.c.l.b16 %v1752
      %v1891 = vunpack.c.h.b16 %v1752
      %v1892 = vunpack.c.l.b16 %v1753
      %v1893 = vunpack.c.h.b16 %v1753
      %v1894 = vunpack.c.l.b16 %v1754
      %v1895 = vunpack.c.h.b16 %v1754
      %v1896 = vunpack.c.l.b16 %v1755
      %v1897 = vunpack.c.h.b16 %v1755
      %v1898 = vunpack.c.l.b16 %v1756
      %v1899 = vunpack.c.h.b16 %v1756
      %v1900 = vunpack.c.l.b16 %v1757
      %v1901 = vunpack.c.h.b16 %v1757
      %v1902 = vunpack.c.l.b16 %v1758
      %v1903 = vunpack.c.h.b16 %v1758
      %v1904 = vunpack.c.l.b16 %v1759
      %v1905 = vunpack.c.h.b16 %v1759
      %v1906 = vunpack.c.l.b16 %v1760
      %v1907 = vunpack.c.h.b16 %v1760
      %v1908 = vunpack.c.l.b16 %v1761
      %v1909 = vunpack.c.h.b16 %v1761
      %v1910 = vunpack.c.l.b16 %v1762
      %v1911 = vunpack.c.h.b16 %v1762
      %v1912 = vunpack.c.l.b16 %v1763
      %v1913 = vunpack.c.h.b16 %v1763
      %v1914 = vunpack.c.l.b16 %v1764
      %v1915 = vunpack.c.h.b16 %v1764
      %v1916 = vunpack.c.l.b16 %v1765
      %v1917 = vunpack.c.h.b16 %v1765
      %v1918 = vunpack.c.l.b16 %v1766
      %v1919 = vunpack.c.h.b16 %v1766
      %v1920 = vunpack.c.l.b16 %v1767
      %v1921 = vunpack.c.h.b16 %v1767
      %v1922 = vunpack.c.l.b16 %v1768
      %v1923 = vunpack.c.h.b16 %v1768
      %v1924 = vunpack.c.l.b16 %v1769
      %v1925 = vunpack.c.h.b16 %v1769
      %v1926 = vunpack.c.l.b16 %v1770
      %v1927 = vunpack.c.h.b16 %v1770
      %v1928 = vunpack.c.l.b16 %v1771
      %v1929 = vunpack.c.h.b16 %v1771
      %v1930 = vunpack.c.l.b16 %v1772
      %v1931 = vunpack.c.h.b16 %v1772
      %v1932 = vunpack.c.l.b16 %v1773
      %v1933 = vunpack.c.h.b16 %v1773
      %v1934 = vunpack.c.l.b16 %v1774
      %v1935 = vunpack.c.h.b16 %v1774
      %v1936 = vunpack.c.l.b16 %v1775
      %v1937 = vunpack.c.h.b16 %v1775
      %v1938 = vunpack.c.l.b16 %v1776
      %v1939 = vunpack.c.h.b16 %v1776
      %v1940 = vunpack.c.l.b16 %v1777
      %v1941 = vunpack.c.h.b16 %v1777
      %v1942 = vunpack.c.l.b16 %v1778
      %v1943 = vunpack.c.h.b16 %v1778
      %v1944 = vunpack.c.l.b16 %v1779
      %v1945 = vunpack.c.h.b16 %v1779
      %v1946 = vunpack.c.l.b16 %v1780
      %v1947 = vunpack.c.h.b16 %v1780
      %v1948 = vunpack.c.l.b16 %v1781
      %v1949 = vunpack.c.h.b16 %v1781
      %v1950 = vunpack.c.l.b16 %v1782
      %v1951 = vunpack.c.h.b16 %v1782
      %v1952 = vunpack.c.l.b16 %v1783
      %v1953 = vunpack.c.h.b16 %v1783
      %v1954 = vunpack.c.l.b16 %v1784
      %v1955 = vunpack.c.h.b16 %v1784
      %v1956 = vunpack.c.l.b16 %v1785
      %v1957 = vunpack.c.h.b16 %v1785
      %v1958 = vunpack.c.l.b16 %v1786
      %v1959 = vunpack.c.h.b16 %v1786
      %v1960 = vunpack.c.l.b16 %v1787
      %v1961 = vunpack.c.h.b16 %v1787
      %v1962 = vunpack.c.l.b16 %v1788
      %v1963 = vunpack.c.h.b16 %v1788
      %v1964 = vunpack.c.l.b16 %v1789
      %v1965 = vunpack.c.h.b16 %v1789
      %v1966 = vunpack.c.l.b16 %v1790
      %v1967 = vunpack.c.h.b16 %v1790
      %v1968 = vunpack.c.l.b16 %v1791
      %v1969 = vunpack.c.h.b16 %v1791
      %v1970 = vunpack.c.l.b16 %v1792
      %v1971 = vunpack.c.h.b16 %v1792
      %v1972 = vunpack.c.l.b16 %v1793
      %v1973 = vunpack.c.h.b16 %v1793
      %v1974 = vunpack.c.l.b16 %v1794
      %v1975 = vunpack.c.h.b16 %v1794
      %v1976 = vunpack.c.l.b16 %v1795
      %v1977 = vunpack.c.h.b16 %v1795
      %v1978 = vunpack.c.l.b16 %v1796
      %v1979 = vunpack.c.h.b16 %v1796
      %v1980 = vunpack.c.l.b16 %v1797
      %v1981 = vunpack.c.h.b16 %v1797
      %v1982 = vunpack.c.l.b16 %v1798
      %v1983 = vunpack.c.h.b16 %v1798
      %v1984 = vunpack.c.l.b16 %v1799
      %v1985 = vunpack.c.h.b16 %v1799
      %v1986 = vunpack.c.l.b16 %v1800
      %v1987 = vunpack.c.h.b16 %v1800
      %v1988 = vunpack.c.l.b16 %v1801
      %v1989 = vunpack.c.h.b16 %v1801
      %v1990 = vunpack.c.l.b16 %v1802
      %v1991 = vunpack.c.h.b16 %v1802
      %v1992 = vunpack.c.l.b16 %v1803
      %v1993 = vunpack.c.h.b16 %v1803
      %v1994 = vunpack.c.l.b16 %v1804
      %v1995 = vunpack.c.h.b16 %v1804
      %v1996 = vunpack.c.l.b16 %v1805
      %v1997 = vunpack.c.h.b16 %v1805
      %v1998 = vpack.c.b16 %v1870, %v1870
      %v1999 = vpack.c.b16 %v1871, %v1871
      %v2000 = vpack.c.b16 %v1872, %v1872
      %v2001 = vpack.c.b16 %v1873, %v1873
      %v2002 = vpack.c.b16 %v1874, %v1874
      %v2003 = vpack.c.b16 %v1875, %v1875
      %v2004 = vpack.c.b16 %v1876, %v1876
      %v2005 = vpack.c.b16 %v1877, %v1877
      %v2006 = vpack.c.b16 %v1878, %v1878
      %v2007 = vpack.c.b16 %v1879, %v1879
      %v2008 = vpack.c.b16 %v1880, %v1880
      %v2009 = vpack.c.b16 %v1881, %v1881
      %v2010 = vpack.c.b16 %v1882, %v1882
      %v2011 = vpack.c.b16 %v1883, %v1883
      %v2012 = vpack.c.b16 %v1884, %v1884
      %v2013 = vpack.c.b16 %v1885, %v1885
      %v2014 = vpack.c.b16 %v1886, %v1886
      %v2015 = vpack.c.b16 %v1887, %v1887
      %v2016 = vpack.c.b16 %v1888, %v1888
      %v2017 = vpack.c.b16 %v1889, %v1889
      %v2018 = vpack.c.b16 %v1890, %v1890
      %v2019 = vpack.c.b16 %v1891, %v1891
      %v2020 = vpack.c.b16 %v1892, %v1892
      %v2021 = vpack.c.b16 %v1893, %v1893
      %v2022 = vpack.c.b16 %v1894, %v1894
      %v2023 = vpack.c.b16 %v1895, %v1895
      %v2024 = vpack.c.b16 %v1896, %v1896
      %v2025 = vpack.c.b16 %v1897, %v1897
      %v2026 = vpack.c.b16 %v1898, %v1898
      %v2027 = vpack.c.b16 %v1899, %v1899
      %v2028 = vpack.c.b16 %v1900, %v1900
      %v2029 = vpack.c.b16 %v1901, %v1901
      %v2030 = vpack.c.b16 %v1902, %v1902
      %v2031 = vpack.c.b16 %v1903, %v1903
      %v2032 = vpack.c.b16 %v1904, %v1904
      %v2033 = vpack.c.b16 %v1905, %v1905
      %v2034 = vpack.c.b16 %v1906, %v1906
      %v2035 = vpack.c.b16 %v1907, %v1907
      %v2036 = vpack.c.b16 %v1908, %v1908
      %v2037 = vpack.c.b16 %v1909, %v1909
      %v2038 = vpack.c.b16 %v1910, %v1910
      %v2039 = vpack.c.b16 %v1911, %v1911
      %v2040 = vpack.c.b16 %v1912, %v1912
      %v2041 = vpack.c.b16 %v1913, %v1913
      %v2042 = vpack.c.b16 %v1914, %v1914
      %v2043 = vpack.c.b16 %v1915, %v1915
      %v2044 = vpack.c.b16 %v1916, %v1916
      %v2045 = vpack.c.b16 %v1917, %v1917
      %v2046 = vpack.c.b16 %v1918, %v1918
      %v2047 = vpack.c.b16 %v1919, %v1919
      %v2048 = vpack.c.b16 %v1920, %v1920
      %v2049 = vpack.c.b16 %v1921, %v1921
      %v2050 = vpack.c.b16 %v1922, %v1922
      %v2051 = vpack.c.b16 %v1923, %v1923
      %v2052 = vpack.c.b16 %v1924, %v1924
      %v2053 = vpack.c.b16 %v1925, %v1925
      %v2054 = vpack.c.b16 %v1926, %v1926
      %v2055 = vpack.c.b16 %v1927, %v1927
      %v2056 = vpack.c.b16 %v1928, %v1928
      %v2057 = vpack.c.b16 %v1929, %v1929
      %v2058 = vpack.c.b16 %v1930, %v1930
      %v2059 = vpack.c.b16 %v1931, %v1931
      %v2060 = vpack.c.b16 %v1932, %v1932
      %v2061 = vpack.c.b16 %v1933, %v1933
      %v2062 = vpack.c.b16 %v1934, %v1934
      %v2063 = vpack.c.b16 %v1935, %v1935
      %v2064 = vpack.c.b16 %v1936, %v1936
      %v2065 = vpack.c.b16 %v1937, %v1937
      %v2066 = vpack.c.b16 %v1938, %v1938
      %v2067 = vpack.c.b16 %v1939, %v1939
      %v2068 = vpack.c.b16 %v1940, %v1940
      %v2069 = vpack.c.b16 %v1941, %v1941
      %v2070 = vpack.c.b16 %v1942, %v1942
      %v2071 = vpack.c.b16 %v1943, %v1943
      %v2072 = vpack.c.b16 %v1944, %v1944
      %v2073 = vpack.c.b16 %v1945, %v1945
      %v2074 = vpack.c.b16 %v1946, %v1946
      %v2075 = vpack.c.b16 %v1947, %v1947
      %v2076 = vpack.c.b16 %v1948, %v1948
      %v2077 = vpack.c.b16 %v1949, %v1949
      %v2078 = vpack.c.b16 %v1950, %v1950
      %v2079 = vpack.c.b16 %v1951, %v1951
      %v2080 = vpack.c.b16 %v1952, %v1952
      %v2081 = vpack.c.b16 %v1953, %v1953
      %v2082 = vpack.c.b16 %v1954, %v1954
      %v2083 = vpack.c.b16 %v1955, %v1955
      %v2084 = vpack.c.b16 %v1956, %v1956
      %v2085 = vpack.c.b16 %v1957, %v1957
      %v2086 = vpack.c.b16 %v1958, %v1958
      %v2087 = vpack.c.b16 %v1959, %v1959
      %v2088 = vpack.c.b16 %v1960, %v1960
      %v2089 = vpack.c.b16 %v1961, %v1961
      %v2090 = vpack.c.b16 %v1962, %v1962
      %v2091 = vpack.c.b16 %v1963, %v1963
      %v2092 = vpack.c.b16 %v1964, %v1964
      %v2093 = vpack.c.b16 %v1965, %v1965
      %v2094 = vpack.c.b16 %v1966, %v1966
      %v2095 = vpack.c.b16 %v1967, %v1967
      %v2096 = vpack.c.b16 %v1968, %v1968
      %v2097 = vpack.c.b16 %v1969, %v1969
      %v2098 = vpack.c.b16 %v1970, %v1970
      %v2099 = vpack.c.b16 %v1971, %v1971
      %v2100 = vpack.c.b16 %v1972, %v1972
      %v2101 = vpack.c.b16 %v1973, %v1973
      %v2102 = vpack.c.b16 %v1974, %v1974
      %v2103 = vpack.c.b16 %v1975, %v1975
      %v2104 = vpack.c.b16 %v1976, %v1976
      %v2105 = vpack.c.b16 %v1977, %v1977
      %v2106 = vpack.c.b16 %v1978, %v1978
      %v2107 = vpack.c.b16 %v1979, %v1979
      %v2108 = vpack.c.b16 %v1980, %v1980
      %v2109 = vpack.c.b16 %v1981, %v1981
      %v2110 = vpack.c.b16 %v1982, %v1982
      %v2111 = vpack.c.b16 %v1983, %v1983
      %v2112 = vpack.c.b16 %v1984, %v1984
      %v2113 = vpack.c.b16 %v1985, %v1985
      %v2114 = vpack.c.b16 %v1986, %v1986
      %v2115 = vpack.c.b16 %v1987, %v1987
      %v2116 = vpack.c.b16 %v1988, %v1988
      %v2117 = vpack.c.b16 %v1989, %v1989
      %v2118 = vpack.c.b16 %v1990, %v1990
      %v2119 = vpack.c.b16 %v1991, %v1991
      %v2120 = vpack.c.b16 %v1992, %v1992
      %v2121 = vpack.c.b16 %v1993, %v1993
      %v2122 = vpack.c.b16 %v1994, %v1994
      %v2123 = vpack.c.b16 %v1995, %v1995
      %v2124 = vpack.c.b16 %v1996, %v1996
      %v2125 = vpack.c.b16 %v1997, %v1997
      %vm2254 = vcmask 60416
      %2255 = vst.msk [vmem:[%s145] sm:$0xf] %vm2254, %v1998
      %2256 = vst.msk [vmem:[%s145 + $0x4] sm:$0xf] %vm2254, %v1999
      %2257 = vst.msk [vmem:[%s145 + $0x8] sm:$0xf] %vm2254, %v2000
      %2258 = vst.msk [vmem:[%s145 + $0xc] sm:$0xf] %vm2254, %v2001
      %2259 = vst.msk [vmem:[%s145 + $0x10] sm:$0xf] %vm2254, %v2002
      %2260 = vst.msk [vmem:[%s145 + $0x14] sm:$0xf] %vm2254, %v2003
      %2261 = vst.msk [vmem:[%s145 + $0x18] sm:$0xf] %vm2254, %v2004
      %2262 = vst.msk [vmem:[%s145 + $0x1c] sm:$0xf] %vm2254, %v2005
      %2263 = vst.msk [vmem:[%s145 + $0x20] sm:$0xf] %vm2254, %v2006
      %2264 = vst.msk [vmem:[%s145 + $0x24] sm:$0xf] %vm2254, %v2007
      %2265 = vst.msk [vmem:[%s145 + $0x28] sm:$0xf] %vm2254, %v2008
      %2266 = vst.msk [vmem:[%s145 + $0x2c] sm:$0xf] %vm2254, %v2009
      %2267 = vst.msk [vmem:[%s145 + $0x30] sm:$0xf] %vm2254, %v2010
      %2268 = vst.msk [vmem:[%s145 + $0x34] sm:$0xf] %vm2254, %v2011
      %2269 = vst.msk [vmem:[%s145 + $0x38] sm:$0xf] %vm2254, %v2012
      %2270 = vst.msk [vmem:[%s145 + $0x3c] sm:$0xf] %vm2254, %v2013
      %2271 = vst.msk [vmem:[%s145 + $0x40] sm:$0xf] %vm2254, %v2014
      %2272 = vst.msk [vmem:[%s145 + $0x44] sm:$0xf] %vm2254, %v2015
      %2273 = vst.msk [vmem:[%s145 + $0x48] sm:$0xf] %vm2254, %v2016
      %2274 = vst.msk [vmem:[%s145 + $0x4c] sm:$0xf] %vm2254, %v2017
      %2275 = vst.msk [vmem:[%s145 + $0x50] sm:$0xf] %vm2254, %v2018
      %2276 = vst.msk [vmem:[%s145 + $0x54] sm:$0xf] %vm2254, %v2019
      %2277 = vst.msk [vmem:[%s145 + $0x58] sm:$0xf] %vm2254, %v2020
      %2278 = vst.msk [vmem:[%s145 + $0x5c] sm:$0xf] %vm2254, %v2021
      %2279 = vst.msk [vmem:[%s145 + $0x60] sm:$0xf] %vm2254, %v2022
      %2280 = vst.msk [vmem:[%s145 + $0x64] sm:$0xf] %vm2254, %v2023
      %2281 = vst.msk [vmem:[%s145 + $0x68] sm:$0xf] %vm2254, %v2024
      %2282 = vst.msk [vmem:[%s145 + $0x6c] sm:$0xf] %vm2254, %v2025
      %2283 = vst.msk [vmem:[%s145 + $0x70] sm:$0xf] %vm2254, %v2026
      %2284 = vst.msk [vmem:[%s145 + $0x74] sm:$0xf] %vm2254, %v2027
      %2285 = vst.msk [vmem:[%s145 + $0x78] sm:$0xf] %vm2254, %v2028
      %2286 = vst.msk [vmem:[%s145 + $0x7c] sm:$0xf] %vm2254, %v2029
      %2287 = vst.msk [vmem:[%s145 + $0x80] sm:$0xf] %vm2254, %v2030
      %2288 = vst.msk [vmem:[%s145 + $0x84] sm:$0xf] %vm2254, %v2031
      %2289 = vst.msk [vmem:[%s145 + $0x88] sm:$0xf] %vm2254, %v2032
      %2290 = vst.msk [vmem:[%s145 + $0x8c] sm:$0xf] %vm2254, %v2033
      %2291 = vst.msk [vmem:[%s145 + $0x90] sm:$0xf] %vm2254, %v2034
      %2292 = vst.msk [vmem:[%s145 + $0x94] sm:$0xf] %vm2254, %v2035
      %2293 = vst.msk [vmem:[%s145 + $0x98] sm:$0xf] %vm2254, %v2036
      %2294 = vst.msk [vmem:[%s145 + $0x9c] sm:$0xf] %vm2254, %v2037
      %2295 = vst.msk [vmem:[%s145 + $0xa0] sm:$0xf] %vm2254, %v2038
      %2296 = vst.msk [vmem:[%s145 + $0xa4] sm:$0xf] %vm2254, %v2039
      %2297 = vst.msk [vmem:[%s145 + $0xa8] sm:$0xf] %vm2254, %v2040
      %2298 = vst.msk [vmem:[%s145 + $0xac] sm:$0xf] %vm2254, %v2041
      %2299 = vst.msk [vmem:[%s145 + $0xb0] sm:$0xf] %vm2254, %v2042
      %2300 = vst.msk [vmem:[%s145 + $0xb4] sm:$0xf] %vm2254, %v2043
      %2301 = vst.msk [vmem:[%s145 + $0xb8] sm:$0xf] %vm2254, %v2044
      %2302 = vst.msk [vmem:[%s145 + $0xbc] sm:$0xf] %vm2254, %v2045
      %2303 = vst.msk [vmem:[%s145 + $0xc0] sm:$0xf] %vm2254, %v2046
      %2304 = vst.msk [vmem:[%s145 + $0xc4] sm:$0xf] %vm2254, %v2047
      %2305 = vst.msk [vmem:[%s145 + $0xc8] sm:$0xf] %vm2254, %v2048
      %2306 = vst.msk [vmem:[%s145 + $0xcc] sm:$0xf] %vm2254, %v2049
      %2307 = vst.msk [vmem:[%s145 + $0xd0] sm:$0xf] %vm2254, %v2050
      %2308 = vst.msk [vmem:[%s145 + $0xd4] sm:$0xf] %vm2254, %v2051
      %2309 = vst.msk [vmem:[%s145 + $0xd8] sm:$0xf] %vm2254, %v2052
      %2310 = vst.msk [vmem:[%s145 + $0xdc] sm:$0xf] %vm2254, %v2053
      %2311 = vst.msk [vmem:[%s145 + $0xe0] sm:$0xf] %vm2254, %v2054
      %2312 = vst.msk [vmem:[%s145 + $0xe4] sm:$0xf] %vm2254, %v2055
      %2313 = vst.msk [vmem:[%s145 + $0xe8] sm:$0xf] %vm2254, %v2056
      %2314 = vst.msk [vmem:[%s145 + $0xec] sm:$0xf] %vm2254, %v2057
      %2315 = vst.msk [vmem:[%s145 + $0xf0] sm:$0xf] %vm2254, %v2058
      %2316 = vst.msk [vmem:[%s145 + $0xf4] sm:$0xf] %vm2254, %v2059
      %2317 = vst.msk [vmem:[%s145 + $0xf8] sm:$0xf] %vm2254, %v2060
      %2318 = vst.msk [vmem:[%s145 + $0xfc] sm:$0xf] %vm2254, %v2061
      %2319 = vst.msk [vmem:[%s145 + $0x100] sm:$0xf] %vm2254, %v2062
      %2320 = vst.msk [vmem:[%s145 + $0x104] sm:$0xf] %vm2254, %v2063
      %2321 = vst.msk [vmem:[%s145 + $0x108] sm:$0xf] %vm2254, %v2064
      %2322 = vst.msk [vmem:[%s145 + $0x10c] sm:$0xf] %vm2254, %v2065
      %2323 = vst.msk [vmem:[%s145 + $0x110] sm:$0xf] %vm2254, %v2066
      %2324 = vst.msk [vmem:[%s145 + $0x114] sm:$0xf] %vm2254, %v2067
      %2325 = vst.msk [vmem:[%s145 + $0x118] sm:$0xf] %vm2254, %v2068
      %2326 = vst.msk [vmem:[%s145 + $0x11c] sm:$0xf] %vm2254, %v2069
      %2327 = vst.msk [vmem:[%s145 + $0x120] sm:$0xf] %vm2254, %v2070
      %2328 = vst.msk [vmem:[%s145 + $0x124] sm:$0xf] %vm2254, %v2071
      %2329 = vst.msk [vmem:[%s145 + $0x128] sm:$0xf] %vm2254, %v2072
      %2330 = vst.msk [vmem:[%s145 + $0x12c] sm:$0xf] %vm2254, %v2073
      %2331 = vst.msk [vmem:[%s145 + $0x130] sm:$0xf] %vm2254, %v2074
      %2332 = vst.msk [vmem:[%s145 + $0x134] sm:$0xf] %vm2254, %v2075
      %2333 = vst.msk [vmem:[%s145 + $0x138] sm:$0xf] %vm2254, %v2076
      %2334 = vst.msk [vmem:[%s145 + $0x13c] sm:$0xf] %vm2254, %v2077
      %2335 = vst.msk [vmem:[%s145 + $0x140] sm:$0xf] %vm2254, %v2078
      %2336 = vst.msk [vmem:[%s145 + $0x144] sm:$0xf] %vm2254, %v2079
      %2337 = vst.msk [vmem:[%s145 + $0x148] sm:$0xf] %vm2254, %v2080
      %2338 = vst.msk [vmem:[%s145 + $0x14c] sm:$0xf] %vm2254, %v2081
      %2339 = vst.msk [vmem:[%s145 + $0x150] sm:$0xf] %vm2254, %v2082
      %2340 = vst.msk [vmem:[%s145 + $0x154] sm:$0xf] %vm2254, %v2083
      %2341 = vst.msk [vmem:[%s145 + $0x158] sm:$0xf] %vm2254, %v2084
      %2342 = vst.msk [vmem:[%s145 + $0x15c] sm:$0xf] %vm2254, %v2085
      %2343 = vst.msk [vmem:[%s145 + $0x160] sm:$0xf] %vm2254, %v2086
      %2344 = vst.msk [vmem:[%s145 + $0x164] sm:$0xf] %vm2254, %v2087
      %2345 = vst.msk [vmem:[%s145 + $0x168] sm:$0xf] %vm2254, %v2088
      %2346 = vst.msk [vmem:[%s145 + $0x16c] sm:$0xf] %vm2254, %v2089
      %2347 = vst.msk [vmem:[%s145 + $0x170] sm:$0xf] %vm2254, %v2090
      %2348 = vst.msk [vmem:[%s145 + $0x174] sm:$0xf] %vm2254, %v2091
      %2349 = vst.msk [vmem:[%s145 + $0x178] sm:$0xf] %vm2254, %v2092
      %2350 = vst.msk [vmem:[%s145 + $0x17c] sm:$0xf] %vm2254, %v2093
      %2351 = vst.msk [vmem:[%s145 + $0x180] sm:$0xf] %vm2254, %v2094
      %2352 = vst.msk [vmem:[%s145 + $0x184] sm:$0xf] %vm2254, %v2095
      %2353 = vst.msk [vmem:[%s145 + $0x188] sm:$0xf] %vm2254, %v2096
      %2354 = vst.msk [vmem:[%s145 + $0x18c] sm:$0xf] %vm2254, %v2097
      %2355 = vst.msk [vmem:[%s145 + $0x190] sm:$0xf] %vm2254, %v2098
      %2356 = vst.msk [vmem:[%s145 + $0x194] sm:$0xf] %vm2254, %v2099
      %2357 = vst.msk [vmem:[%s145 + $0x198] sm:$0xf] %vm2254, %v2100
      %2358 = vst.msk [vmem:[%s145 + $0x19c] sm:$0xf] %vm2254, %v2101
      %2359 = vst.msk [vmem:[%s145 + $0x1a0] sm:$0xf] %vm2254, %v2102
      %2360 = vst.msk [vmem:[%s145 + $0x1a4] sm:$0xf] %vm2254, %v2103
      %2361 = vst.msk [vmem:[%s145 + $0x1a8] sm:$0xf] %vm2254, %v2104
      %2362 = vst.msk [vmem:[%s145 + $0x1ac] sm:$0xf] %vm2254, %v2105
      %2363 = vst.msk [vmem:[%s145 + $0x1b0] sm:$0xf] %vm2254, %v2106
      %2364 = vst.msk [vmem:[%s145 + $0x1b4] sm:$0xf] %vm2254, %v2107
      %2365 = vst.msk [vmem:[%s145 + $0x1b8] sm:$0xf] %vm2254, %v2108
      %2366 = vst.msk [vmem:[%s145 + $0x1bc] sm:$0xf] %vm2254, %v2109
      %2367 = vst.msk [vmem:[%s145 + $0x1c0] sm:$0xf] %vm2254, %v2110
      %2368 = vst.msk [vmem:[%s145 + $0x1c4] sm:$0xf] %vm2254, %v2111
      %2369 = vst.msk [vmem:[%s145 + $0x1c8] sm:$0xf] %vm2254, %v2112
      %2370 = vst.msk [vmem:[%s145 + $0x1cc] sm:$0xf] %vm2254, %v2113
      %2371 = vst.msk [vmem:[%s145 + $0x1d0] sm:$0xf] %vm2254, %v2114
      %2372 = vst.msk [vmem:[%s145 + $0x1d4] sm:$0xf] %vm2254, %v2115
      %2373 = vst.msk [vmem:[%s145 + $0x1d8] sm:$0xf] %vm2254, %v2116
      %2374 = vst.msk [vmem:[%s145 + $0x1dc] sm:$0xf] %vm2254, %v2117
      %2375 = vst.msk [vmem:[%s145 + $0x1e0] sm:$0xf] %vm2254, %v2118
      %2376 = vst.msk [vmem:[%s145 + $0x1e4] sm:$0xf] %vm2254, %v2119
      %2377 = vst.msk [vmem:[%s145 + $0x1e8] sm:$0xf] %vm2254, %v2120
      %2378 = vst.msk [vmem:[%s145 + $0x1ec] sm:$0xf] %vm2254, %v2121
      %2379 = vst.msk [vmem:[%s145 + $0x1f0] sm:$0xf] %vm2254, %v2122
      %2380 = vst.msk [vmem:[%s145 + $0x1f4] sm:$0xf] %vm2254, %v2123
      %2381 = vst.msk [vmem:[%s145 + $0x1f8] sm:$0xf] %vm2254, %v2124
      %2382 = vst.msk [vmem:[%s145 + $0x1fc] sm:$0xf] %vm2254, %v2125
      %s2383 = smul.u32 128, %s13
      %p2384 = scmp.lt.s32.totalorder %s2383, 255
      %s2385 = scalar_select %p2384, %s2383, 255
      %s2386 = smul.addr %s2385, 4
      %s2387 = scalar_lea.vmem %s2, %s2386
      // Predicated region
      $region29: #{discriminator_forward.7} parent=27 // pred_check
        %p2388 = pneg %p78
      $region30: #{discriminator_forward.7} parent=27 // pred_check_branch
        %2390 = sbr.rel (%p2388) target = $region32
      $region31: #{discriminator_forward.7} parent=27 // pred_region
        %s2391 = smul.u32 128, %s13
      $region32: #{discriminator_forward.7} parent=27 // pred_fallthru
        _
    $region28: #{discriminator_forward.7} parent=5 // pred_fallthru
      _
    %p2392 = scmp.le.s32.totalorder 2, %s8
    // Predicated region
    $region33: #{discriminator_forward.7} parent=5 // pred_check
      %p2393 = pneg %p2392
    $region34: #{discriminator_forward.7} parent=5 // pred_check_branch
      %2395 = sbr.rel (%p2393) target = $region36
    $region35: #{discriminator_forward.7} parent=5 // pred_region
      %s2396 = ssub.s32 %s8, 2
      // Predicated region
      $region37: #{discriminator_forward.7} parent=35 // pred_check
        %p2397 = pneg %p84
      $region38: #{discriminator_forward.7} parent=35 // pred_check_branch
        %2399 = sbr.rel (%p2397) target = $region40
      $region39: #{discriminator_forward.7} parent=35 // pred_region
        %s2400 = smul.u32 128, %s14
        %p2401 = scmp.lt.s32.totalorder %s2400, 255
        %s2402 = scalar_select %p2401, %s2400, 255
        %s2403 = smul.addr %s2402, 4
        %s2404 = scalar_lea.vmem %s2, %s2403
      $region40: #{discriminator_forward.7} parent=35 // pred_fallthru
        _
    $region36: #{discriminator_forward.7} parent=5 // pred_fallthru
      _
  $region6: #{discriminator_forward.7} parent=0 // loop_footer
    %s12 = sadd.s32 1, %s8
  $region7: #{discriminator_forward.7} parent=0 // loop_footer_branch
    %7 = sbr.rel target = $region3
  $region8: #{discriminator_forward.7} parent=0 // loop_exit
    _

// kernel: discriminator_forward.8
$region0: #{discriminator_forward.8}
  #allocation0 [shape = 'u32[]', space=smem, size = 0x4, offset = 0x4, fixed_abs, tag = 'smem constant byte address 0x4 - core index']
  #allocation1 [shape = 'u32[144,128]{1,0:T(1,128)}', space=vmem, size = 0x12000, scoped, tag = 'internal scratch']
  %s0 = inlined_call_operand.vmem [shape: bf16[512,128], index: 0, kind: input, shape index: {}]
  %s1 = inlined_call_operand.vmem [shape: bf16[128,16], index: 1, kind: input, shape index: {}]
  %s2 = inlined_call_operand.vmem [shape: f32[512,16], index: 2, kind: output, shape index: {0}]
  %s3 = inlined_call_operand.vmem [shape: f32[1,1,16], index: 3, kind: output, shape index: {1}]
  %s4 = inlined_call_operand.vmem [shape: f32[1,1,16], index: 4, kind: output, shape index: {2}]
  %5 = xla_tuple %s2, %s3, %s4
  %s6 = sld [smem:[#allocation0]]
  $region34: #{discriminator_forward.8} parent=0
    _
  %s8 = ssub.s32 1, %s6
  %s9 = scalar_select 0, %s8, %s6
  // Predicated region
  $region2: #{discriminator_forward.8} parent=0 // pred_check
    _
  $region3: #{discriminator_forward.8} parent=0 // pred_check_branch
    %11 = sbr.rel (0) target = $region5
  $region4: #{discriminator_forward.8} parent=0 // pred_region
    _
  $region5: #{discriminator_forward.8} parent=0 // pred_fallthru
    _
  // Predicated region
  $region6: #{discriminator_forward.8} parent=0 // pred_check
    _
  $region7: #{discriminator_forward.8} parent=0 // pred_check_branch
    %13 = sbr.rel (0) target = $region9
  $region8: #{discriminator_forward.8} parent=0 // pred_region
    _
  $region9: #{discriminator_forward.8} parent=0 // pred_fallthru
    _
  %v15 = vld [vmem:[%s0] sm:$0xf]
  %v16 = vld [vmem:[%s0 + $0x4] sm:$0xf]
  %v17 = vld [vmem:[%s0 + $0x8] sm:$0xf]
  %v18 = vld [vmem:[%s0 + $0xc] sm:$0xf]
  %v19 = vld [vmem:[%s0 + $0x10] sm:$0xf]
  %v20 = vld [vmem:[%s0 + $0x14] sm:$0xf]
  %v21 = vld [vmem:[%s0 + $0x18] sm:$0xf]
  %v22 = vld [vmem:[%s0 + $0x1c] sm:$0xf]
  %v23 = vld [vmem:[%s0 + $0x20] sm:$0xf]
  %v24 = vld [vmem:[%s0 + $0x24] sm:$0xf]
  %v25 = vld [vmem:[%s0 + $0x28] sm:$0xf]
  %v26 = vld [vmem:[%s0 + $0x2c] sm:$0xf]
  %v27 = vld [vmem:[%s0 + $0x30] sm:$0xf]
  %v28 = vld [vmem:[%s0 + $0x34] sm:$0xf]
  %v29 = vld [vmem:[%s0 + $0x38] sm:$0xf]
  %v30 = vld [vmem:[%s0 + $0x3c] sm:$0xf]
  %v31 = vld [vmem:[%s0 + $0x40] sm:$0xf]
  %v32 = vld [vmem:[%s0 + $0x44] sm:$0xf]
  %v33 = vld [vmem:[%s0 + $0x48] sm:$0xf]
  %v34 = vld [vmem:[%s0 + $0x4c] sm:$0xf]
  %v35 = vld [vmem:[%s0 + $0x50] sm:$0xf]
  %v36 = vld [vmem:[%s0 + $0x54] sm:$0xf]
  %v37 = vld [vmem:[%s0 + $0x58] sm:$0xf]
  %v38 = vld [vmem:[%s0 + $0x5c] sm:$0xf]
  %v39 = vld [vmem:[%s0 + $0x60] sm:$0xf]
  %v40 = vld [vmem:[%s0 + $0x64] sm:$0xf]
  %v41 = vld [vmem:[%s0 + $0x68] sm:$0xf]
  %v42 = vld [vmem:[%s0 + $0x6c] sm:$0xf]
  %v43 = vld [vmem:[%s0 + $0x70] sm:$0xf]
  %v44 = vld [vmem:[%s0 + $0x74] sm:$0xf]
  %v45 = vld [vmem:[%s0 + $0x78] sm:$0xf]
  %v46 = vld [vmem:[%s0 + $0x7c] sm:$0xf]
  %v47 = vld [vmem:[%s0 + $0x80] sm:$0xf]
  %v48 = vld [vmem:[%s0 + $0x84] sm:$0xf]
  %v49 = vld [vmem:[%s0 + $0x88] sm:$0xf]
  %v50 = vld [vmem:[%s0 + $0x8c] sm:$0xf]
  %v51 = vld [vmem:[%s0 + $0x90] sm:$0xf]
  %v52 = vld [vmem:[%s0 + $0x94] sm:$0xf]
  %v53 = vld [vmem:[%s0 + $0x98] sm:$0xf]
  %v54 = vld [vmem:[%s0 + $0x9c] sm:$0xf]
  %v55 = vld [vmem:[%s0 + $0xa0] sm:$0xf]
  %v56 = vld [vmem:[%s0 + $0xa4] sm:$0xf]
  %v57 = vld [vmem:[%s0 + $0xa8] sm:$0xf]
  %v58 = vld [vmem:[%s0 + $0xac] sm:$0xf]
  %v59 = vld [vmem:[%s0 + $0xb0] sm:$0xf]
  %v60 = vld [vmem:[%s0 + $0xb4] sm:$0xf]
  %v61 = vld [vmem:[%s0 + $0xb8] sm:$0xf]
  %v62 = vld [vmem:[%s0 + $0xbc] sm:$0xf]
  %v63 = vld [vmem:[%s0 + $0xc0] sm:$0xf]
  %v64 = vld [vmem:[%s0 + $0xc4] sm:$0xf]
  %v65 = vld [vmem:[%s0 + $0xc8] sm:$0xf]
  %v66 = vld [vmem:[%s0 + $0xcc] sm:$0xf]
  %v67 = vld [vmem:[%s0 + $0xd0] sm:$0xf]
  %v68 = vld [vmem:[%s0 + $0xd4] sm:$0xf]
  %v69 = vld [vmem:[%s0 + $0xd8] sm:$0xf]
  %v70 = vld [vmem:[%s0 + $0xdc] sm:$0xf]
  %v71 = vld [vmem:[%s0 + $0xe0] sm:$0xf]
  %v72 = vld [vmem:[%s0 + $0xe4] sm:$0xf]
  %v73 = vld [vmem:[%s0 + $0xe8] sm:$0xf]
  %v74 = vld [vmem:[%s0 + $0xec] sm:$0xf]
  %v75 = vld [vmem:[%s0 + $0xf0] sm:$0xf]
  %v76 = vld [vmem:[%s0 + $0xf4] sm:$0xf]
  %v77 = vld [vmem:[%s0 + $0xf8] sm:$0xf]
  %v78 = vld [vmem:[%s0 + $0xfc] sm:$0xf]
  %v79 = vld [vmem:[%s1] sm:$0xf]
  %v80 = vld [vmem:[%s1 + $0x4] sm:$0xf]
  %v81 = vld [vmem:[%s1 + $0x8] sm:$0xf]
  %v82 = vld [vmem:[%s1 + $0xc] sm:$0xf]
  %v83 = vld [vmem:[%s1 + $0x10] sm:$0xf]
  %v84 = vld [vmem:[%s1 + $0x14] sm:$0xf]
  %v85 = vld [vmem:[%s1 + $0x18] sm:$0xf]
  %v86 = vld [vmem:[%s1 + $0x1c] sm:$0xf]
  %v87 = vld [vmem:[%s1 + $0x20] sm:$0xf]
  %v88 = vld [vmem:[%s1 + $0x24] sm:$0xf]
  %v89 = vld [vmem:[%s1 + $0x28] sm:$0xf]
  %v90 = vld [vmem:[%s1 + $0x2c] sm:$0xf]
  %v91 = vld [vmem:[%s1 + $0x30] sm:$0xf]
  %v92 = vld [vmem:[%s1 + $0x34] sm:$0xf]
  %v93 = vld [vmem:[%s1 + $0x38] sm:$0xf]
  %v94 = vld [vmem:[%s1 + $0x3c] sm:$0xf]
  %v159 = vunpack.c.l.b16 %v15
  %v160 = vunpack.c.l.b16 %v16
  %v161 = vunpack.c.l.b16 %v17
  %v162 = vunpack.c.l.b16 %v18
  %v163 = vunpack.c.l.b16 %v19
  %v164 = vunpack.c.l.b16 %v20
  %v165 = vunpack.c.l.b16 %v21
  %v166 = vunpack.c.l.b16 %v22
  %v167 = vunpack.c.l.b16 %v23
  %v168 = vunpack.c.l.b16 %v24
  %v169 = vunpack.c.l.b16 %v25
  %v170 = vunpack.c.l.b16 %v26
  %v171 = vunpack.c.l.b16 %v27
  %v172 = vunpack.c.l.b16 %v28
  %v173 = vunpack.c.l.b16 %v29
  %v174 = vunpack.c.l.b16 %v30
  %v175 = vunpack.c.l.b16 %v31
  %v176 = vunpack.c.l.b16 %v32
  %v177 = vunpack.c.l.b16 %v33
  %v178 = vunpack.c.l.b16 %v34
  %v179 = vunpack.c.l.b16 %v35
  %v180 = vunpack.c.l.b16 %v36
  %v181 = vunpack.c.l.b16 %v37
  %v182 = vunpack.c.l.b16 %v38
  %v183 = vunpack.c.l.b16 %v39
  %v184 = vunpack.c.l.b16 %v40
  %v185 = vunpack.c.l.b16 %v41
  %v186 = vunpack.c.l.b16 %v42
  %v187 = vunpack.c.l.b16 %v43
  %v188 = vunpack.c.l.b16 %v44
  %v189 = vunpack.c.l.b16 %v45
  %v190 = vunpack.c.l.b16 %v46
  %v191 = vunpack.c.l.b16 %v47
  %v192 = vunpack.c.l.b16 %v48
  %v193 = vunpack.c.l.b16 %v49
  %v194 = vunpack.c.l.b16 %v50
  %v195 = vunpack.c.l.b16 %v51
  %v196 = vunpack.c.l.b16 %v52
  %v197 = vunpack.c.l.b16 %v53
  %v198 = vunpack.c.l.b16 %v54
  %v199 = vunpack.c.l.b16 %v55
  %v200 = vunpack.c.l.b16 %v56
  %v201 = vunpack.c.l.b16 %v57
  %v202 = vunpack.c.l.b16 %v58
  %v203 = vunpack.c.l.b16 %v59
  %v204 = vunpack.c.l.b16 %v60
  %v205 = vunpack.c.l.b16 %v61
  %v206 = vunpack.c.l.b16 %v62
  %v207 = vunpack.c.l.b16 %v63
  %v208 = vunpack.c.l.b16 %v64
  %v209 = vunpack.c.l.b16 %v65
  %v210 = vunpack.c.l.b16 %v66
  %v211 = vunpack.c.l.b16 %v67
  %v212 = vunpack.c.l.b16 %v68
  %v213 = vunpack.c.l.b16 %v69
  %v214 = vunpack.c.l.b16 %v70
  %v215 = vunpack.c.l.b16 %v71
  %v216 = vunpack.c.l.b16 %v72
  %v217 = vunpack.c.l.b16 %v73
  %v218 = vunpack.c.l.b16 %v74
  %v219 = vunpack.c.l.b16 %v75
  %v220 = vunpack.c.l.b16 %v76
  %v221 = vunpack.c.l.b16 %v77
  %v222 = vunpack.c.l.b16 %v78
  %v223 = vpack.c.b16 %v160, %v159
  %v224 = vpack.c.b16 %v162, %v161
  %v225 = vpack.c.b16 %v164, %v163
  %v226 = vpack.c.b16 %v166, %v165
  %v227 = vpack.c.b16 %v168, %v167
  %v228 = vpack.c.b16 %v170, %v169
  %v229 = vpack.c.b16 %v172, %v171
  %v230 = vpack.c.b16 %v174, %v173
  %v231 = vpack.c.b16 %v176, %v175
  %v232 = vpack.c.b16 %v178, %v177
  %v233 = vpack.c.b16 %v180, %v179
  %v234 = vpack.c.b16 %v182, %v181
  %v235 = vpack.c.b16 %v184, %v183
  %v236 = vpack.c.b16 %v186, %v185
  %v237 = vpack.c.b16 %v188, %v187
  %v238 = vpack.c.b16 %v190, %v189
  %v239 = vpack.c.b16 %v192, %v191
  %v240 = vpack.c.b16 %v194, %v193
  %v241 = vpack.c.b16 %v196, %v195
  %v242 = vpack.c.b16 %v198, %v197
  %v243 = vpack.c.b16 %v200, %v199
  %v244 = vpack.c.b16 %v202, %v201
  %v245 = vpack.c.b16 %v204, %v203
  %v246 = vpack.c.b16 %v206, %v205
  %v247 = vpack.c.b16 %v208, %v207
  %v248 = vpack.c.b16 %v210, %v209
  %v249 = vpack.c.b16 %v212, %v211
  %v250 = vpack.c.b16 %v214, %v213
  %v251 = vpack.c.b16 %v216, %v215
  %v252 = vpack.c.b16 %v218, %v217
  %v253 = vpack.c.b16 %v220, %v219
  %v254 = vpack.c.b16 %v222, %v221
  %v303 = vunpack.c.l.b16 %v79
  %v304 = vunpack.c.l.b16 %v80
  %v305 = vunpack.c.l.b16 %v81
  %v306 = vunpack.c.l.b16 %v82
  %v307 = vunpack.c.l.b16 %v83
  %v308 = vunpack.c.l.b16 %v84
  %v309 = vunpack.c.l.b16 %v85
  %v310 = vunpack.c.l.b16 %v86
  %v311 = vunpack.c.l.b16 %v87
  %v312 = vunpack.c.l.b16 %v88
  %v313 = vunpack.c.l.b16 %v89
  %v314 = vunpack.c.l.b16 %v90
  %v315 = vunpack.c.l.b16 %v91
  %v316 = vunpack.c.l.b16 %v92
  %v317 = vunpack.c.l.b16 %v93
  %v318 = vunpack.c.l.b16 %v94
  %v319 = vpack.c.b16 %v304, %v303
  %v320 = vpack.c.b16 %v306, %v305
  %v321 = vpack.c.b16 %v308, %v307
  %v322 = vpack.c.b16 %v310, %v309
  %v323 = vpack.c.b16 %v312, %v311
  %v324 = vpack.c.b16 %v314, %v313
  %v325 = vpack.c.b16 %v316, %v315
  %v326 = vpack.c.b16 %v318, %v317
  %335 = vmatprep.subr.bf16.mxu0 0
  %336 = vmatpush1.bf16.msra.mxu0 %v319
  %337 = vmatprep.subr.bf16.mxu0 0
  %338 = vmatpush1.bf16.msra.mxu0 %v320
  %339 = vmatprep.subr.bf16.mxu0 0
  %340 = vmatpush1.bf16.msra.mxu0 %v321
  %341 = vmatprep.subr.bf16.mxu0 0
  %342 = vmatpush1.bf16.msra.mxu0 %v322
  %343 = vmatprep.subr.bf16.mxu0 0
  %344 = vmatpush1.bf16.msra.mxu0 %v323
  %345 = vmatprep.subr.bf16.mxu0 0
  %346 = vmatpush1.bf16.msra.mxu0 %v324
  %347 = vmatprep.subr.bf16.mxu0 0
  %348 = vmatpush1.bf16.msra.mxu0 %v325
  %349 = vmatprep.subr.bf16.mxu0 0
  %350 = vmatpush1.bf16.msra.mxu0 %v326
  %351 = vmatprep.subr.bf16.mxu0 0
  %352 = vmatpush1.bf16.msra.mxu0 0
  %353 = vmatprep.subr.bf16.mxu0 0
  %354 = vmatpush1.bf16.msra.mxu0 0
  %355 = vmatprep.subr.bf16.mxu0 0
  %356 = vmatpush1.bf16.msra.mxu0 0
  %357 = vmatprep.subr.bf16.mxu0 0
  %358 = vmatpush1.bf16.msra.mxu0 0
  %359 = vmatprep.subr.bf16.mxu0 0
  %360 = vmatpush1.bf16.msra.mxu0 0
  %361 = vmatprep.subr.bf16.mxu0 0
  %362 = vmatpush1.bf16.msra.mxu0 0
  %363 = vmatprep.subr.bf16.mxu0 0
  %364 = vmatpush1.bf16.msra.mxu0 0
  %365 = vmatprep.subr.bf16.mxu0 0
  %366 = vmatpush1.bf16.msra.mxu0 0
  %367 = vmatprep.mubr.bf16.mxu0 0
  %368 = vmatmul.mubr.bf16.gmra.mrb[0].mxu0 %v223
  %v369 = vpop.f32.mrb[0].mxu0
  %v370 = vadd.f32 0.0, %v369
  %v371 = vpop.f32.mrb[0].mxu0
  %v372 = vpop.f32.mrb[0].mxu0
  %v373 = vadd.f32 0.0, %v372
  %v374 = vpop.f32.mrb[0].mxu0
  %375 = vmatprep.mubr.bf16.mxu0 0
  %376 = vmatmul.mubr.bf16.gmra.mrb[0].mxu0 %v224
  %v377 = vpop.f32.mrb[0].mxu0
  %v378 = vadd.f32 0.0, %v377
  %v379 = vpop.f32.mrb[0].mxu0
  %v380 = vpop.f32.mrb[0].mxu0
  %v381 = vadd.f32 0.0, %v380
  %v382 = vpop.f32.mrb[0].mxu0
  %383 = vmatprep.mubr.bf16.mxu0 0
  %384 = vmatmul.mubr.bf16.gmra.mrb[0].mxu0 %v225
  %v385 = vpop.f32.mrb[0].mxu0
  %v386 = vadd.f32 0.0, %v385
  %v387 = vpop.f32.mrb[0].mxu0
  %v388 = vpop.f32.mrb[0].mxu0
  %v389 = vadd.f32 0.0, %v388
  %v390 = vpop.f32.mrb[0].mxu0
  %391 = vmatprep.mubr.bf16.mxu0 0
  %392 = vmatmul.mubr.bf16.gmra.mrb[0].mxu0 %v226
  %v393 = vpop.f32.mrb[0].mxu0
  %v394 = vadd.f32 0.0, %v393
  %v395 = vpop.f32.mrb[0].mxu0
  %v396 = vpop.f32.mrb[0].mxu0
  %v397 = vadd.f32 0.0, %v396
  %v398 = vpop.f32.mrb[0].mxu0
  %399 = vmatprep.mubr.bf16.mxu0 0
  %400 = vmatmul.mubr.bf16.gmra.mrb[0].mxu0 %v227
  %v401 = vpop.f32.mrb[0].mxu0
  %v402 = vadd.f32 0.0, %v401
  %v403 = vpop.f32.mrb[0].mxu0
  %v404 = vpop.f32.mrb[0].mxu0
  %v405 = vadd.f32 0.0, %v404
  %v406 = vpop.f32.mrb[0].mxu0
  %407 = vmatprep.mubr.bf16.mxu0 0
  %408 = vmatmul.mubr.bf16.gmra.mrb[0].mxu0 %v228
  %v409 = vpop.f32.mrb[0].mxu0
  %v410 = vadd.f32 0.0, %v409
  %v411 = vpop.f32.mrb[0].mxu0
  %v412 = vpop.f32.mrb[0].mxu0
  %v413 = vadd.f32 0.0, %v412
  %v414 = vpop.f32.mrb[0].mxu0
  %415 = vmatprep.mubr.bf16.mxu0 0
  %416 = vmatmul.mubr.bf16.gmra.mrb[0].mxu0 %v229
  %v417 = vpop.f32.mrb[0].mxu0
  %v418 = vadd.f32 0.0, %v417
  %v419 = vpop.f32.mrb[0].mxu0
  %v420 = vpop.f32.mrb[0].mxu0
  %v421 = vadd.f32 0.0, %v420
  %v422 = vpop.f32.mrb[0].mxu0
  %423 = vmatprep.mubr.bf16.mxu0 0
  %424 = vmatmul.mubr.bf16.gmra.mrb[0].mxu0 %v230
  %v425 = vpop.f32.mrb[0].mxu0
  %v426 = vadd.f32 0.0, %v425
  %v427 = vpop.f32.mrb[0].mxu0
  %v428 = vpop.f32.mrb[0].mxu0
  %v429 = vadd.f32 0.0, %v428
  %v430 = vpop.f32.mrb[0].mxu0
  %431 = vmatprep.mubr.bf16.mxu0 0
  %432 = vmatmul.mubr.bf16.gmra.mrb[0].mxu0 %v231
  %v433 = vpop.f32.mrb[0].mxu0
  %v434 = vadd.f32 0.0, %v433
  %v435 = vpop.f32.mrb[0].mxu0
  %v436 = vpop.f32.mrb[0].mxu0
  %v437 = vadd.f32 0.0, %v436
  %v438 = vpop.f32.mrb[0].mxu0
  %439 = vmatprep.mubr.bf16.mxu0 0
  %440 = vmatmul.mubr.bf16.gmra.mrb[0].mxu0 %v232
  %v441 = vpop.f32.mrb[0].mxu0
  %v442 = vadd.f32 0.0, %v441
  %v443 = vpop.f32.mrb[0].mxu0
  %v444 = vpop.f32.mrb[0].mxu0
  %v445 = vadd.f32 0.0, %v444
  %v446 = vpop.f32.mrb[0].mxu0
  %447 = vmatprep.mubr.bf16.mxu0 0
  %448 = vmatmul.mubr.bf16.gmra.mrb[0].mxu0 %v233
  %v449 = vpop.f32.mrb[0].mxu0
  %v450 = vadd.f32 0.0, %v449
  %v451 = vpop.f32.mrb[0].mxu0
  %v452 = vpop.f32.mrb[0].mxu0
  %v453 = vadd.f32 0.0, %v452
  %v454 = vpop.f32.mrb[0].mxu0
  %455 = vmatprep.mubr.bf16.mxu0 0
  %456 = vmatmul.mubr.bf16.gmra.mrb[0].mxu0 %v234
  %v457 = vpop.f32.mrb[0].mxu0
  %v458 = vadd.f32 0.0, %v457
  %v459 = vpop.f32.mrb[0].mxu0
  %v460 = vpop.f32.mrb[0].mxu0
  %v461 = vadd.f32 0.0, %v460
  %v462 = vpop.f32.mrb[0].mxu0
  %463 = vmatprep.mubr.bf16.mxu0 0
  %464 = vmatmul.mubr.bf16.gmra.mrb[0].mxu0 %v235
  %v465 = vpop.f32.mrb[0].mxu0
  %v466 = vadd.f32 0.0, %v465
  %v467 = vpop.f32.mrb[0].mxu0
  %v468 = vpop.f32.mrb[0].mxu0
  %v469 = vadd.f32 0.0, %v468
  %v470 = vpop.f32.mrb[0].mxu0
  %471 = vmatprep.mubr.bf16.mxu0 0
  %472 = vmatmul.mubr.bf16.gmra.mrb[0].mxu0 %v236
  %v473 = vpop.f32.mrb[0].mxu0
  %v474 = vadd.f32 0.0, %v473
  %v475 = vpop.f32.mrb[0].mxu0
  %v476 = vpop.f32.mrb[0].mxu0
  %v477 = vadd.f32 0.0, %v476
  %v478 = vpop.f32.mrb[0].mxu0
  %479 = vmatprep.mubr.bf16.mxu0 0
  %480 = vmatmul.mubr.bf16.gmra.mrb[0].mxu0 %v237
  %v481 = vpop.f32.mrb[0].mxu0
  %v482 = vadd.f32 0.0, %v481
  %v483 = vpop.f32.mrb[0].mxu0
  %v484 = vpop.f32.mrb[0].mxu0
  %v485 = vadd.f32 0.0, %v484
  %v486 = vpop.f32.mrb[0].mxu0
  %487 = vmatprep.mubr.bf16.mxu0 0
  %488 = vmatmul.mubr.bf16.gmra.mrb[0].mxu0 %v238
  %v489 = vpop.f32.mrb[0].mxu0
  %v490 = vadd.f32 0.0, %v489
  %v491 = vpop.f32.mrb[0].mxu0
  %v492 = vpop.f32.mrb[0].mxu0
  %v493 = vadd.f32 0.0, %v492
  %v494 = vpop.f32.mrb[0].mxu0
  %495 = vmatprep.mubr.bf16.mxu0 0
  %496 = vmatmul.mubr.bf16.gmra.mrb[0].mxu0 %v239
  %v497 = vpop.f32.mrb[0].mxu0
  %v498 = vadd.f32 0.0, %v497
  %v499 = vpop.f32.mrb[0].mxu0
  %v500 = vpop.f32.mrb[0].mxu0
  %v501 = vadd.f32 0.0, %v500
  %v502 = vpop.f32.mrb[0].mxu0
  %503 = vmatprep.mubr.bf16.mxu0 0
  %504 = vmatmul.mubr.bf16.gmra.mrb[0].mxu0 %v240
  %v505 = vpop.f32.mrb[0].mxu0
  %v506 = vadd.f32 0.0, %v505
  %v507 = vpop.f32.mrb[0].mxu0
  %v508 = vpop.f32.mrb[0].mxu0
  %v509 = vadd.f32 0.0, %v508
  %v510 = vpop.f32.mrb[0].mxu0
  %511 = vmatprep.mubr.bf16.mxu0 0
  %512 = vmatmul.mubr.bf16.gmra.mrb[0].mxu0 %v241
  %v513 = vpop.f32.mrb[0].mxu0
  %v514 = vadd.f32 0.0, %v513
  %v515 = vpop.f32.mrb[0].mxu0
  %v516 = vpop.f32.mrb[0].mxu0
  %v517 = vadd.f32 0.0, %v516
  %v518 = vpop.f32.mrb[0].mxu0
  %519 = vmatprep.mubr.bf16.mxu0 0
  %520 = vmatmul.mubr.bf16.gmra.mrb[0].mxu0 %v242
  %v521 = vpop.f32.mrb[0].mxu0
  %v522 = vadd.f32 0.0, %v521
  %v523 = vpop.f32.mrb[0].mxu0
  %v524 = vpop.f32.mrb[0].mxu0
  %v525 = vadd.f32 0.0, %v524
  %v526 = vpop.f32.mrb[0].mxu0
  %527 = vmatprep.mubr.bf16.mxu0 0
  %528 = vmatmul.mubr.bf16.gmra.mrb[0].mxu0 %v243
  %v529 = vpop.f32.mrb[0].mxu0
  %v530 = vadd.f32 0.0, %v529
  %v531 = vpop.f32.mrb[0].mxu0
  %v532 = vpop.f32.mrb[0].mxu0
  %v533 = vadd.f32 0.0, %v532
  %v534 = vpop.f32.mrb[0].mxu0
  %535 = vmatprep.mubr.bf16.mxu0 0
  %536 = vmatmul.mubr.bf16.gmra.mrb[0].mxu0 %v244
  %v537 = vpop.f32.mrb[0].mxu0
  %v538 = vadd.f32 0.0, %v537
  %v539 = vpop.f32.mrb[0].mxu0
  %v540 = vpop.f32.mrb[0].mxu0
  %v541 = vadd.f32 0.0, %v540
  %v542 = vpop.f32.mrb[0].mxu0
  %543 = vmatprep.mubr.bf16.mxu0 0
  %544 = vmatmul.mubr.bf16.gmra.mrb[0].mxu0 %v245
  %v545 = vpop.f32.mrb[0].mxu0
  %v546 = vadd.f32 0.0, %v545
  %v547 = vpop.f32.mrb[0].mxu0
  %v548 = vpop.f32.mrb[0].mxu0
  %v549 = vadd.f32 0.0, %v548
  %v550 = vpop.f32.mrb[0].mxu0
  %551 = vmatprep.mubr.bf16.mxu0 0
  %552 = vmatmul.mubr.bf16.gmra.mrb[0].mxu0 %v246
  %v553 = vpop.f32.mrb[0].mxu0
  %v554 = vadd.f32 0.0, %v553
  %v555 = vpop.f32.mrb[0].mxu0
  %v556 = vpop.f32.mrb[0].mxu0
  %v557 = vadd.f32 0.0, %v556
  %v558 = vpop.f32.mrb[0].mxu0
  %559 = vmatprep.mubr.bf16.mxu0 0
  %560 = vmatmul.mubr.bf16.gmra.mrb[0].mxu0 %v247
  %v561 = vpop.f32.mrb[0].mxu0
  %v562 = vadd.f32 0.0, %v561
  %v563 = vpop.f32.mrb[0].mxu0
  %v564 = vpop.f32.mrb[0].mxu0
  %v565 = vadd.f32 0.0, %v564
  %v566 = vpop.f32.mrb[0].mxu0
  %567 = vmatprep.mubr.bf16.mxu0 0
  %568 = vmatmul.mubr.bf16.gmra.mrb[0].mxu0 %v248
  %v569 = vpop.f32.mrb[0].mxu0
  %v570 = vadd.f32 0.0, %v569
  %v571 = vpop.f32.mrb[0].mxu0
  %v572 = vpop.f32.mrb[0].mxu0
  %v573 = vadd.f32 0.0, %v572
  %v574 = vpop.f32.mrb[0].mxu0
  %575 = vmatprep.mubr.bf16.mxu0 0
  %576 = vmatmul.mubr.bf16.gmra.mrb[0].mxu0 %v249
  %v577 = vpop.f32.mrb[0].mxu0
  %v578 = vadd.f32 0.0, %v577
  %v579 = vpop.f32.mrb[0].mxu0
  %v580 = vpop.f32.mrb[0].mxu0
  %v581 = vadd.f32 0.0, %v580
  %v582 = vpop.f32.mrb[0].mxu0
  %583 = vmatprep.mubr.bf16.mxu0 0
  %584 = vmatmul.mubr.bf16.gmra.mrb[0].mxu0 %v250
  %v585 = vpop.f32.mrb[0].mxu0
  %v586 = vadd.f32 0.0, %v585
  %v587 = vpop.f32.mrb[0].mxu0
  %v588 = vpop.f32.mrb[0].mxu0
  %v589 = vadd.f32 0.0, %v588
  %v590 = vpop.f32.mrb[0].mxu0
  %591 = vmatprep.mubr.bf16.mxu0 0
  %592 = vmatmul.mubr.bf16.gmra.mrb[0].mxu0 %v251
  %v593 = vpop.f32.mrb[0].mxu0
  %v594 = vadd.f32 0.0, %v593
  %v595 = vpop.f32.mrb[0].mxu0
  %v596 = vpop.f32.mrb[0].mxu0
  %v597 = vadd.f32 0.0, %v596
  %v598 = vpop.f32.mrb[0].mxu0
  %599 = vmatprep.mubr.bf16.mxu0 0
  %600 = vmatmul.mubr.bf16.gmra.mrb[0].mxu0 %v252
  %v601 = vpop.f32.mrb[0].mxu0
  %v602 = vadd.f32 0.0, %v601
  %v603 = vpop.f32.mrb[0].mxu0
  %v604 = vpop.f32.mrb[0].mxu0
  %v605 = vadd.f32 0.0, %v604
  %v606 = vpop.f32.mrb[0].mxu0
  %607 = vmatprep.mubr.bf16.mxu0 0
  %608 = vmatmul.mubr.bf16.gmra.mrb[0].mxu0 %v253
  %v609 = vpop.f32.mrb[0].mxu0
  %v610 = vadd.f32 0.0, %v609
  %v611 = vpop.f32.mrb[0].mxu0
  %v612 = vpop.f32.mrb[0].mxu0
  %v613 = vadd.f32 0.0, %v612
  %v614 = vpop.f32.mrb[0].mxu0
  %615 = vmatprep.mubr.bf16.mxu0 0
  %616 = vmatmul.mubr.bf16.gmra.mrb[0].mxu0 %v254
  %v617 = vpop.f32.mrb[0].mxu0
  %v618 = vadd.f32 0.0, %v617
  %v619 = vpop.f32.mrb[0].mxu0
  %v620 = vpop.f32.mrb[0].mxu0
  %v621 = vadd.f32 0.0, %v620
  %v622 = vpop.f32.mrb[0].mxu0
  %623 = vdwg.mxu0
  %vm624 = vcmask 130048
  %625 = vst.msk [vmem:[%s2] sm:$0xff] %vm624, %v370
  %626 = vst.msk [vmem:[%s2 + $0x8] sm:$0xff] %vm624, %v373
  %627 = vst.msk [vmem:[%s2 + $0x10] sm:$0xff] %vm624, %v378
  %628 = vst.msk [vmem:[%s2 + $0x18] sm:$0xff] %vm624, %v381
  %629 = vst.msk [vmem:[%s2 + $0x20] sm:$0xff] %vm624, %v386
  %630 = vst.msk [vmem:[%s2 + $0x28] sm:$0xff] %vm624, %v389
  %631 = vst.msk [vmem:[%s2 + $0x30] sm:$0xff] %vm624, %v394
  %632 = vst.msk [vmem:[%s2 + $0x38] sm:$0xff] %vm624, %v397
  %633 = vst.msk [vmem:[%s2 + $0x40] sm:$0xff] %vm624, %v402
  %634 = vst.msk [vmem:[%s2 + $0x48] sm:$0xff] %vm624, %v405
  %635 = vst.msk [vmem:[%s2 + $0x50] sm:$0xff] %vm624, %v410
  %636 = vst.msk [vmem:[%s2 + $0x58] sm:$0xff] %vm624, %v413
  %637 = vst.msk [vmem:[%s2 + $0x60] sm:$0xff] %vm624, %v418
  %638 = vst.msk [vmem:[%s2 + $0x68] sm:$0xff] %vm624, %v421
  %639 = vst.msk [vmem:[%s2 + $0x70] sm:$0xff] %vm624, %v426
  %640 = vst.msk [vmem:[%s2 + $0x78] sm:$0xff] %vm624, %v429
  %641 = vst.msk [vmem:[%s2 + $0x80] sm:$0xff] %vm624, %v434
  %642 = vst.msk [vmem:[%s2 + $0x88] sm:$0xff] %vm624, %v437
  %643 = vst.msk [vmem:[%s2 + $0x90] sm:$0xff] %vm624, %v442
  %644 = vst.msk [vmem:[%s2 + $0x98] sm:$0xff] %vm624, %v445
  %645 = vst.msk [vmem:[%s2 + $0xa0] sm:$0xff] %vm624, %v450
  %646 = vst.msk [vmem:[%s2 + $0xa8] sm:$0xff] %vm624, %v453
  %647 = vst.msk [vmem:[%s2 + $0xb0] sm:$0xff] %vm624, %v458
  %648 = vst.msk [vmem:[%s2 + $0xb8] sm:$0xff] %vm624, %v461
  %649 = vst.msk [vmem:[%s2 + $0xc0] sm:$0xff] %vm624, %v466
  %650 = vst.msk [vmem:[%s2 + $0xc8] sm:$0xff] %vm624, %v469
  %651 = vst.msk [vmem:[%s2 + $0xd0] sm:$0xff] %vm624, %v474
  %652 = vst.msk [vmem:[%s2 + $0xd8] sm:$0xff] %vm624, %v477
  %653 = vst.msk [vmem:[%s2 + $0xe0] sm:$0xff] %vm624, %v482
  %654 = vst.msk [vmem:[%s2 + $0xe8] sm:$0xff] %vm624, %v485
  %655 = vst.msk [vmem:[%s2 + $0xf0] sm:$0xff] %vm624, %v490
  %656 = vst.msk [vmem:[%s2 + $0xf8] sm:$0xff] %vm624, %v493
  %657 = vst.msk [vmem:[%s2 + $0x100] sm:$0xff] %vm624, %v498
  %658 = vst.msk [vmem:[%s2 + $0x108] sm:$0xff] %vm624, %v501
  %659 = vst.msk [vmem:[%s2 + $0x110] sm:$0xff] %vm624, %v506
  %660 = vst.msk [vmem:[%s2 + $0x118] sm:$0xff] %vm624, %v509
  %661 = vst.msk [vmem:[%s2 + $0x120] sm:$0xff] %vm624, %v514
  %662 = vst.msk [vmem:[%s2 + $0x128] sm:$0xff] %vm624, %v517
  %663 = vst.msk [vmem:[%s2 + $0x130] sm:$0xff] %vm624, %v522
  %664 = vst.msk [vmem:[%s2 + $0x138] sm:$0xff] %vm624, %v525
  %665 = vst.msk [vmem:[%s2 + $0x140] sm:$0xff] %vm624, %v530
  %666 = vst.msk [vmem:[%s2 + $0x148] sm:$0xff] %vm624, %v533
  %667 = vst.msk [vmem:[%s2 + $0x150] sm:$0xff] %vm624, %v538
  %668 = vst.msk [vmem:[%s2 + $0x158] sm:$0xff] %vm624, %v541
  %669 = vst.msk [vmem:[%s2 + $0x160] sm:$0xff] %vm624, %v546
  %670 = vst.msk [vmem:[%s2 + $0x168] sm:$0xff] %vm624, %v549
  %671 = vst.msk [vmem:[%s2 + $0x170] sm:$0xff] %vm624, %v554
  %672 = vst.msk [vmem:[%s2 + $0x178] sm:$0xff] %vm624, %v557
  %673 = vst.msk [vmem:[%s2 + $0x180] sm:$0xff] %vm624, %v562
  %674 = vst.msk [vmem:[%s2 + $0x188] sm:$0xff] %vm624, %v565
  %675 = vst.msk [vmem:[%s2 + $0x190] sm:$0xff] %vm624, %v570
  %676 = vst.msk [vmem:[%s2 + $0x198] sm:$0xff] %vm624, %v573
  %677 = vst.msk [vmem:[%s2 + $0x1a0] sm:$0xff] %vm624, %v578
  %678 = vst.msk [vmem:[%s2 + $0x1a8] sm:$0xff] %vm624, %v581
  %679 = vst.msk [vmem:[%s2 + $0x1b0] sm:$0xff] %vm624, %v586
  %680 = vst.msk [vmem:[%s2 + $0x1b8] sm:$0xff] %vm624, %v589
  %681 = vst.msk [vmem:[%s2 + $0x1c0] sm:$0xff] %vm624, %v594
  %682 = vst.msk [vmem:[%s2 + $0x1c8] sm:$0xff] %vm624, %v597
  %683 = vst.msk [vmem:[%s2 + $0x1d0] sm:$0xff] %vm624, %v602
  %684 = vst.msk [vmem:[%s2 + $0x1d8] sm:$0xff] %vm624, %v605
  %685 = vst.msk [vmem:[%s2 + $0x1e0] sm:$0xff] %vm624, %v610
  %686 = vst.msk [vmem:[%s2 + $0x1e8] sm:$0xff] %vm624, %v613
  %687 = vst.msk [vmem:[%s2 + $0x1f0] sm:$0xff] %vm624, %v618
  %688 = vst.msk [vmem:[%s2 + $0x1f8] sm:$0xff] %vm624, %v621
  %v689 = vlaneseq
  %v690 = vshrl.u32 %v689, 7
  %v691 = vadd.s32 %v690, 8
  %v692 = vadd.s32 %v690, 16
  %v693 = vadd.s32 %v690, 24
  %v694 = vadd.s32 %v690, 32
  %v695 = vadd.s32 %v690, 40
  %v696 = vadd.s32 %v690, 48
  %v697 = vadd.s32 %v690, 56
  %v698 = vadd.s32 %v690, 64
  %v699 = vadd.s32 %v690, 72
  %v700 = vadd.s32 %v690, 80
  %v701 = vadd.s32 %v690, 88
  %v702 = vadd.s32 %v690, 96
  %v703 = vadd.s32 %v690, 104
  %v704 = vadd.s32 %v690, 112
  %v705 = vadd.s32 %v690, 120
  %v706 = vadd.s32 %v690, 128
  %v707 = vadd.s32 %v690, 136
  %v708 = vadd.s32 %v690, 144
  %v709 = vadd.s32 %v690, 152
  %v710 = vadd.s32 %v690, 160
  %v711 = vadd.s32 %v690, 168
  %v712 = vadd.s32 %v690, 176
  %v713 = vadd.s32 %v690, 184
  %v714 = vadd.s32 %v690, 192
  %v715 = vadd.s32 %v690, 200
  %v716 = vadd.s32 %v690, 208
  %v717 = vadd.s32 %v690, 216
  %v718 = vadd.s32 %v690, 224
  %v719 = vadd.s32 %v690, 232
  %v720 = vadd.s32 %v690, 240
  %v721 = vadd.s32 %v690, 248
  %v722 = vadd.s32 %v690, 256
  %v723 = vadd.s32 %v690, 264
  %v724 = vadd.s32 %v690, 272
  %v725 = vadd.s32 %v690, 280
  %v726 = vadd.s32 %v690, 288
  %v727 = vadd.s32 %v690, 296
  %v728 = vadd.s32 %v690, 304
  %v729 = vadd.s32 %v690, 312
  %v730 = vadd.s32 %v690, 320
  %v731 = vadd.s32 %v690, 328
  %v732 = vadd.s32 %v690, 336
  %v733 = vadd.s32 %v690, 344
  %v734 = vadd.s32 %v690, 352
  %v735 = vadd.s32 %v690, 360
  %v736 = vadd.s32 %v690, 368
  %v737 = vadd.s32 %v690, 376
  %v738 = vadd.s32 %v690, 384
  %v739 = vadd.s32 %v690, 392
  %v740 = vadd.s32 %v690, 400
  %v741 = vadd.s32 %v690, 408
  %v742 = vadd.s32 %v690, 416
  %v743 = vadd.s32 %v690, 424
  %v744 = vadd.s32 %v690, 432
  %v745 = vadd.s32 %v690, 440
  %v746 = vadd.s32 %v690, 448
  %v747 = vadd.s32 %v690, 456
  %v748 = vadd.s32 %v690, 464
  %v749 = vadd.s32 %v690, 472
  %v750 = vadd.s32 %v690, 480
  %v751 = vadd.s32 %v690, 488
  %v752 = vadd.s32 %v690, 496
  %v753 = vadd.s32 %v690, 504
  %s754 = smul.u32 0, 512
  %v755 = vstv %s754
  %v756 = vadd.s32 %v690, %v755
  %v757 = vadd.s32 %v691, %v755
  %v758 = vadd.s32 %v692, %v755
  %v759 = vadd.s32 %v693, %v755
  %v760 = vadd.s32 %v694, %v755
  %v761 = vadd.s32 %v695, %v755
  %v762 = vadd.s32 %v696, %v755
  %v763 = vadd.s32 %v697, %v755
  %v764 = vadd.s32 %v698, %v755
  %v765 = vadd.s32 %v699, %v755
  %v766 = vadd.s32 %v700, %v755
  %v767 = vadd.s32 %v701, %v755
  %v768 = vadd.s32 %v702, %v755
  %v769 = vadd.s32 %v703, %v755
  %v770 = vadd.s32 %v704, %v755
  %v771 = vadd.s32 %v705, %v755
  %v772 = vadd.s32 %v706, %v755
  %v773 = vadd.s32 %v707, %v755
  %v774 = vadd.s32 %v708, %v755
  %v775 = vadd.s32 %v709, %v755
  %v776 = vadd.s32 %v710, %v755
  %v777 = vadd.s32 %v711, %v755
  %v778 = vadd.s32 %v712, %v755
  %v779 = vadd.s32 %v713, %v755
  %v780 = vadd.s32 %v714, %v755
  %v781 = vadd.s32 %v715, %v755
  %v782 = vadd.s32 %v716, %v755
  %v783 = vadd.s32 %v717, %v755
  %v784 = vadd.s32 %v718, %v755
  %v785 = vadd.s32 %v719, %v755
  %v786 = vadd.s32 %v720, %v755
  %v787 = vadd.s32 %v721, %v755
  %v788 = vadd.s32 %v722, %v755
  %v789 = vadd.s32 %v723, %v755
  %v790 = vadd.s32 %v724, %v755
  %v791 = vadd.s32 %v725, %v755
  %v792 = vadd.s32 %v726, %v755
  %v793 = vadd.s32 %v727, %v755
  %v794 = vadd.s32 %v728, %v755
  %v795 = vadd.s32 %v729, %v755
  %v796 = vadd.s32 %v730, %v755
  %v797 = vadd.s32 %v731, %v755
  %v798 = vadd.s32 %v732, %v755
  %v799 = vadd.s32 %v733, %v755
  %v800 = vadd.s32 %v734, %v755
  %v801 = vadd.s32 %v735, %v755
  %v802 = vadd.s32 %v736, %v755
  %v803 = vadd.s32 %v737, %v755
  %v804 = vadd.s32 %v738, %v755
  %v805 = vadd.s32 %v739, %v755
  %v806 = vadd.s32 %v740, %v755
  %v807 = vadd.s32 %v741, %v755
  %v808 = vadd.s32 %v742, %v755
  %v809 = vadd.s32 %v743, %v755
  %v810 = vadd.s32 %v744, %v755
  %v811 = vadd.s32 %v745, %v755
  %v812 = vadd.s32 %v746, %v755
  %v813 = vadd.s32 %v747, %v755
  %v814 = vadd.s32 %v748, %v755
  %v815 = vadd.s32 %v749, %v755
  %v816 = vadd.s32 %v750, %v755
  %v817 = vadd.s32 %v751, %v755
  %v818 = vadd.s32 %v752, %v755
  %v819 = vadd.s32 %v753, %v755
  %vm820 = vcmp.lt.s32.totalorder %v756, 512
  %vm821 = vcmp.lt.s32.totalorder %v757, 512
  %vm822 = vcmp.lt.s32.totalorder %v758, 512
  %vm823 = vcmp.lt.s32.totalorder %v759, 512
  %vm824 = vcmp.lt.s32.totalorder %v760, 512
  %vm825 = vcmp.lt.s32.totalorder %v761, 512
  %vm826 = vcmp.lt.s32.totalorder %v762, 512
  %vm827 = vcmp.lt.s32.totalorder %v763, 512
  %vm828 = vcmp.lt.s32.totalorder %v764, 512
  %vm829 = vcmp.lt.s32.totalorder %v765, 512
  %vm830 = vcmp.lt.s32.totalorder %v766, 512
  %vm831 = vcmp.lt.s32.totalorder %v767, 512
  %vm832 = vcmp.lt.s32.totalorder %v768, 512
  %vm833 = vcmp.lt.s32.totalorder %v769, 512
  %vm834 = vcmp.lt.s32.totalorder %v770, 512
  %vm835 = vcmp.lt.s32.totalorder %v771, 512
  %vm836 = vcmp.lt.s32.totalorder %v772, 512
  %vm837 = vcmp.lt.s32.totalorder %v773, 512
  %vm838 = vcmp.lt.s32.totalorder %v774, 512
  %vm839 = vcmp.lt.s32.totalorder %v775, 512
  %vm840 = vcmp.lt.s32.totalorder %v776, 512
  %vm841 = vcmp.lt.s32.totalorder %v777, 512
  %vm842 = vcmp.lt.s32.totalorder %v778, 512
  %vm843 = vcmp.lt.s32.totalorder %v779, 512
  %vm844 = vcmp.lt.s32.totalorder %v780, 512
  %vm845 = vcmp.lt.s32.totalorder %v781, 512
  %vm846 = vcmp.lt.s32.totalorder %v782, 512
  %vm847 = vcmp.lt.s32.totalorder %v783, 512
  %vm848 = vcmp.lt.s32.totalorder %v784, 512
  %vm849 = vcmp.lt.s32.totalorder %v785, 512
  %vm850 = vcmp.lt.s32.totalorder %v786, 512
  %vm851 = vcmp.lt.s32.totalorder %v787, 512
  %vm852 = vcmp.lt.s32.totalorder %v788, 512
  %vm853 = vcmp.lt.s32.totalorder %v789, 512
  %vm854 = vcmp.lt.s32.totalorder %v790, 512
  %vm855 = vcmp.lt.s32.totalorder %v791, 512
  %vm856 = vcmp.lt.s32.totalorder %v792, 512
  %vm857 = vcmp.lt.s32.totalorder %v793, 512
  %vm858 = vcmp.lt.s32.totalorder %v794, 512
  %vm859 = vcmp.lt.s32.totalorder %v795, 512
  %vm860 = vcmp.lt.s32.totalorder %v796, 512
  %vm861 = vcmp.lt.s32.totalorder %v797, 512
  %vm862 = vcmp.lt.s32.totalorder %v798, 512
  %vm863 = vcmp.lt.s32.totalorder %v799, 512
  %vm864 = vcmp.lt.s32.totalorder %v800, 512
  %vm865 = vcmp.lt.s32.totalorder %v801, 512
  %vm866 = vcmp.lt.s32.totalorder %v802, 512
  %vm867 = vcmp.lt.s32.totalorder %v803, 512
  %vm868 = vcmp.lt.s32.totalorder %v804, 512
  %vm869 = vcmp.lt.s32.totalorder %v805, 512
  %vm870 = vcmp.lt.s32.totalorder %v806, 512
  %vm871 = vcmp.lt.s32.totalorder %v807, 512
  %vm872 = vcmp.lt.s32.totalorder %v808, 512
  %vm873 = vcmp.lt.s32.totalorder %v809, 512
  %vm874 = vcmp.lt.s32.totalorder %v810, 512
  %vm875 = vcmp.lt.s32.totalorder %v811, 512
  %vm876 = vcmp.lt.s32.totalorder %v812, 512
  %vm877 = vcmp.lt.s32.totalorder %v813, 512
  %vm878 = vcmp.lt.s32.totalorder %v814, 512
  %vm879 = vcmp.lt.s32.totalorder %v815, 512
  %vm880 = vcmp.lt.s32.totalorder %v816, 512
  %vm881 = vcmp.lt.s32.totalorder %v817, 512
  %vm882 = vcmp.lt.s32.totalorder %v818, 512
  %vm883 = vcmp.lt.s32.totalorder %v819, 512
  %v884 = vsel %vm820, %v370, 0.0
  %v885 = vsel %vm821, %v373, 0.0
  %v886 = vsel %vm822, %v378, 0.0
  %v887 = vsel %vm823, %v381, 0.0
  %v888 = vsel %vm824, %v386, 0.0
  %v889 = vsel %vm825, %v389, 0.0
  %v890 = vsel %vm826, %v394, 0.0
  %v891 = vsel %vm827, %v397, 0.0
  %v892 = vsel %vm828, %v402, 0.0
  %v893 = vsel %vm829, %v405, 0.0
  %v894 = vsel %vm830, %v410, 0.0
  %v895 = vsel %vm831, %v413, 0.0
  %v896 = vsel %vm832, %v418, 0.0
  %v897 = vsel %vm833, %v421, 0.0
  %v898 = vsel %vm834, %v426, 0.0
  %v899 = vsel %vm835, %v429, 0.0
  %v900 = vsel %vm836, %v434, 0.0
  %v901 = vsel %vm837, %v437, 0.0
  %v902 = vsel %vm838, %v442, 0.0
  %v903 = vsel %vm839, %v445, 0.0
  %v904 = vsel %vm840, %v450, 0.0
  %v905 = vsel %vm841, %v453, 0.0
  %v906 = vsel %vm842, %v458, 0.0
  %v907 = vsel %vm843, %v461, 0.0
  %v908 = vsel %vm844, %v466, 0.0
  %v909 = vsel %vm845, %v469, 0.0
  %v910 = vsel %vm846, %v474, 0.0
  %v911 = vsel %vm847, %v477, 0.0
  %v912 = vsel %vm848, %v482, 0.0
  %v913 = vsel %vm849, %v485, 0.0
  %v914 = vsel %vm850, %v490, 0.0
  %v915 = vsel %vm851, %v493, 0.0
  %v916 = vsel %vm852, %v498, 0.0
  %v917 = vsel %vm853, %v501, 0.0
  %v918 = vsel %vm854, %v506, 0.0
  %v919 = vsel %vm855, %v509, 0.0
  %v920 = vsel %vm856, %v514, 0.0
  %v921 = vsel %vm857, %v517, 0.0
  %v922 = vsel %vm858, %v522, 0.0
  %v923 = vsel %vm859, %v525, 0.0
  %v924 = vsel %vm860, %v530, 0.0
  %v925 = vsel %vm861, %v533, 0.0
  %v926 = vsel %vm862, %v538, 0.0
  %v927 = vsel %vm863, %v541, 0.0
  %v928 = vsel %vm864, %v546, 0.0
  %v929 = vsel %vm865, %v549, 0.0
  %v930 = vsel %vm866, %v554, 0.0
  %v931 = vsel %vm867, %v557, 0.0
  %v932 = vsel %vm868, %v562, 0.0
  %v933 = vsel %vm869, %v565, 0.0
  %v934 = vsel %vm870, %v570, 0.0
  %v935 = vsel %vm871, %v573, 0.0
  %v936 = vsel %vm872, %v578, 0.0
  %v937 = vsel %vm873, %v581, 0.0
  %v938 = vsel %vm874, %v586, 0.0
  %v939 = vsel %vm875, %v589, 0.0
  %v940 = vsel %vm876, %v594, 0.0
  %v941 = vsel %vm877, %v597, 0.0
  %v942 = vsel %vm878, %v602, 0.0
  %v943 = vsel %vm879, %v605, 0.0
  %v944 = vsel %vm880, %v610, 0.0
  %v945 = vsel %vm881, %v613, 0.0
  %v946 = vsel %vm882, %v618, 0.0
  %v947 = vsel %vm883, %v621, 0.0
  %v948 = vsel %vm624, %v884, 0.0
  %v949 = vsel %vm624, %v885, 0.0
  %v950 = vadd.f32 %v948, %v949
  %v951 = vsel %vm624, %v886, 0.0
  %v952 = vadd.f32 %v950, %v951
  %v953 = vsel %vm624, %v887, 0.0
  %v954 = vadd.f32 %v952, %v953
  %v955 = vsel %vm624, %v888, 0.0
  %v956 = vadd.f32 %v954, %v955
  %v957 = vsel %vm624, %v889, 0.0
  %v958 = vadd.f32 %v956, %v957
  %v959 = vsel %vm624, %v890, 0.0
  %v960 = vadd.f32 %v958, %v959
  %v961 = vsel %vm624, %v891, 0.0
  %v962 = vadd.f32 %v960, %v961
  %v963 = vsel %vm624, %v892, 0.0
  %v964 = vadd.f32 %v962, %v963
  %v965 = vsel %vm624, %v893, 0.0
  %v966 = vadd.f32 %v964, %v965
  %v967 = vsel %vm624, %v894, 0.0
  %v968 = vadd.f32 %v966, %v967
  %v969 = vsel %vm624, %v895, 0.0
  %v970 = vadd.f32 %v968, %v969
  %v971 = vsel %vm624, %v896, 0.0
  %v972 = vadd.f32 %v970, %v971
  %v973 = vsel %vm624, %v897, 0.0
  %v974 = vadd.f32 %v972, %v973
  %v975 = vsel %vm624, %v898, 0.0
  %v976 = vadd.f32 %v974, %v975
  %v977 = vsel %vm624, %v899, 0.0
  %v978 = vadd.f32 %v976, %v977
  %v979 = vsel %vm624, %v900, 0.0
  %v980 = vadd.f32 %v978, %v979
  %v981 = vsel %vm624, %v901, 0.0
  %v982 = vadd.f32 %v980, %v981
  %v983 = vsel %vm624, %v902, 0.0
  %v984 = vadd.f32 %v982, %v983
  %v985 = vsel %vm624, %v903, 0.0
  %v986 = vadd.f32 %v984, %v985
  %v987 = vsel %vm624, %v904, 0.0
  %v988 = vadd.f32 %v986, %v987
  %v989 = vsel %vm624, %v905, 0.0
  %v990 = vadd.f32 %v988, %v989
  %v991 = vsel %vm624, %v906, 0.0
  %v992 = vadd.f32 %v990, %v991
  %v993 = vsel %vm624, %v907, 0.0
  %v994 = vadd.f32 %v992, %v993
  %v995 = vsel %vm624, %v908, 0.0
  %v996 = vadd.f32 %v994, %v995
  %v997 = vsel %vm624, %v909, 0.0
  %v998 = vadd.f32 %v996, %v997
  %v999 = vsel %vm624, %v910, 0.0
  %v1000 = vadd.f32 %v998, %v999
  %v1001 = vsel %vm624, %v911, 0.0
  %v1002 = vadd.f32 %v1000, %v1001
  %v1003 = vsel %vm624, %v912, 0.0
  %v1004 = vadd.f32 %v1002, %v1003
  %v1005 = vsel %vm624, %v913, 0.0
  %v1006 = vadd.f32 %v1004, %v1005
  %v1007 = vsel %vm624, %v914, 0.0
  %v1008 = vadd.f32 %v1006, %v1007
  %v1009 = vsel %vm624, %v915, 0.0
  %v1010 = vadd.f32 %v1008, %v1009
  %v1011 = vsel %vm624, %v916, 0.0
  %v1012 = vadd.f32 %v1010, %v1011
  %v1013 = vsel %vm624, %v917, 0.0
  %v1014 = vadd.f32 %v1012, %v1013
  %v1015 = vsel %vm624, %v918, 0.0
  %v1016 = vadd.f32 %v1014, %v1015
  %v1017 = vsel %vm624, %v919, 0.0
  %v1018 = vadd.f32 %v1016, %v1017
  %v1019 = vsel %vm624, %v920, 0.0
  %v1020 = vadd.f32 %v1018, %v1019
  %v1021 = vsel %vm624, %v921, 0.0
  %v1022 = vadd.f32 %v1020, %v1021
  %v1023 = vsel %vm624, %v922, 0.0
  %v1024 = vadd.f32 %v1022, %v1023
  %v1025 = vsel %vm624, %v923, 0.0
  %v1026 = vadd.f32 %v1024, %v1025
  %v1027 = vsel %vm624, %v924, 0.0
  %v1028 = vadd.f32 %v1026, %v1027
  %v1029 = vsel %vm624, %v925, 0.0
  %v1030 = vadd.f32 %v1028, %v1029
  %v1031 = vsel %vm624, %v926, 0.0
  %v1032 = vadd.f32 %v1030, %v1031
  %v1033 = vsel %vm624, %v927, 0.0
  %v1034 = vadd.f32 %v1032, %v1033
  %v1035 = vsel %vm624, %v928, 0.0
  %v1036 = vadd.f32 %v1034, %v1035
  %v1037 = vsel %vm624, %v929, 0.0
  %v1038 = vadd.f32 %v1036, %v1037
  %v1039 = vsel %vm624, %v930, 0.0
  %v1040 = vadd.f32 %v1038, %v1039
  %v1041 = vsel %vm624, %v931, 0.0
  %v1042 = vadd.f32 %v1040, %v1041
  %v1043 = vsel %vm624, %v932, 0.0
  %v1044 = vadd.f32 %v1042, %v1043
  %v1045 = vsel %vm624, %v933, 0.0
  %v1046 = vadd.f32 %v1044, %v1045
  %v1047 = vsel %vm624, %v934, 0.0
  %v1048 = vadd.f32 %v1046, %v1047
  %v1049 = vsel %vm624, %v935, 0.0
  %v1050 = vadd.f32 %v1048, %v1049
  %v1051 = vsel %vm624, %v936, 0.0
  %v1052 = vadd.f32 %v1050, %v1051
  %v1053 = vsel %vm624, %v937, 0.0
  %v1054 = vadd.f32 %v1052, %v1053
  %v1055 = vsel %vm624, %v938, 0.0
  %v1056 = vadd.f32 %v1054, %v1055
  %v1057 = vsel %vm624, %v939, 0.0
  %v1058 = vadd.f32 %v1056, %v1057
  %v1059 = vsel %vm624, %v940, 0.0
  %v1060 = vadd.f32 %v1058, %v1059
  %v1061 = vsel %vm624, %v941, 0.0
  %v1062 = vadd.f32 %v1060, %v1061
  %v1063 = vsel %vm624, %v942, 0.0
  %v1064 = vadd.f32 %v1062, %v1063
  %v1065 = vsel %vm624, %v943, 0.0
  %v1066 = vadd.f32 %v1064, %v1065
  %v1067 = vsel %vm624, %v944, 0.0
  %v1068 = vadd.f32 %v1066, %v1067
  %v1069 = vsel %vm624, %v945, 0.0
  %v1070 = vadd.f32 %v1068, %v1069
  %v1071 = vsel %vm624, %v946, 0.0
  %v1072 = vadd.f32 %v1070, %v1071
  %v1073 = vsel %vm624, %v947, 0.0
  %v1074 = vadd.f32 %v1072, %v1073
  %v1075 = vrot.slane %v1074, 4
  %v1076 = vadd.f32 %v1074, %v1075
  %v1077 = vrot.slane %v1076, 2
  %v1078 = vadd.f32 %v1076, %v1077
  %v1079 = vrot.slane %v1078, 1
  %v1080 = vadd.f32 %v1078, %v1079
  %vm1081 = vcmask 122880
  %1082 = vst.msk [vmem:[%s3] sm:$0x1] %vm1081, %v1080
  %v1083 = vmul.f32 %v884, %v884
  %v1084 = vmul.f32 %v885, %v885
  %v1085 = vmul.f32 %v886, %v886
  %v1086 = vmul.f32 %v887, %v887
  %v1087 = vmul.f32 %v888, %v888
  %v1088 = vmul.f32 %v889, %v889
  %v1089 = vmul.f32 %v890, %v890
  %v1090 = vmul.f32 %v891, %v891
  %v1091 = vmul.f32 %v892, %v892
  %v1092 = vmul.f32 %v893, %v893
  %v1093 = vmul.f32 %v894, %v894
  %v1094 = vmul.f32 %v895, %v895
  %v1095 = vmul.f32 %v896, %v896
  %v1096 = vmul.f32 %v897, %v897
  %v1097 = vmul.f32 %v898, %v898
  %v1098 = vmul.f32 %v899, %v899
  %v1099 = vmul.f32 %v900, %v900
  %v1100 = vmul.f32 %v901, %v901
  %v1101 = vmul.f32 %v902, %v902
  %v1102 = vmul.f32 %v903, %v903
  %v1103 = vmul.f32 %v904, %v904
  %v1104 = vmul.f32 %v905, %v905
  %v1105 = vmul.f32 %v906, %v906
  %v1106 = vmul.f32 %v907, %v907
  %v1107 = vmul.f32 %v908, %v908
  %v1108 = vmul.f32 %v909, %v909
  %v1109 = vmul.f32 %v910, %v910
  %v1110 = vmul.f32 %v911, %v911
  %v1111 = vmul.f32 %v912, %v912
  %v1112 = vmul.f32 %v913, %v913
  %v1113 = vmul.f32 %v914, %v914
  %v1114 = vmul.f32 %v915, %v915
  %v1115 = vmul.f32 %v916, %v916
  %v1116 = vmul.f32 %v917, %v917
  %v1117 = vmul.f32 %v918, %v918
  %v1118 = vmul.f32 %v919, %v919
  %v1119 = vmul.f32 %v920, %v920
  %v1120 = vmul.f32 %v921, %v921
  %v1121 = vmul.f32 %v922, %v922
  %v1122 = vmul.f32 %v923, %v923
  %v1123 = vmul.f32 %v924, %v924
  %v1124 = vmul.f32 %v925, %v925
  %v1125 = vmul.f32 %v926, %v926
  %v1126 = vmul.f32 %v927, %v927
  %v1127 = vmul.f32 %v928, %v928
  %v1128 = vmul.f32 %v929, %v929
  %v1129 = vmul.f32 %v930, %v930
  %v1130 = vmul.f32 %v931, %v931
  %v1131 = vmul.f32 %v932, %v932
  %v1132 = vmul.f32 %v933, %v933
  %v1133 = vmul.f32 %v934, %v934
  %v1134 = vmul.f32 %v935, %v935
  %v1135 = vmul.f32 %v936, %v936
  %v1136 = vmul.f32 %v937, %v937
  %v1137 = vmul.f32 %v938, %v938
  %v1138 = vmul.f32 %v939, %v939
  %v1139 = vmul.f32 %v940, %v940
  %v1140 = vmul.f32 %v941, %v941
  %v1141 = vmul.f32 %v942, %v942
  %v1142 = vmul.f32 %v943, %v943
  %v1143 = vmul.f32 %v944, %v944
  %v1144 = vmul.f32 %v945, %v945
  %v1145 = vmul.f32 %v946, %v946
  %v1146 = vmul.f32 %v947, %v947
  %v1147 = vsel %vm624, %v1083, 0.0
  %v1148 = vsel %vm624, %v1084, 0.0
  %v1149 = vadd.f32 %v1147, %v1148
  %v1150 = vsel %vm624, %v1085, 0.0
  %v1151 = vadd.f32 %v1149, %v1150
  %v1152 = vsel %vm624, %v1086, 0.0
  %v1153 = vadd.f32 %v1151, %v1152
  %v1154 = vsel %vm624, %v1087, 0.0
  %v1155 = vadd.f32 %v1153, %v1154
  %v1156 = vsel %vm624, %v1088, 0.0
  %v1157 = vadd.f32 %v1155, %v1156
  %v1158 = vsel %vm624, %v1089, 0.0
  %v1159 = vadd.f32 %v1157, %v1158
  %v1160 = vsel %vm624, %v1090, 0.0
  %v1161 = vadd.f32 %v1159, %v1160
  %v1162 = vsel %vm624, %v1091, 0.0
  %v1163 = vadd.f32 %v1161, %v1162
  %v1164 = vsel %vm624, %v1092, 0.0
  %v1165 = vadd.f32 %v1163, %v1164
  %v1166 = vsel %vm624, %v1093, 0.0
  %v1167 = vadd.f32 %v1165, %v1166
  %v1168 = vsel %vm624, %v1094, 0.0
  %v1169 = vadd.f32 %v1167, %v1168
  %v1170 = vsel %vm624, %v1095, 0.0
  %v1171 = vadd.f32 %v1169, %v1170
  %v1172 = vsel %vm624, %v1096, 0.0
  %v1173 = vadd.f32 %v1171, %v1172
  %v1174 = vsel %vm624, %v1097, 0.0
  %v1175 = vadd.f32 %v1173, %v1174
  %v1176 = vsel %vm624, %v1098, 0.0
  %v1177 = vadd.f32 %v1175, %v1176
  %v1178 = vsel %vm624, %v1099, 0.0
  %v1179 = vadd.f32 %v1177, %v1178
  %v1180 = vsel %vm624, %v1100, 0.0
  %v1181 = vadd.f32 %v1179, %v1180
  %v1182 = vsel %vm624, %v1101, 0.0
  %v1183 = vadd.f32 %v1181, %v1182
  %v1184 = vsel %vm624, %v1102, 0.0
  %v1185 = vadd.f32 %v1183, %v1184
  %v1186 = vsel %vm624, %v1103, 0.0
  %v1187 = vadd.f32 %v1185, %v1186
  %v1188 = vsel %vm624, %v1104, 0.0
  %v1189 = vadd.f32 %v1187, %v1188
  %v1190 = vsel %vm624, %v1105, 0.0
  %v1191 = vadd.f32 %v1189, %v1190
  %v1192 = vsel %vm624, %v1106, 0.0
  %v1193 = vadd.f32 %v1191, %v1192
  %v1194 = vsel %vm624, %v1107, 0.0
  %v1195 = vadd.f32 %v1193, %v1194
  %v1196 = vsel %vm624, %v1108, 0.0
  %v1197 = vadd.f32 %v1195, %v1196
  %v1198 = vsel %vm624, %v1109, 0.0
  %v1199 = vadd.f32 %v1197, %v1198
  %v1200 = vsel %vm624, %v1110, 0.0
  %v1201 = vadd.f32 %v1199, %v1200
  %v1202 = vsel %vm624, %v1111, 0.0
  %v1203 = vadd.f32 %v1201, %v1202
  %v1204 = vsel %vm624, %v1112, 0.0
  %v1205 = vadd.f32 %v1203, %v1204
  %v1206 = vsel %vm624, %v1113, 0.0
  %v1207 = vadd.f32 %v1205, %v1206
  %v1208 = vsel %vm624, %v1114, 0.0
  %v1209 = vadd.f32 %v1207, %v1208
  %v1210 = vsel %vm624, %v1115, 0.0
  %v1211 = vadd.f32 %v1209, %v1210
  %v1212 = vsel %vm624, %v1116, 0.0
  %v1213 = vadd.f32 %v1211, %v1212
  %v1214 = vsel %vm624, %v1117, 0.0
  %v1215 = vadd.f32 %v1213, %v1214
  %v1216 = vsel %vm624, %v1118, 0.0
  %v1217 = vadd.f32 %v1215, %v1216
  %v1218 = vsel %vm624, %v1119, 0.0
  %v1219 = vadd.f32 %v1217, %v1218
  %v1220 = vsel %vm624, %v1120, 0.0
  %v1221 = vadd.f32 %v1219, %v1220
  %v1222 = vsel %vm624, %v1121, 0.0
  %v1223 = vadd.f32 %v1221, %v1222
  %v1224 = vsel %vm624, %v1122, 0.0
  %v1225 = vadd.f32 %v1223, %v1224
  %v1226 = vsel %vm624, %v1123, 0.0
  %v1227 = vadd.f32 %v1225, %v1226
  %v1228 = vsel %vm624, %v1124, 0.0
  %v1229 = vadd.f32 %v1227, %v1228
  %v1230 = vsel %vm624, %v1125, 0.0
  %v1231 = vadd.f32 %v1229, %v1230
  %v1232 = vsel %vm624, %v1126, 0.0
  %v1233 = vadd.f32 %v1231, %v1232
  %v1234 = vsel %vm624, %v1127, 0.0
  %v1235 = vadd.f32 %v1233, %v1234
  %v1236 = vsel %vm624, %v1128, 0.0
  %v1237 = vadd.f32 %v1235, %v1236
  %v1238 = vsel %vm624, %v1129, 0.0
  %v1239 = vadd.f32 %v1237, %v1238
  %v1240 = vsel %vm624, %v1130, 0.0
  %v1241 = vadd.f32 %v1239, %v1240
  %v1242 = vsel %vm624, %v1131, 0.0
  %v1243 = vadd.f32 %v1241, %v1242
  %v1244 = vsel %vm624, %v1132, 0.0
  %v1245 = vadd.f32 %v1243, %v1244
  %v1246 = vsel %vm624, %v1133, 0.0
  %v1247 = vadd.f32 %v1245, %v1246
  %v1248 = vsel %vm624, %v1134, 0.0
  %v1249 = vadd.f32 %v1247, %v1248
  %v1250 = vsel %vm624, %v1135, 0.0
  %v1251 = vadd.f32 %v1249, %v1250
  %v1252 = vsel %vm624, %v1136, 0.0
  %v1253 = vadd.f32 %v1251, %v1252
  %v1254 = vsel %vm624, %v1137, 0.0
  %v1255 = vadd.f32 %v1253, %v1254
  %v1256 = vsel %vm624, %v1138, 0.0
  %v1257 = vadd.f32 %v1255, %v1256
  %v1258 = vsel %vm624, %v1139, 0.0
  %v1259 = vadd.f32 %v1257, %v1258
  %v1260 = vsel %vm624, %v1140, 0.0
  %v1261 = vadd.f32 %v1259, %v1260
  %v1262 = vsel %vm624, %v1141, 0.0
  %v1263 = vadd.f32 %v1261, %v1262
  %v1264 = vsel %vm624, %v1142, 0.0
  %v1265 = vadd.f32 %v1263, %v1264
  %v1266 = vsel %vm624, %v1143, 0.0
  %v1267 = vadd.f32 %v1265, %v1266
  %v1268 = vsel %vm624, %v1144, 0.0
  %v1269 = vadd.f32 %v1267, %v1268
  %v1270 = vsel %vm624, %v1145, 0.0
  %v1271 = vadd.f32 %v1269, %v1270
  %v1272 = vsel %vm624, %v1146, 0.0
  %v1273 = vadd.f32 %v1271, %v1272
  %v1274 = vrot.slane %v1273, 4
  %v1275 = vadd.f32 %v1273, %v1274
  %v1276 = vrot.slane %v1275, 2
  %v1277 = vadd.f32 %v1275, %v1276
  %v1278 = vrot.slane %v1277, 1
  %v1279 = vadd.f32 %v1277, %v1278
  %1280 = vst.msk [vmem:[%s4] sm:$0x1] %vm1081, %v1279
  // Predicated region
  $region10: #{discriminator_forward.8} parent=0 // pred_check
    _
  $region11: #{discriminator_forward.8} parent=0 // pred_check_branch
    %1282 = sbr.rel (0) target = $region13
  $region12: #{discriminator_forward.8} parent=0 // pred_region
    _
  $region13: #{discriminator_forward.8} parent=0 // pred_fallthru
    _
  // Predicated region
  $region14: #{discriminator_forward.8} parent=0 // pred_check
    _
  $region15: #{discriminator_forward.8} parent=0 // pred_check_branch
    %1284 = sbr.rel (0) target = $region17
  $region16: #{discriminator_forward.8} parent=0 // pred_region
    _
  $region17: #{discriminator_forward.8} parent=0 // pred_fallthru
    _
  // Predicated region
  $region18: #{discriminator_forward.8} parent=0 // pred_check
    _
  $region19: #{discriminator_forward.8} parent=0 // pred_check_branch
    %1286 = sbr.rel (0) target = $region21
  $region20: #{discriminator_forward.8} parent=0 // pred_region
    _
  $region21: #{discriminator_forward.8} parent=0 // pred_fallthru
    _
  // Predicated region
  $region22: #{discriminator_forward.8} parent=0 // pred_check
    _
  $region23: #{discriminator_forward.8} parent=0 // pred_check_branch
    %1288 = sbr.rel (0) target = $region25
  $region24: #{discriminator_forward.8} parent=0 // pred_region
    _
  $region25: #{discriminator_forward.8} parent=0 // pred_fallthru
    _
  // Predicated region
  $region26: #{discriminator_forward.8} parent=0 // pred_check
    _
  $region27: #{discriminator_forward.8} parent=0 // pred_check_branch
    %1290 = sbr.rel (0) target = $region29
  $region28: #{discriminator_forward.8} parent=0 // pred_region
    _
  $region29: #{discriminator_forward.8} parent=0 // pred_fallthru
    _
  // Predicated region
  $region30: #{discriminator_forward.8} parent=0 // pred_check
    _
  $region31: #{discriminator_forward.8} parent=0 // pred_check_branch
    %1292 = sbr.rel (0) target = $region33
  $region32: #{discriminator_forward.8} parent=0 // pred_region
    _
  $region33: #{discriminator_forward.8} parent=0 // pred_fallthru
    _

// kernel: discriminator_forward.9
$region0: #{discriminator_forward.9}
  #allocation0 [shape = 'u32[]', space=smem, size = 0x4, offset = 0x4, fixed_abs, tag = 'smem constant byte address 0x4 - core index']
  #allocation1 [shape = 'u32[144,128]{1,0:T(1,128)}', space=vmem, size = 0x12000, scoped, tag = 'internal scratch']
  %s0 = inlined_call_operand.vmem [shape: f32[512,16], index: 0, kind: input, shape index: {}]
  %s1 = inlined_call_operand.vmem [shape: f32[1,16], index: 1, kind: input, shape index: {}]
  %s2 = inlined_call_operand.vmem [shape: f32[1,16], index: 2, kind: input, shape index: {}]
  %s3 = inlined_call_operand.vmem [shape: bf16[512,16], index: 3, kind: output, shape index: {}]
  %s4 = sld [smem:[#allocation0]]
  $region22: #{discriminator_forward.9} parent=0
    _
  %s6 = ssub.s32 1, %s4
  %s7 = scalar_select 0, %s6, %s4
  // Predicated region
  $region2: #{discriminator_forward.9} parent=0 // pred_check
    _
  $region3: #{discriminator_forward.9} parent=0 // pred_check_branch
    %9 = sbr.rel (0) target = $region5
  $region4: #{discriminator_forward.9} parent=0 // pred_region
    _
  $region5: #{discriminator_forward.9} parent=0 // pred_fallthru
    _
  // Predicated region
  $region6: #{discriminator_forward.9} parent=0 // pred_check
    _
  $region7: #{discriminator_forward.9} parent=0 // pred_check_branch
    %11 = sbr.rel (0) target = $region9
  $region8: #{discriminator_forward.9} parent=0 // pred_region
    _
  $region9: #{discriminator_forward.9} parent=0 // pred_fallthru
    _
  // Predicated region
  $region10: #{discriminator_forward.9} parent=0 // pred_check
    _
  $region11: #{discriminator_forward.9} parent=0 // pred_check_branch
    %13 = sbr.rel (0) target = $region13
  $region12: #{discriminator_forward.9} parent=0 // pred_region
    _
  $region13: #{discriminator_forward.9} parent=0 // pred_fallthru
    _
  %v14 = vld [vmem:[%s0] sm:$0xff]
  %v15 = vld [vmem:[%s0 + $0x8] sm:$0xff]
  %v16 = vld [vmem:[%s0 + $0x10] sm:$0xff]
  %v17 = vld [vmem:[%s0 + $0x18] sm:$0xff]
  %v18 = vld [vmem:[%s0 + $0x20] sm:$0xff]
  %v19 = vld [vmem:[%s0 + $0x28] sm:$0xff]
  %v20 = vld [vmem:[%s0 + $0x30] sm:$0xff]
  %v21 = vld [vmem:[%s0 + $0x38] sm:$0xff]
  %v22 = vld [vmem:[%s0 + $0x40] sm:$0xff]
  %v23 = vld [vmem:[%s0 + $0x48] sm:$0xff]
  %v24 = vld [vmem:[%s0 + $0x50] sm:$0xff]
  %v25 = vld [vmem:[%s0 + $0x58] sm:$0xff]
  %v26 = vld [vmem:[%s0 + $0x60] sm:$0xff]
  %v27 = vld [vmem:[%s0 + $0x68] sm:$0xff]
  %v28 = vld [vmem:[%s0 + $0x70] sm:$0xff]
  %v29 = vld [vmem:[%s0 + $0x78] sm:$0xff]
  %v30 = vld [vmem:[%s0 + $0x80] sm:$0xff]
  %v31 = vld [vmem:[%s0 + $0x88] sm:$0xff]
  %v32 = vld [vmem:[%s0 + $0x90] sm:$0xff]
  %v33 = vld [vmem:[%s0 + $0x98] sm:$0xff]
  %v34 = vld [vmem:[%s0 + $0xa0] sm:$0xff]
  %v35 = vld [vmem:[%s0 + $0xa8] sm:$0xff]
  %v36 = vld [vmem:[%s0 + $0xb0] sm:$0xff]
  %v37 = vld [vmem:[%s0 + $0xb8] sm:$0xff]
  %v38 = vld [vmem:[%s0 + $0xc0] sm:$0xff]
  %v39 = vld [vmem:[%s0 + $0xc8] sm:$0xff]
  %v40 = vld [vmem:[%s0 + $0xd0] sm:$0xff]
  %v41 = vld [vmem:[%s0 + $0xd8] sm:$0xff]
  %v42 = vld [vmem:[%s0 + $0xe0] sm:$0xff]
  %v43 = vld [vmem:[%s0 + $0xe8] sm:$0xff]
  %v44 = vld [vmem:[%s0 + $0xf0] sm:$0xff]
  %v45 = vld [vmem:[%s0 + $0xf8] sm:$0xff]
  %v46 = vld [vmem:[%s0 + $0x100] sm:$0xff]
  %v47 = vld [vmem:[%s0 + $0x108] sm:$0xff]
  %v48 = vld [vmem:[%s0 + $0x110] sm:$0xff]
  %v49 = vld [vmem:[%s0 + $0x118] sm:$0xff]
  %v50 = vld [vmem:[%s0 + $0x120] sm:$0xff]
  %v51 = vld [vmem:[%s0 + $0x128] sm:$0xff]
  %v52 = vld [vmem:[%s0 + $0x130] sm:$0xff]
  %v53 = vld [vmem:[%s0 + $0x138] sm:$0xff]
  %v54 = vld [vmem:[%s0 + $0x140] sm:$0xff]
  %v55 = vld [vmem:[%s0 + $0x148] sm:$0xff]
  %v56 = vld [vmem:[%s0 + $0x150] sm:$0xff]
  %v57 = vld [vmem:[%s0 + $0x158] sm:$0xff]
  %v58 = vld [vmem:[%s0 + $0x160] sm:$0xff]
  %v59 = vld [vmem:[%s0 + $0x168] sm:$0xff]
  %v60 = vld [vmem:[%s0 + $0x170] sm:$0xff]
  %v61 = vld [vmem:[%s0 + $0x178] sm:$0xff]
  %v62 = vld [vmem:[%s0 + $0x180] sm:$0xff]
  %v63 = vld [vmem:[%s0 + $0x188] sm:$0xff]
  %v64 = vld [vmem:[%s0 + $0x190] sm:$0xff]
  %v65 = vld [vmem:[%s0 + $0x198] sm:$0xff]
  %v66 = vld [vmem:[%s0 + $0x1a0] sm:$0xff]
  %v67 = vld [vmem:[%s0 + $0x1a8] sm:$0xff]
  %v68 = vld [vmem:[%s0 + $0x1b0] sm:$0xff]
  %v69 = vld [vmem:[%s0 + $0x1b8] sm:$0xff]
  %v70 = vld [vmem:[%s0 + $0x1c0] sm:$0xff]
  %v71 = vld [vmem:[%s0 + $0x1c8] sm:$0xff]
  %v72 = vld [vmem:[%s0 + $0x1d0] sm:$0xff]
  %v73 = vld [vmem:[%s0 + $0x1d8] sm:$0xff]
  %v74 = vld [vmem:[%s0 + $0x1e0] sm:$0xff]
  %v75 = vld [vmem:[%s0 + $0x1e8] sm:$0xff]
  %v76 = vld [vmem:[%s0 + $0x1f0] sm:$0xff]
  %v77 = vld [vmem:[%s0 + $0x1f8] sm:$0xff]
  %v78 = vld [vmem:[%s1] sm:$0x1]
  %v80 = vlaneseq
  %v81 = vshrl.u32 %v80, 7
  %v82 = vsub.s32 0, %v81
  %v83 = vrot.slane %v78, %v82
  %v85 = vmul.f32 %v14, %v83
  %v86 = vmul.f32 %v15, %v83
  %v87 = vmul.f32 %v16, %v83
  %v88 = vmul.f32 %v17, %v83
  %v89 = vmul.f32 %v18, %v83
  %v90 = vmul.f32 %v19, %v83
  %v91 = vmul.f32 %v20, %v83
  %v92 = vmul.f32 %v21, %v83
  %v93 = vmul.f32 %v22, %v83
  %v94 = vmul.f32 %v23, %v83
  %v95 = vmul.f32 %v24, %v83
  %v96 = vmul.f32 %v25, %v83
  %v97 = vmul.f32 %v26, %v83
  %v98 = vmul.f32 %v27, %v83
  %v99 = vmul.f32 %v28, %v83
  %v100 = vmul.f32 %v29, %v83
  %v101 = vmul.f32 %v30, %v83
  %v102 = vmul.f32 %v31, %v83
  %v103 = vmul.f32 %v32, %v83
  %v104 = vmul.f32 %v33, %v83
  %v105 = vmul.f32 %v34, %v83
  %v106 = vmul.f32 %v35, %v83
  %v107 = vmul.f32 %v36, %v83
  %v108 = vmul.f32 %v37, %v83
  %v109 = vmul.f32 %v38, %v83
  %v110 = vmul.f32 %v39, %v83
  %v111 = vmul.f32 %v40, %v83
  %v112 = vmul.f32 %v41, %v83
  %v113 = vmul.f32 %v42, %v83
  %v114 = vmul.f32 %v43, %v83
  %v115 = vmul.f32 %v44, %v83
  %v116 = vmul.f32 %v45, %v83
  %v117 = vmul.f32 %v46, %v83
  %v118 = vmul.f32 %v47, %v83
  %v119 = vmul.f32 %v48, %v83
  %v120 = vmul.f32 %v49, %v83
  %v121 = vmul.f32 %v50, %v83
  %v122 = vmul.f32 %v51, %v83
  %v123 = vmul.f32 %v52, %v83
  %v124 = vmul.f32 %v53, %v83
  %v125 = vmul.f32 %v54, %v83
  %v126 = vmul.f32 %v55, %v83
  %v127 = vmul.f32 %v56, %v83
  %v128 = vmul.f32 %v57, %v83
  %v129 = vmul.f32 %v58, %v83
  %v130 = vmul.f32 %v59, %v83
  %v131 = vmul.f32 %v60, %v83
  %v132 = vmul.f32 %v61, %v83
  %v133 = vmul.f32 %v62, %v83
  %v134 = vmul.f32 %v63, %v83
  %v135 = vmul.f32 %v64, %v83
  %v136 = vmul.f32 %v65, %v83
  %v137 = vmul.f32 %v66, %v83
  %v138 = vmul.f32 %v67, %v83
  %v139 = vmul.f32 %v68, %v83
  %v140 = vmul.f32 %v69, %v83
  %v141 = vmul.f32 %v70, %v83
  %v142 = vmul.f32 %v71, %v83
  %v143 = vmul.f32 %v72, %v83
  %v144 = vmul.f32 %v73, %v83
  %v145 = vmul.f32 %v74, %v83
  %v146 = vmul.f32 %v75, %v83
  %v147 = vmul.f32 %v76, %v83
  %v148 = vmul.f32 %v77, %v83
  %v149 = vld [vmem:[%s2] sm:$0x1]
  %v151 = vlaneseq
  %v152 = vshrl.u32 %v151, 7
  %v153 = vsub.s32 0, %v152
  %v154 = vrot.slane %v149, %v153
  %v156 = vadd.f32 %v85, %v154
  %v157 = vadd.f32 %v86, %v154
  %v158 = vadd.f32 %v87, %v154
  %v159 = vadd.f32 %v88, %v154
  %v160 = vadd.f32 %v89, %v154
  %v161 = vadd.f32 %v90, %v154
  %v162 = vadd.f32 %v91, %v154
  %v163 = vadd.f32 %v92, %v154
  %v164 = vadd.f32 %v93, %v154
  %v165 = vadd.f32 %v94, %v154
  %v166 = vadd.f32 %v95, %v154
  %v167 = vadd.f32 %v96, %v154
  %v168 = vadd.f32 %v97, %v154
  %v169 = vadd.f32 %v98, %v154
  %v170 = vadd.f32 %v99, %v154
  %v171 = vadd.f32 %v100, %v154
  %v172 = vadd.f32 %v101, %v154
  %v173 = vadd.f32 %v102, %v154
  %v174 = vadd.f32 %v103, %v154
  %v175 = vadd.f32 %v104, %v154
  %v176 = vadd.f32 %v105, %v154
  %v177 = vadd.f32 %v106, %v154
  %v178 = vadd.f32 %v107, %v154
  %v179 = vadd.f32 %v108, %v154
  %v180 = vadd.f32 %v109, %v154
  %v181 = vadd.f32 %v110, %v154
  %v182 = vadd.f32 %v111, %v154
  %v183 = vadd.f32 %v112, %v154
  %v184 = vadd.f32 %v113, %v154
  %v185 = vadd.f32 %v114, %v154
  %v186 = vadd.f32 %v115, %v154
  %v187 = vadd.f32 %v116, %v154
  %v188 = vadd.f32 %v117, %v154
  %v189 = vadd.f32 %v118, %v154
  %v190 = vadd.f32 %v119, %v154
  %v191 = vadd.f32 %v120, %v154
  %v192 = vadd.f32 %v121, %v154
  %v193 = vadd.f32 %v122, %v154
  %v194 = vadd.f32 %v123, %v154
  %v195 = vadd.f32 %v124, %v154
  %v196 = vadd.f32 %v125, %v154
  %v197 = vadd.f32 %v126, %v154
  %v198 = vadd.f32 %v127, %v154
  %v199 = vadd.f32 %v128, %v154
  %v200 = vadd.f32 %v129, %v154
  %v201 = vadd.f32 %v130, %v154
  %v202 = vadd.f32 %v131, %v154
  %v203 = vadd.f32 %v132, %v154
  %v204 = vadd.f32 %v133, %v154
  %v205 = vadd.f32 %v134, %v154
  %v206 = vadd.f32 %v135, %v154
  %v207 = vadd.f32 %v136, %v154
  %v208 = vadd.f32 %v137, %v154
  %v209 = vadd.f32 %v138, %v154
  %v210 = vadd.f32 %v139, %v154
  %v211 = vadd.f32 %v140, %v154
  %v212 = vadd.f32 %v141, %v154
  %v213 = vadd.f32 %v142, %v154
  %v214 = vadd.f32 %v143, %v154
  %v215 = vadd.f32 %v144, %v154
  %v216 = vadd.f32 %v145, %v154
  %v217 = vadd.f32 %v146, %v154
  %v218 = vadd.f32 %v147, %v154
  %v219 = vadd.f32 %v148, %v154
  %vm220 = vcmp.ge.f32.partialorder %v156, 0.0
  %vm221 = vcmp.ge.f32.partialorder %v157, 0.0
  %vm222 = vcmp.ge.f32.partialorder %v158, 0.0
  %vm223 = vcmp.ge.f32.partialorder %v159, 0.0
  %vm224 = vcmp.ge.f32.partialorder %v160, 0.0
  %vm225 = vcmp.ge.f32.partialorder %v161, 0.0
  %vm226 = vcmp.ge.f32.partialorder %v162, 0.0
  %vm227 = vcmp.ge.f32.partialorder %v163, 0.0
  %vm228 = vcmp.ge.f32.partialorder %v164, 0.0
  %vm229 = vcmp.ge.f32.partialorder %v165, 0.0
  %vm230 = vcmp.ge.f32.partialorder %v166, 0.0
  %vm231 = vcmp.ge.f32.partialorder %v167, 0.0
  %vm232 = vcmp.ge.f32.partialorder %v168, 0.0
  %vm233 = vcmp.ge.f32.partialorder %v169, 0.0
  %vm234 = vcmp.ge.f32.partialorder %v170, 0.0
  %vm235 = vcmp.ge.f32.partialorder %v171, 0.0
  %vm236 = vcmp.ge.f32.partialorder %v172, 0.0
  %vm237 = vcmp.ge.f32.partialorder %v173, 0.0
  %vm238 = vcmp.ge.f32.partialorder %v174, 0.0
  %vm239 = vcmp.ge.f32.partialorder %v175, 0.0
  %vm240 = vcmp.ge.f32.partialorder %v176, 0.0
  %vm241 = vcmp.ge.f32.partialorder %v177, 0.0
  %vm242 = vcmp.ge.f32.partialorder %v178, 0.0
  %vm243 = vcmp.ge.f32.partialorder %v179, 0.0
  %vm244 = vcmp.ge.f32.partialorder %v180, 0.0
  %vm245 = vcmp.ge.f32.partialorder %v181, 0.0
  %vm246 = vcmp.ge.f32.partialorder %v182, 0.0
  %vm247 = vcmp.ge.f32.partialorder %v183, 0.0
  %vm248 = vcmp.ge.f32.partialorder %v184, 0.0
  %vm249 = vcmp.ge.f32.partialorder %v185, 0.0
  %vm250 = vcmp.ge.f32.partialorder %v186, 0.0
  %vm251 = vcmp.ge.f32.partialorder %v187, 0.0
  %vm252 = vcmp.ge.f32.partialorder %v188, 0.0
  %vm253 = vcmp.ge.f32.partialorder %v189, 0.0
  %vm254 = vcmp.ge.f32.partialorder %v190, 0.0
  %vm255 = vcmp.ge.f32.partialorder %v191, 0.0
  %vm256 = vcmp.ge.f32.partialorder %v192, 0.0
  %vm257 = vcmp.ge.f32.partialorder %v193, 0.0
  %vm258 = vcmp.ge.f32.partialorder %v194, 0.0
  %vm259 = vcmp.ge.f32.partialorder %v195, 0.0
  %vm260 = vcmp.ge.f32.partialorder %v196, 0.0
  %vm261 = vcmp.ge.f32.partialorder %v197, 0.0
  %vm262 = vcmp.ge.f32.partialorder %v198, 0.0
  %vm263 = vcmp.ge.f32.partialorder %v199, 0.0
  %vm264 = vcmp.ge.f32.partialorder %v200, 0.0
  %vm265 = vcmp.ge.f32.partialorder %v201, 0.0
  %vm266 = vcmp.ge.f32.partialorder %v202, 0.0
  %vm267 = vcmp.ge.f32.partialorder %v203, 0.0
  %vm268 = vcmp.ge.f32.partialorder %v204, 0.0
  %vm269 = vcmp.ge.f32.partialorder %v205, 0.0
  %vm270 = vcmp.ge.f32.partialorder %v206, 0.0
  %vm271 = vcmp.ge.f32.partialorder %v207, 0.0
  %vm272 = vcmp.ge.f32.partialorder %v208, 0.0
  %vm273 = vcmp.ge.f32.partialorder %v209, 0.0
  %vm274 = vcmp.ge.f32.partialorder %v210, 0.0
  %vm275 = vcmp.ge.f32.partialorder %v211, 0.0
  %vm276 = vcmp.ge.f32.partialorder %v212, 0.0
  %vm277 = vcmp.ge.f32.partialorder %v213, 0.0
  %vm278 = vcmp.ge.f32.partialorder %v214, 0.0
  %vm279 = vcmp.ge.f32.partialorder %v215, 0.0
  %vm280 = vcmp.ge.f32.partialorder %v216, 0.0
  %vm281 = vcmp.ge.f32.partialorder %v217, 0.0
  %vm282 = vcmp.ge.f32.partialorder %v218, 0.0
  %vm283 = vcmp.ge.f32.partialorder %v219, 0.0
  %v284 = vmul.f32 %v156, 0.2
  %v285 = vmul.f32 %v157, 0.2
  %v286 = vmul.f32 %v158, 0.2
  %v287 = vmul.f32 %v159, 0.2
  %v288 = vmul.f32 %v160, 0.2
  %v289 = vmul.f32 %v161, 0.2
  %v290 = vmul.f32 %v162, 0.2
  %v291 = vmul.f32 %v163, 0.2
  %v292 = vmul.f32 %v164, 0.2
  %v293 = vmul.f32 %v165, 0.2
  %v294 = vmul.f32 %v166, 0.2
  %v295 = vmul.f32 %v167, 0.2
  %v296 = vmul.f32 %v168, 0.2
  %v297 = vmul.f32 %v169, 0.2
  %v298 = vmul.f32 %v170, 0.2
  %v299 = vmul.f32 %v171, 0.2
  %v300 = vmul.f32 %v172, 0.2
  %v301 = vmul.f32 %v173, 0.2
  %v302 = vmul.f32 %v174, 0.2
  %v303 = vmul.f32 %v175, 0.2
  %v304 = vmul.f32 %v176, 0.2
  %v305 = vmul.f32 %v177, 0.2
  %v306 = vmul.f32 %v178, 0.2
  %v307 = vmul.f32 %v179, 0.2
  %v308 = vmul.f32 %v180, 0.2
  %v309 = vmul.f32 %v181, 0.2
  %v310 = vmul.f32 %v182, 0.2
  %v311 = vmul.f32 %v183, 0.2
  %v312 = vmul.f32 %v184, 0.2
  %v313 = vmul.f32 %v185, 0.2
  %v314 = vmul.f32 %v186, 0.2
  %v315 = vmul.f32 %v187, 0.2
  %v316 = vmul.f32 %v188, 0.2
  %v317 = vmul.f32 %v189, 0.2
  %v318 = vmul.f32 %v190, 0.2
  %v319 = vmul.f32 %v191, 0.2
  %v320 = vmul.f32 %v192, 0.2
  %v321 = vmul.f32 %v193, 0.2
  %v322 = vmul.f32 %v194, 0.2
  %v323 = vmul.f32 %v195, 0.2
  %v324 = vmul.f32 %v196, 0.2
  %v325 = vmul.f32 %v197, 0.2
  %v326 = vmul.f32 %v198, 0.2
  %v327 = vmul.f32 %v199, 0.2
  %v328 = vmul.f32 %v200, 0.2
  %v329 = vmul.f32 %v201, 0.2
  %v330 = vmul.f32 %v202, 0.2
  %v331 = vmul.f32 %v203, 0.2
  %v332 = vmul.f32 %v204, 0.2
  %v333 = vmul.f32 %v205, 0.2
  %v334 = vmul.f32 %v206, 0.2
  %v335 = vmul.f32 %v207, 0.2
  %v336 = vmul.f32 %v208, 0.2
  %v337 = vmul.f32 %v209, 0.2
  %v338 = vmul.f32 %v210, 0.2
  %v339 = vmul.f32 %v211, 0.2
  %v340 = vmul.f32 %v212, 0.2
  %v341 = vmul.f32 %v213, 0.2
  %v342 = vmul.f32 %v214, 0.2
  %v343 = vmul.f32 %v215, 0.2
  %v344 = vmul.f32 %v216, 0.2
  %v345 = vmul.f32 %v217, 0.2
  %v346 = vmul.f32 %v218, 0.2
  %v347 = vmul.f32 %v219, 0.2
  %v348 = vsel %vm220, %v156, %v284
  %v349 = vsel %vm221, %v157, %v285
  %v350 = vsel %vm222, %v158, %v286
  %v351 = vsel %vm223, %v159, %v287
  %v352 = vsel %vm224, %v160, %v288
  %v353 = vsel %vm225, %v161, %v289
  %v354 = vsel %vm226, %v162, %v290
  %v355 = vsel %vm227, %v163, %v291
  %v356 = vsel %vm228, %v164, %v292
  %v357 = vsel %vm229, %v165, %v293
  %v358 = vsel %vm230, %v166, %v294
  %v359 = vsel %vm231, %v167, %v295
  %v360 = vsel %vm232, %v168, %v296
  %v361 = vsel %vm233, %v169, %v297
  %v362 = vsel %vm234, %v170, %v298
  %v363 = vsel %vm235, %v171, %v299
  %v364 = vsel %vm236, %v172, %v300
  %v365 = vsel %vm237, %v173, %v301
  %v366 = vsel %vm238, %v174, %v302
  %v367 = vsel %vm239, %v175, %v303
  %v368 = vsel %vm240, %v176, %v304
  %v369 = vsel %vm241, %v177, %v305
  %v370 = vsel %vm242, %v178, %v306
  %v371 = vsel %vm243, %v179, %v307
  %v372 = vsel %vm244, %v180, %v308
  %v373 = vsel %vm245, %v181, %v309
  %v374 = vsel %vm246, %v182, %v310
  %v375 = vsel %vm247, %v183, %v311
  %v376 = vsel %vm248, %v184, %v312
  %v377 = vsel %vm249, %v185, %v313
  %v378 = vsel %vm250, %v186, %v314
  %v379 = vsel %vm251, %v187, %v315
  %v380 = vsel %vm252, %v188, %v316
  %v381 = vsel %vm253, %v189, %v317
  %v382 = vsel %vm254, %v190, %v318
  %v383 = vsel %vm255, %v191, %v319
  %v384 = vsel %vm256, %v192, %v320
  %v385 = vsel %vm257, %v193, %v321
  %v386 = vsel %vm258, %v194, %v322
  %v387 = vsel %vm259, %v195, %v323
  %v388 = vsel %vm260, %v196, %v324
  %v389 = vsel %vm261, %v197, %v325
  %v390 = vsel %vm262, %v198, %v326
  %v391 = vsel %vm263, %v199, %v327
  %v392 = vsel %vm264, %v200, %v328
  %v393 = vsel %vm265, %v201, %v329
  %v394 = vsel %vm266, %v202, %v330
  %v395 = vsel %vm267, %v203, %v331
  %v396 = vsel %vm268, %v204, %v332
  %v397 = vsel %vm269, %v205, %v333
  %v398 = vsel %vm270, %v206, %v334
  %v399 = vsel %vm271, %v207, %v335
  %v400 = vsel %vm272, %v208, %v336
  %v401 = vsel %vm273, %v209, %v337
  %v402 = vsel %vm274, %v210, %v338
  %v403 = vsel %vm275, %v211, %v339
  %v404 = vsel %vm276, %v212, %v340
  %v405 = vsel %vm277, %v213, %v341
  %v406 = vsel %vm278, %v214, %v342
  %v407 = vsel %vm279, %v215, %v343
  %v408 = vsel %vm280, %v216, %v344
  %v409 = vsel %vm281, %v217, %v345
  %v410 = vsel %vm282, %v218, %v346
  %v411 = vsel %vm283, %v219, %v347
  %v412 = vpack.c.bf16 %v349, %v348
  %v413 = vpack.c.bf16 %v351, %v350
  %v414 = vpack.c.bf16 %v353, %v352
  %v415 = vpack.c.bf16 %v355, %v354
  %v416 = vpack.c.bf16 %v357, %v356
  %v417 = vpack.c.bf16 %v359, %v358
  %v418 = vpack.c.bf16 %v361, %v360
  %v419 = vpack.c.bf16 %v363, %v362
  %v420 = vpack.c.bf16 %v365, %v364
  %v421 = vpack.c.bf16 %v367, %v366
  %v422 = vpack.c.bf16 %v369, %v368
  %v423 = vpack.c.bf16 %v371, %v370
  %v424 = vpack.c.bf16 %v373, %v372
  %v425 = vpack.c.bf16 %v375, %v374
  %v426 = vpack.c.bf16 %v377, %v376
  %v427 = vpack.c.bf16 %v379, %v378
  %v428 = vpack.c.bf16 %v381, %v380
  %v429 = vpack.c.bf16 %v383, %v382
  %v430 = vpack.c.bf16 %v385, %v384
  %v431 = vpack.c.bf16 %v387, %v386
  %v432 = vpack.c.bf16 %v389, %v388
  %v433 = vpack.c.bf16 %v391, %v390
  %v434 = vpack.c.bf16 %v393, %v392
  %v435 = vpack.c.bf16 %v395, %v394
  %v436 = vpack.c.bf16 %v397, %v396
  %v437 = vpack.c.bf16 %v399, %v398
  %v438 = vpack.c.bf16 %v401, %v400
  %v439 = vpack.c.bf16 %v403, %v402
  %v440 = vpack.c.bf16 %v405, %v404
  %v441 = vpack.c.bf16 %v407, %v406
  %v442 = vpack.c.bf16 %v409, %v408
  %v443 = vpack.c.bf16 %v411, %v410
  %v476 = vunpack.c.l.b16 %v412
  %v477 = vunpack.c.h.b16 %v412
  %v478 = vunpack.c.l.b16 %v413
  %v479 = vunpack.c.h.b16 %v413
  %v480 = vunpack.c.l.b16 %v414
  %v481 = vunpack.c.h.b16 %v414
  %v482 = vunpack.c.l.b16 %v415
  %v483 = vunpack.c.h.b16 %v415
  %v484 = vunpack.c.l.b16 %v416
  %v485 = vunpack.c.h.b16 %v416
  %v486 = vunpack.c.l.b16 %v417
  %v487 = vunpack.c.h.b16 %v417
  %v488 = vunpack.c.l.b16 %v418
  %v489 = vunpack.c.h.b16 %v418
  %v490 = vunpack.c.l.b16 %v419
  %v491 = vunpack.c.h.b16 %v419
  %v492 = vunpack.c.l.b16 %v420
  %v493 = vunpack.c.h.b16 %v420
  %v494 = vunpack.c.l.b16 %v421
  %v495 = vunpack.c.h.b16 %v421
  %v496 = vunpack.c.l.b16 %v422
  %v497 = vunpack.c.h.b16 %v422
  %v498 = vunpack.c.l.b16 %v423
  %v499 = vunpack.c.h.b16 %v423
  %v500 = vunpack.c.l.b16 %v424
  %v501 = vunpack.c.h.b16 %v424
  %v502 = vunpack.c.l.b16 %v425
  %v503 = vunpack.c.h.b16 %v425
  %v504 = vunpack.c.l.b16 %v426
  %v505 = vunpack.c.h.b16 %v426
  %v506 = vunpack.c.l.b16 %v427
  %v507 = vunpack.c.h.b16 %v427
  %v508 = vunpack.c.l.b16 %v428
  %v509 = vunpack.c.h.b16 %v428
  %v510 = vunpack.c.l.b16 %v429
  %v511 = vunpack.c.h.b16 %v429
  %v512 = vunpack.c.l.b16 %v430
  %v513 = vunpack.c.h.b16 %v430
  %v514 = vunpack.c.l.b16 %v431
  %v515 = vunpack.c.h.b16 %v431
  %v516 = vunpack.c.l.b16 %v432
  %v517 = vunpack.c.h.b16 %v432
  %v518 = vunpack.c.l.b16 %v433
  %v519 = vunpack.c.h.b16 %v433
  %v520 = vunpack.c.l.b16 %v434
  %v521 = vunpack.c.h.b16 %v434
  %v522 = vunpack.c.l.b16 %v435
  %v523 = vunpack.c.h.b16 %v435
  %v524 = vunpack.c.l.b16 %v436
  %v525 = vunpack.c.h.b16 %v436
  %v526 = vunpack.c.l.b16 %v437
  %v527 = vunpack.c.h.b16 %v437
  %v528 = vunpack.c.l.b16 %v438
  %v529 = vunpack.c.h.b16 %v438
  %v530 = vunpack.c.l.b16 %v439
  %v531 = vunpack.c.h.b16 %v439
  %v532 = vunpack.c.l.b16 %v440
  %v533 = vunpack.c.h.b16 %v440
  %v534 = vunpack.c.l.b16 %v441
  %v535 = vunpack.c.h.b16 %v441
  %v536 = vunpack.c.l.b16 %v442
  %v537 = vunpack.c.h.b16 %v442
  %v538 = vunpack.c.l.b16 %v443
  %v539 = vunpack.c.h.b16 %v443
  %v540 = vpack.c.b16 %v476, %v476
  %v541 = vpack.c.b16 %v477, %v477
  %v542 = vpack.c.b16 %v478, %v478
  %v543 = vpack.c.b16 %v479, %v479
  %v544 = vpack.c.b16 %v480, %v480
  %v545 = vpack.c.b16 %v481, %v481
  %v546 = vpack.c.b16 %v482, %v482
  %v547 = vpack.c.b16 %v483, %v483
  %v548 = vpack.c.b16 %v484, %v484
  %v549 = vpack.c.b16 %v485, %v485
  %v550 = vpack.c.b16 %v486, %v486
  %v551 = vpack.c.b16 %v487, %v487
  %v552 = vpack.c.b16 %v488, %v488
  %v553 = vpack.c.b16 %v489, %v489
  %v554 = vpack.c.b16 %v490, %v490
  %v555 = vpack.c.b16 %v491, %v491
  %v556 = vpack.c.b16 %v492, %v492
  %v557 = vpack.c.b16 %v493, %v493
  %v558 = vpack.c.b16 %v494, %v494
  %v559 = vpack.c.b16 %v495, %v495
  %v560 = vpack.c.b16 %v496, %v496
  %v561 = vpack.c.b16 %v497, %v497
  %v562 = vpack.c.b16 %v498, %v498
  %v563 = vpack.c.b16 %v499, %v499
  %v564 = vpack.c.b16 %v500, %v500
  %v565 = vpack.c.b16 %v501, %v501
  %v566 = vpack.c.b16 %v502, %v502
  %v567 = vpack.c.b16 %v503, %v503
  %v568 = vpack.c.b16 %v504, %v504
  %v569 = vpack.c.b16 %v505, %v505
  %v570 = vpack.c.b16 %v506, %v506
  %v571 = vpack.c.b16 %v507, %v507
  %v572 = vpack.c.b16 %v508, %v508
  %v573 = vpack.c.b16 %v509, %v509
  %v574 = vpack.c.b16 %v510, %v510
  %v575 = vpack.c.b16 %v511, %v511
  %v576 = vpack.c.b16 %v512, %v512
  %v577 = vpack.c.b16 %v513, %v513
  %v578 = vpack.c.b16 %v514, %v514
  %v579 = vpack.c.b16 %v515, %v515
  %v580 = vpack.c.b16 %v516, %v516
  %v581 = vpack.c.b16 %v517, %v517
  %v582 = vpack.c.b16 %v518, %v518
  %v583 = vpack.c.b16 %v519, %v519
  %v584 = vpack.c.b16 %v520, %v520
  %v585 = vpack.c.b16 %v521, %v521
  %v586 = vpack.c.b16 %v522, %v522
  %v587 = vpack.c.b16 %v523, %v523
  %v588 = vpack.c.b16 %v524, %v524
  %v589 = vpack.c.b16 %v525, %v525
  %v590 = vpack.c.b16 %v526, %v526
  %v591 = vpack.c.b16 %v527, %v527
  %v592 = vpack.c.b16 %v528, %v528
  %v593 = vpack.c.b16 %v529, %v529
  %v594 = vpack.c.b16 %v530, %v530
  %v595 = vpack.c.b16 %v531, %v531
  %v596 = vpack.c.b16 %v532, %v532
  %v597 = vpack.c.b16 %v533, %v533
  %v598 = vpack.c.b16 %v534, %v534
  %v599 = vpack.c.b16 %v535, %v535
  %v600 = vpack.c.b16 %v536, %v536
  %v601 = vpack.c.b16 %v537, %v537
  %v602 = vpack.c.b16 %v538, %v538
  %v603 = vpack.c.b16 %v539, %v539
  %vm668 = vcmask 125952
  %669 = vst.msk [vmem:[%s3] sm:$0xf] %vm668, %v540
  %670 = vst.msk [vmem:[%s3 + $0x4] sm:$0xf] %vm668, %v541
  %671 = vst.msk [vmem:[%s3 + $0x8] sm:$0xf] %vm668, %v542
  %672 = vst.msk [vmem:[%s3 + $0xc] sm:$0xf] %vm668, %v543
  %673 = vst.msk [vmem:[%s3 + $0x10] sm:$0xf] %vm668, %v544
  %674 = vst.msk [vmem:[%s3 + $0x14] sm:$0xf] %vm668, %v545
  %675 = vst.msk [vmem:[%s3 + $0x18] sm:$0xf] %vm668, %v546
  %676 = vst.msk [vmem:[%s3 + $0x1c] sm:$0xf] %vm668, %v547
  %677 = vst.msk [vmem:[%s3 + $0x20] sm:$0xf] %vm668, %v548
  %678 = vst.msk [vmem:[%s3 + $0x24] sm:$0xf] %vm668, %v549
  %679 = vst.msk [vmem:[%s3 + $0x28] sm:$0xf] %vm668, %v550
  %680 = vst.msk [vmem:[%s3 + $0x2c] sm:$0xf] %vm668, %v551
  %681 = vst.msk [vmem:[%s3 + $0x30] sm:$0xf] %vm668, %v552
  %682 = vst.msk [vmem:[%s3 + $0x34] sm:$0xf] %vm668, %v553
  %683 = vst.msk [vmem:[%s3 + $0x38] sm:$0xf] %vm668, %v554
  %684 = vst.msk [vmem:[%s3 + $0x3c] sm:$0xf] %vm668, %v555
  %685 = vst.msk [vmem:[%s3 + $0x40] sm:$0xf] %vm668, %v556
  %686 = vst.msk [vmem:[%s3 + $0x44] sm:$0xf] %vm668, %v557
  %687 = vst.msk [vmem:[%s3 + $0x48] sm:$0xf] %vm668, %v558
  %688 = vst.msk [vmem:[%s3 + $0x4c] sm:$0xf] %vm668, %v559
  %689 = vst.msk [vmem:[%s3 + $0x50] sm:$0xf] %vm668, %v560
  %690 = vst.msk [vmem:[%s3 + $0x54] sm:$0xf] %vm668, %v561
  %691 = vst.msk [vmem:[%s3 + $0x58] sm:$0xf] %vm668, %v562
  %692 = vst.msk [vmem:[%s3 + $0x5c] sm:$0xf] %vm668, %v563
  %693 = vst.msk [vmem:[%s3 + $0x60] sm:$0xf] %vm668, %v564
  %694 = vst.msk [vmem:[%s3 + $0x64] sm:$0xf] %vm668, %v565
  %695 = vst.msk [vmem:[%s3 + $0x68] sm:$0xf] %vm668, %v566
  %696 = vst.msk [vmem:[%s3 + $0x6c] sm:$0xf] %vm668, %v567
  %697 = vst.msk [vmem:[%s3 + $0x70] sm:$0xf] %vm668, %v568
  %698 = vst.msk [vmem:[%s3 + $0x74] sm:$0xf] %vm668, %v569
  %699 = vst.msk [vmem:[%s3 + $0x78] sm:$0xf] %vm668, %v570
  %700 = vst.msk [vmem:[%s3 + $0x7c] sm:$0xf] %vm668, %v571
  %701 = vst.msk [vmem:[%s3 + $0x80] sm:$0xf] %vm668, %v572
  %702 = vst.msk [vmem:[%s3 + $0x84] sm:$0xf] %vm668, %v573
  %703 = vst.msk [vmem:[%s3 + $0x88] sm:$0xf] %vm668, %v574
  %704 = vst.msk [vmem:[%s3 + $0x8c] sm:$0xf] %vm668, %v575
  %705 = vst.msk [vmem:[%s3 + $0x90] sm:$0xf] %vm668, %v576
  %706 = vst.msk [vmem:[%s3 + $0x94] sm:$0xf] %vm668, %v577
  %707 = vst.msk [vmem:[%s3 + $0x98] sm:$0xf] %vm668, %v578
  %708 = vst.msk [vmem:[%s3 + $0x9c] sm:$0xf] %vm668, %v579
  %709 = vst.msk [vmem:[%s3 + $0xa0] sm:$0xf] %vm668, %v580
  %710 = vst.msk [vmem:[%s3 + $0xa4] sm:$0xf] %vm668, %v581
  %711 = vst.msk [vmem:[%s3 + $0xa8] sm:$0xf] %vm668, %v582
  %712 = vst.msk [vmem:[%s3 + $0xac] sm:$0xf] %vm668, %v583
  %713 = vst.msk [vmem:[%s3 + $0xb0] sm:$0xf] %vm668, %v584
  %714 = vst.msk [vmem:[%s3 + $0xb4] sm:$0xf] %vm668, %v585
  %715 = vst.msk [vmem:[%s3 + $0xb8] sm:$0xf] %vm668, %v586
  %716 = vst.msk [vmem:[%s3 + $0xbc] sm:$0xf] %vm668, %v587
  %717 = vst.msk [vmem:[%s3 + $0xc0] sm:$0xf] %vm668, %v588
  %718 = vst.msk [vmem:[%s3 + $0xc4] sm:$0xf] %vm668, %v589
  %719 = vst.msk [vmem:[%s3 + $0xc8] sm:$0xf] %vm668, %v590
  %720 = vst.msk [vmem:[%s3 + $0xcc] sm:$0xf] %vm668, %v591
  %721 = vst.msk [vmem:[%s3 + $0xd0] sm:$0xf] %vm668, %v592
  %722 = vst.msk [vmem:[%s3 + $0xd4] sm:$0xf] %vm668, %v593
  %723 = vst.msk [vmem:[%s3 + $0xd8] sm:$0xf] %vm668, %v594
  %724 = vst.msk [vmem:[%s3 + $0xdc] sm:$0xf] %vm668, %v595
  %725 = vst.msk [vmem:[%s3 + $0xe0] sm:$0xf] %vm668, %v596
  %726 = vst.msk [vmem:[%s3 + $0xe4] sm:$0xf] %vm668, %v597
  %727 = vst.msk [vmem:[%s3 + $0xe8] sm:$0xf] %vm668, %v598
  %728 = vst.msk [vmem:[%s3 + $0xec] sm:$0xf] %vm668, %v599
  %729 = vst.msk [vmem:[%s3 + $0xf0] sm:$0xf] %vm668, %v600
  %730 = vst.msk [vmem:[%s3 + $0xf4] sm:$0xf] %vm668, %v601
  %731 = vst.msk [vmem:[%s3 + $0xf8] sm:$0xf] %vm668, %v602
  %732 = vst.msk [vmem:[%s3 + $0xfc] sm:$0xf] %vm668, %v603
  // Predicated region
  $region14: #{discriminator_forward.9} parent=0 // pred_check
    _
  $region15: #{discriminator_forward.9} parent=0 // pred_check_branch
    %734 = sbr.rel (0) target = $region17
  $region16: #{discriminator_forward.9} parent=0 // pred_region
    _
  $region17: #{discriminator_forward.9} parent=0 // pred_fallthru
    _
  // Predicated region
  $region18: #{discriminator_forward.9} parent=0 // pred_check
    _
  $region19: #{discriminator_forward.9} parent=0 // pred_check_branch
    %736 = sbr.rel (0) target = $region21
  $region20: #{discriminator_forward.9} parent=0 // pred_region
    _
  $region21: #{discriminator_forward.9} parent=0 // pred_fallthru
    _

// kernel: discriminator_forward.10
$region0: #{discriminator_forward.10}
  #allocation0 [shape = 'u32[]', space=smem, size = 0x4, offset = 0x4, fixed_abs, tag = 'smem constant byte address 0x4 - core index']
  #allocation1 [shape = 'u32[144,128]{1,0:T(1,128)}', space=vmem, size = 0x12000, scoped, tag = 'internal scratch']
  %s0 = inlined_call_operand.vmem [shape: bf16[128,256], index: 0, kind: input, shape index: {}]
  %s1 = inlined_call_operand.vmem [shape: bf16[256,32], index: 1, kind: input, shape index: {}]
  %s2 = inlined_call_operand.vmem [shape: f32[128,32], index: 2, kind: output, shape index: {0}]
  %s3 = inlined_call_operand.vmem [shape: f32[1,1,32], index: 3, kind: output, shape index: {1}]
  %s4 = inlined_call_operand.vmem [shape: f32[1,1,32], index: 4, kind: output, shape index: {2}]
  %5 = xla_tuple %s2, %s3, %s4
  %s6 = sld [smem:[#allocation0]]
  $region34: #{discriminator_forward.10} parent=0
    _
  %s8 = ssub.s32 1, %s6
  %s9 = scalar_select 0, %s8, %s6
  // Predicated region
  $region2: #{discriminator_forward.10} parent=0 // pred_check
    _
  $region3: #{discriminator_forward.10} parent=0 // pred_check_branch
    %11 = sbr.rel (0) target = $region5
  $region4: #{discriminator_forward.10} parent=0 // pred_region
    _
  $region5: #{discriminator_forward.10} parent=0 // pred_fallthru
    _
  // Predicated region
  $region6: #{discriminator_forward.10} parent=0 // pred_check
    _
  $region7: #{discriminator_forward.10} parent=0 // pred_check_branch
    %13 = sbr.rel (0) target = $region9
  $region8: #{discriminator_forward.10} parent=0 // pred_region
    _
  $region9: #{discriminator_forward.10} parent=0 // pred_fallthru
    _
  %v15 = vld [vmem:[%s0] sm:$0xff]
  %v16 = vld [vmem:[%s0 + $0x8] sm:$0xff]
  %v17 = vld [vmem:[%s0 + $0x10] sm:$0xff]
  %v18 = vld [vmem:[%s0 + $0x18] sm:$0xff]
  %v19 = vld [vmem:[%s0 + $0x20] sm:$0xff]
  %v20 = vld [vmem:[%s0 + $0x28] sm:$0xff]
  %v21 = vld [vmem:[%s0 + $0x30] sm:$0xff]
  %v22 = vld [vmem:[%s0 + $0x38] sm:$0xff]
  %v23 = vld [vmem:[%s0 + $0x40] sm:$0xff]
  %v24 = vld [vmem:[%s0 + $0x48] sm:$0xff]
  %v25 = vld [vmem:[%s0 + $0x50] sm:$0xff]
  %v26 = vld [vmem:[%s0 + $0x58] sm:$0xff]
  %v27 = vld [vmem:[%s0 + $0x60] sm:$0xff]
  %v28 = vld [vmem:[%s0 + $0x68] sm:$0xff]
  %v29 = vld [vmem:[%s0 + $0x70] sm:$0xff]
  %v30 = vld [vmem:[%s0 + $0x78] sm:$0xff]
  %v31 = vld [vmem:[%s1] sm:$0xf]
  %v32 = vld [vmem:[%s1 + $0x4] sm:$0xf]
  %v33 = vld [vmem:[%s1 + $0x8] sm:$0xf]
  %v34 = vld [vmem:[%s1 + $0xc] sm:$0xf]
  %v35 = vld [vmem:[%s1 + $0x10] sm:$0xf]
  %v36 = vld [vmem:[%s1 + $0x14] sm:$0xf]
  %v37 = vld [vmem:[%s1 + $0x18] sm:$0xf]
  %v38 = vld [vmem:[%s1 + $0x1c] sm:$0xf]
  %v39 = vld [vmem:[%s1 + $0x20] sm:$0xf]
  %v40 = vld [vmem:[%s1 + $0x24] sm:$0xf]
  %v41 = vld [vmem:[%s1 + $0x28] sm:$0xf]
  %v42 = vld [vmem:[%s1 + $0x2c] sm:$0xf]
  %v43 = vld [vmem:[%s1 + $0x30] sm:$0xf]
  %v44 = vld [vmem:[%s1 + $0x34] sm:$0xf]
  %v45 = vld [vmem:[%s1 + $0x38] sm:$0xf]
  %v46 = vld [vmem:[%s1 + $0x3c] sm:$0xf]
  %v47 = vld [vmem:[%s1 + $0x40] sm:$0xf]
  %v48 = vld [vmem:[%s1 + $0x44] sm:$0xf]
  %v49 = vld [vmem:[%s1 + $0x48] sm:$0xf]
  %v50 = vld [vmem:[%s1 + $0x4c] sm:$0xf]
  %v51 = vld [vmem:[%s1 + $0x50] sm:$0xf]
  %v52 = vld [vmem:[%s1 + $0x54] sm:$0xf]
  %v53 = vld [vmem:[%s1 + $0x58] sm:$0xf]
  %v54 = vld [vmem:[%s1 + $0x5c] sm:$0xf]
  %v55 = vld [vmem:[%s1 + $0x60] sm:$0xf]
  %v56 = vld [vmem:[%s1 + $0x64] sm:$0xf]
  %v57 = vld [vmem:[%s1 + $0x68] sm:$0xf]
  %v58 = vld [vmem:[%s1 + $0x6c] sm:$0xf]
  %v59 = vld [vmem:[%s1 + $0x70] sm:$0xf]
  %v60 = vld [vmem:[%s1 + $0x74] sm:$0xf]
  %v61 = vld [vmem:[%s1 + $0x78] sm:$0xf]
  %v62 = vld [vmem:[%s1 + $0x7c] sm:$0xf]
  %v79 = vunpack.c.l.b16 %v15
  %v80 = vunpack.c.h.b16 %v15
  %v81 = vunpack.c.l.b16 %v16
  %v82 = vunpack.c.h.b16 %v16
  %v83 = vunpack.c.l.b16 %v17
  %v84 = vunpack.c.h.b16 %v17
  %v85 = vunpack.c.l.b16 %v18
  %v86 = vunpack.c.h.b16 %v18
  %v87 = vunpack.c.l.b16 %v19
  %v88 = vunpack.c.h.b16 %v19
  %v89 = vunpack.c.l.b16 %v20
  %v90 = vunpack.c.h.b16 %v20
  %v91 = vunpack.c.l.b16 %v21
  %v92 = vunpack.c.h.b16 %v21
  %v93 = vunpack.c.l.b16 %v22
  %v94 = vunpack.c.h.b16 %v22
  %v95 = vunpack.c.l.b16 %v23
  %v96 = vunpack.c.h.b16 %v23
  %v97 = vunpack.c.l.b16 %v24
  %v98 = vunpack.c.h.b16 %v24
  %v99 = vunpack.c.l.b16 %v25
  %v100 = vunpack.c.h.b16 %v25
  %v101 = vunpack.c.l.b16 %v26
  %v102 = vunpack.c.h.b16 %v26
  %v103 = vunpack.c.l.b16 %v27
  %v104 = vunpack.c.h.b16 %v27
  %v105 = vunpack.c.l.b16 %v28
  %v106 = vunpack.c.h.b16 %v28
  %v107 = vunpack.c.l.b16 %v29
  %v108 = vunpack.c.h.b16 %v29
  %v109 = vunpack.c.l.b16 %v30
  %v110 = vunpack.c.h.b16 %v30
  %v111 = vpack.c.b16 %v81, %v79
  %v112 = vpack.c.b16 %v82, %v80
  %v113 = vpack.c.b16 %v85, %v83
  %v114 = vpack.c.b16 %v86, %v84
  %v115 = vpack.c.b16 %v89, %v87
  %v116 = vpack.c.b16 %v90, %v88
  %v117 = vpack.c.b16 %v93, %v91
  %v118 = vpack.c.b16 %v94, %v92
  %v119 = vpack.c.b16 %v97, %v95
  %v120 = vpack.c.b16 %v98, %v96
  %v121 = vpack.c.b16 %v101, %v99
  %v122 = vpack.c.b16 %v102, %v100
  %v123 = vpack.c.b16 %v105, %v103
  %v124 = vpack.c.b16 %v106, %v104
  %v125 = vpack.c.b16 %v109, %v107
  %v126 = vpack.c.b16 %v110, %v108
  %v175 = vunpack.c.l.b16 %v31
  %v176 = vunpack.c.l.b16 %v32
  %v177 = vunpack.c.l.b16 %v33
  %v178 = vunpack.c.l.b16 %v34
  %v179 = vunpack.c.l.b16 %v35
  %v180 = vunpack.c.l.b16 %v36
  %v181 = vunpack.c.l.b16 %v37
  %v182 = vunpack.c.l.b16 %v38
  %v183 = vunpack.c.l.b16 %v39
  %v184 = vunpack.c.l.b16 %v40
  %v185 = vunpack.c.l.b16 %v41
  %v186 = vunpack.c.l.b16 %v42
  %v187 = vunpack.c.l.b16 %v43
  %v188 = vunpack.c.l.b16 %v44
  %v189 = vunpack.c.l.b16 %v45
  %v190 = vunpack.c.l.b16 %v46
  %v191 = vunpack.c.l.b16 %v47
  %v192 = vunpack.c.l.b16 %v48
  %v193 = vunpack.c.l.b16 %v49
  %v194 = vunpack.c.l.b16 %v50
  %v195 = vunpack.c.l.b16 %v51
  %v196 = vunpack.c.l.b16 %v52
  %v197 = vunpack.c.l.b16 %v53
  %v198 = vunpack.c.l.b16 %v54
  %v199 = vunpack.c.l.b16 %v55
  %v200 = vunpack.c.l.b16 %v56
  %v201 = vunpack.c.l.b16 %v57
  %v202 = vunpack.c.l.b16 %v58
  %v203 = vunpack.c.l.b16 %v59
  %v204 = vunpack.c.l.b16 %v60
  %v205 = vunpack.c.l.b16 %v61
  %v206 = vunpack.c.l.b16 %v62
  %v207 = vpack.c.b16 %v176, %v175
  %v208 = vpack.c.b16 %v178, %v177
  %v209 = vpack.c.b16 %v180, %v179
  %v210 = vpack.c.b16 %v182, %v181
  %v211 = vpack.c.b16 %v184, %v183
  %v212 = vpack.c.b16 %v186, %v185
  %v213 = vpack.c.b16 %v188, %v187
  %v214 = vpack.c.b16 %v190, %v189
  %v215 = vpack.c.b16 %v192, %v191
  %v216 = vpack.c.b16 %v194, %v193
  %v217 = vpack.c.b16 %v196, %v195
  %v218 = vpack.c.b16 %v198, %v197
  %v219 = vpack.c.b16 %v200, %v199
  %v220 = vpack.c.b16 %v202, %v201
  %v221 = vpack.c.b16 %v204, %v203
  %v222 = vpack.c.b16 %v206, %v205
  %239 = vmatprep.subr.bf16.mxu0 0
  %240 = vmatpush1.bf16.msra.mxu0 %v207
  %241 = vmatprep.subr.bf16.mxu0 0
  %242 = vmatpush1.bf16.msra.mxu0 %v208
  %243 = vmatprep.subr.bf16.mxu0 0
  %244 = vmatpush1.bf16.msra.mxu0 %v209
  %245 = vmatprep.subr.bf16.mxu0 0
  %246 = vmatpush1.bf16.msra.mxu0 %v210
  %247 = vmatprep.subr.bf16.mxu0 0
  %248 = vmatpush1.bf16.msra.mxu0 %v211
  %249 = vmatprep.subr.bf16.mxu0 0
  %250 = vmatpush1.bf16.msra.mxu0 %v212
  %251 = vmatprep.subr.bf16.mxu0 0
  %252 = vmatpush1.bf16.msra.mxu0 %v213
  %253 = vmatprep.subr.bf16.mxu0 0
  %254 = vmatpush1.bf16.msra.mxu0 %v214
  %255 = vmatprep.subr.bf16.mxu0 0
  %256 = vmatpush1.bf16.msra.mxu0 %v215
  %257 = vmatprep.subr.bf16.mxu0 0
  %258 = vmatpush1.bf16.msra.mxu0 %v216
  %259 = vmatprep.subr.bf16.mxu0 0
  %260 = vmatpush1.bf16.msra.mxu0 %v217
  %261 = vmatprep.subr.bf16.mxu0 0
  %262 = vmatpush1.bf16.msra.mxu0 %v218
  %263 = vmatprep.subr.bf16.mxu0 0
  %264 = vmatpush1.bf16.msra.mxu0 %v219
  %265 = vmatprep.subr.bf16.mxu0 0
  %266 = vmatpush1.bf16.msra.mxu0 %v220
  %267 = vmatprep.subr.bf16.mxu0 0
  %268 = vmatpush1.bf16.msra.mxu0 %v221
  %269 = vmatprep.subr.bf16.mxu0 0
  %270 = vmatpush1.bf16.msra.mxu0 %v222
  %271 = vmatprep.mubr.bf16.mxu0 %v112
  %272 = vmatmul.mubr.bf16.gmra.mrb[0].mxu0 %v111
  %v273 = vpop.f32.mrb[0].mxu0
  %v274 = vadd.f32 0.0, %v273
  %v275 = vpop.f32.mrb[0].mxu0
  %v276 = vpop.f32.mrb[0].mxu0
  %v277 = vadd.f32 0.0, %v276
  %v278 = vpop.f32.mrb[0].mxu0
  %279 = vmatprep.mubr.bf16.mxu0 %v114
  %280 = vmatmul.mubr.bf16.gmra.mrb[0].mxu0 %v113
  %v281 = vpop.f32.mrb[0].mxu0
  %v282 = vadd.f32 0.0, %v281
  %v283 = vpop.f32.mrb[0].mxu0
  %v284 = vpop.f32.mrb[0].mxu0
  %v285 = vadd.f32 0.0, %v284
  %v286 = vpop.f32.mrb[0].mxu0
  %287 = vmatprep.mubr.bf16.mxu0 %v116
  %288 = vmatmul.mubr.bf16.gmra.mrb[0].mxu0 %v115
  %v289 = vpop.f32.mrb[0].mxu0
  %v290 = vadd.f32 0.0, %v289
  %v291 = vpop.f32.mrb[0].mxu0
  %v292 = vpop.f32.mrb[0].mxu0
  %v293 = vadd.f32 0.0, %v292
  %v294 = vpop.f32.mrb[0].mxu0
  %295 = vmatprep.mubr.bf16.mxu0 %v118
  %296 = vmatmul.mubr.bf16.gmra.mrb[0].mxu0 %v117
  %v297 = vpop.f32.mrb[0].mxu0
  %v298 = vadd.f32 0.0, %v297
  %v299 = vpop.f32.mrb[0].mxu0
  %v300 = vpop.f32.mrb[0].mxu0
  %v301 = vadd.f32 0.0, %v300
  %v302 = vpop.f32.mrb[0].mxu0
  %303 = vmatprep.mubr.bf16.mxu0 %v120
  %304 = vmatmul.mubr.bf16.gmra.mrb[0].mxu0 %v119
  %v305 = vpop.f32.mrb[0].mxu0
  %v306 = vadd.f32 0.0, %v305
  %v307 = vpop.f32.mrb[0].mxu0
  %v308 = vpop.f32.mrb[0].mxu0
  %v309 = vadd.f32 0.0, %v308
  %v310 = vpop.f32.mrb[0].mxu0
  %311 = vmatprep.mubr.bf16.mxu0 %v122
  %312 = vmatmul.mubr.bf16.gmra.mrb[0].mxu0 %v121
  %v313 = vpop.f32.mrb[0].mxu0
  %v314 = vadd.f32 0.0, %v313
  %v315 = vpop.f32.mrb[0].mxu0
  %v316 = vpop.f32.mrb[0].mxu0
  %v317 = vadd.f32 0.0, %v316
  %v318 = vpop.f32.mrb[0].mxu0
  %319 = vmatprep.mubr.bf16.mxu0 %v124
  %320 = vmatmul.mubr.bf16.gmra.mrb[0].mxu0 %v123
  %v321 = vpop.f32.mrb[0].mxu0
  %v322 = vadd.f32 0.0, %v321
  %v323 = vpop.f32.mrb[0].mxu0
  %v324 = vpop.f32.mrb[0].mxu0
  %v325 = vadd.f32 0.0, %v324
  %v326 = vpop.f32.mrb[0].mxu0
  %327 = vmatprep.mubr.bf16.mxu0 %v126
  %328 = vmatmul.mubr.bf16.gmra.mrb[0].mxu0 %v125
  %v329 = vpop.f32.mrb[0].mxu0
  %v330 = vadd.f32 0.0, %v329
  %v331 = vpop.f32.mrb[0].mxu0
  %v332 = vpop.f32.mrb[0].mxu0
  %v333 = vadd.f32 0.0, %v332
  %v334 = vpop.f32.mrb[0].mxu0
  %335 = vdwg.mxu0
  %vm336 = vcmask 261120
  %337 = vst.msk [vmem:[%s2] sm:$0xff] %vm336, %v274
  %338 = vst.msk [vmem:[%s2 + $0x8] sm:$0xff] %vm336, %v277
  %339 = vst.msk [vmem:[%s2 + $0x10] sm:$0xff] %vm336, %v282
  %340 = vst.msk [vmem:[%s2 + $0x18] sm:$0xff] %vm336, %v285
  %341 = vst.msk [vmem:[%s2 + $0x20] sm:$0xff] %vm336, %v290
  %342 = vst.msk [vmem:[%s2 + $0x28] sm:$0xff] %vm336, %v293
  %343 = vst.msk [vmem:[%s2 + $0x30] sm:$0xff] %vm336, %v298
  %344 = vst.msk [vmem:[%s2 + $0x38] sm:$0xff] %vm336, %v301
  %345 = vst.msk [vmem:[%s2 + $0x40] sm:$0xff] %vm336, %v306
  %346 = vst.msk [vmem:[%s2 + $0x48] sm:$0xff] %vm336, %v309
  %347 = vst.msk [vmem:[%s2 + $0x50] sm:$0xff] %vm336, %v314
  %348 = vst.msk [vmem:[%s2 + $0x58] sm:$0xff] %vm336, %v317
  %349 = vst.msk [vmem:[%s2 + $0x60] sm:$0xff] %vm336, %v322
  %350 = vst.msk [vmem:[%s2 + $0x68] sm:$0xff] %vm336, %v325
  %351 = vst.msk [vmem:[%s2 + $0x70] sm:$0xff] %vm336, %v330
  %352 = vst.msk [vmem:[%s2 + $0x78] sm:$0xff] %vm336, %v333
  %v353 = vlaneseq
  %v354 = vshrl.u32 %v353, 7
  %v355 = vadd.s32 %v354, 8
  %v356 = vadd.s32 %v354, 16
  %v357 = vadd.s32 %v354, 24
  %v358 = vadd.s32 %v354, 32
  %v359 = vadd.s32 %v354, 40
  %v360 = vadd.s32 %v354, 48
  %v361 = vadd.s32 %v354, 56
  %v362 = vadd.s32 %v354, 64
  %v363 = vadd.s32 %v354, 72
  %v364 = vadd.s32 %v354, 80
  %v365 = vadd.s32 %v354, 88
  %v366 = vadd.s32 %v354, 96
  %v367 = vadd.s32 %v354, 104
  %v368 = vadd.s32 %v354, 112
  %v369 = vadd.s32 %v354, 120
  %s370 = smul.u32 0, 128
  %v371 = vstv %s370
  %v372 = vadd.s32 %v354, %v371
  %v373 = vadd.s32 %v355, %v371
  %v374 = vadd.s32 %v356, %v371
  %v375 = vadd.s32 %v357, %v371
  %v376 = vadd.s32 %v358, %v371
  %v377 = vadd.s32 %v359, %v371
  %v378 = vadd.s32 %v360, %v371
  %v379 = vadd.s32 %v361, %v371
  %v380 = vadd.s32 %v362, %v371
  %v381 = vadd.s32 %v363, %v371
  %v382 = vadd.s32 %v364, %v371
  %v383 = vadd.s32 %v365, %v371
  %v384 = vadd.s32 %v366, %v371
  %v385 = vadd.s32 %v367, %v371
  %v386 = vadd.s32 %v368, %v371
  %v387 = vadd.s32 %v369, %v371
  %vm388 = vcmp.lt.s32.totalorder %v372, 128
  %vm389 = vcmp.lt.s32.totalorder %v373, 128
  %vm390 = vcmp.lt.s32.totalorder %v374, 128
  %vm391 = vcmp.lt.s32.totalorder %v375, 128
  %vm392 = vcmp.lt.s32.totalorder %v376, 128
  %vm393 = vcmp.lt.s32.totalorder %v377, 128
  %vm394 = vcmp.lt.s32.totalorder %v378, 128
  %vm395 = vcmp.lt.s32.totalorder %v379, 128
  %vm396 = vcmp.lt.s32.totalorder %v380, 128
  %vm397 = vcmp.lt.s32.totalorder %v381, 128
  %vm398 = vcmp.lt.s32.totalorder %v382, 128
  %vm399 = vcmp.lt.s32.totalorder %v383, 128
  %vm400 = vcmp.lt.s32.totalorder %v384, 128
  %vm401 = vcmp.lt.s32.totalorder %v385, 128
  %vm402 = vcmp.lt.s32.totalorder %v386, 128
  %vm403 = vcmp.lt.s32.totalorder %v387, 128
  %v404 = vsel %vm388, %v274, 0.0
  %v405 = vsel %vm389, %v277, 0.0
  %v406 = vsel %vm390, %v282, 0.0
  %v407 = vsel %vm391, %v285, 0.0
  %v408 = vsel %vm392, %v290, 0.0
  %v409 = vsel %vm393, %v293, 0.0
  %v410 = vsel %vm394, %v298, 0.0
  %v411 = vsel %vm395, %v301, 0.0
  %v412 = vsel %vm396, %v306, 0.0
  %v413 = vsel %vm397, %v309, 0.0
  %v414 = vsel %vm398, %v314, 0.0
  %v415 = vsel %vm399, %v317, 0.0
  %v416 = vsel %vm400, %v322, 0.0
  %v417 = vsel %vm401, %v325, 0.0
  %v418 = vsel %vm402, %v330, 0.0
  %v419 = vsel %vm403, %v333, 0.0
  %v420 = vsel %vm336, %v404, 0.0
  %v421 = vsel %vm336, %v405, 0.0
  %v422 = vadd.f32 %v420, %v421
  %v423 = vsel %vm336, %v406, 0.0
  %v424 = vadd.f32 %v422, %v423
  %v425 = vsel %vm336, %v407, 0.0
  %v426 = vadd.f32 %v424, %v425
  %v427 = vsel %vm336, %v408, 0.0
  %v428 = vadd.f32 %v426, %v427
  %v429 = vsel %vm336, %v409, 0.0
  %v430 = vadd.f32 %v428, %v429
  %v431 = vsel %vm336, %v410, 0.0
  %v432 = vadd.f32 %v430, %v431
  %v433 = vsel %vm336, %v411, 0.0
  %v434 = vadd.f32 %v432, %v433
  %v435 = vsel %vm336, %v412, 0.0
  %v436 = vadd.f32 %v434, %v435
  %v437 = vsel %vm336, %v413, 0.0
  %v438 = vadd.f32 %v436, %v437
  %v439 = vsel %vm336, %v414, 0.0
  %v440 = vadd.f32 %v438, %v439
  %v441 = vsel %vm336, %v415, 0.0
  %v442 = vadd.f32 %v440, %v441
  %v443 = vsel %vm336, %v416, 0.0
  %v444 = vadd.f32 %v442, %v443
  %v445 = vsel %vm336, %v417, 0.0
  %v446 = vadd.f32 %v444, %v445
  %v447 = vsel %vm336, %v418, 0.0
  %v448 = vadd.f32 %v446, %v447
  %v449 = vsel %vm336, %v419, 0.0
  %v450 = vadd.f32 %v448, %v449
  %v451 = vrot.slane %v450, 4
  %v452 = vadd.f32 %v450, %v451
  %v453 = vrot.slane %v452, 2
  %v454 = vadd.f32 %v452, %v453
  %v455 = vrot.slane %v454, 1
  %v456 = vadd.f32 %v454, %v455
  %vm457 = vcmask 253952
  %458 = vst.msk [vmem:[%s3] sm:$0x1] %vm457, %v456
  %v459 = vmul.f32 %v404, %v404
  %v460 = vmul.f32 %v405, %v405
  %v461 = vmul.f32 %v406, %v406
  %v462 = vmul.f32 %v407, %v407
  %v463 = vmul.f32 %v408, %v408
  %v464 = vmul.f32 %v409, %v409
  %v465 = vmul.f32 %v410, %v410
  %v466 = vmul.f32 %v411, %v411
  %v467 = vmul.f32 %v412, %v412
  %v468 = vmul.f32 %v413, %v413
  %v469 = vmul.f32 %v414, %v414
  %v470 = vmul.f32 %v415, %v415
  %v471 = vmul.f32 %v416, %v416
  %v472 = vmul.f32 %v417, %v417
  %v473 = vmul.f32 %v418, %v418
  %v474 = vmul.f32 %v419, %v419
  %v475 = vsel %vm336, %v459, 0.0
  %v476 = vsel %vm336, %v460, 0.0
  %v477 = vadd.f32 %v475, %v476
  %v478 = vsel %vm336, %v461, 0.0
  %v479 = vadd.f32 %v477, %v478
  %v480 = vsel %vm336, %v462, 0.0
  %v481 = vadd.f32 %v479, %v480
  %v482 = vsel %vm336, %v463, 0.0
  %v483 = vadd.f32 %v481, %v482
  %v484 = vsel %vm336, %v464, 0.0
  %v485 = vadd.f32 %v483, %v484
  %v486 = vsel %vm336, %v465, 0.0
  %v487 = vadd.f32 %v485, %v486
  %v488 = vsel %vm336, %v466, 0.0
  %v489 = vadd.f32 %v487, %v488
  %v490 = vsel %vm336, %v467, 0.0
  %v491 = vadd.f32 %v489, %v490
  %v492 = vsel %vm336, %v468, 0.0
  %v493 = vadd.f32 %v491, %v492
  %v494 = vsel %vm336, %v469, 0.0
  %v495 = vadd.f32 %v493, %v494
  %v496 = vsel %vm336, %v470, 0.0
  %v497 = vadd.f32 %v495, %v496
  %v498 = vsel %vm336, %v471, 0.0
  %v499 = vadd.f32 %v497, %v498
  %v500 = vsel %vm336, %v472, 0.0
  %v501 = vadd.f32 %v499, %v500
  %v502 = vsel %vm336, %v473, 0.0
  %v503 = vadd.f32 %v501, %v502
  %v504 = vsel %vm336, %v474, 0.0
  %v505 = vadd.f32 %v503, %v504
  %v506 = vrot.slane %v505, 4
  %v507 = vadd.f32 %v505, %v506
  %v508 = vrot.slane %v507, 2
  %v509 = vadd.f32 %v507, %v508
  %v510 = vrot.slane %v509, 1
  %v511 = vadd.f32 %v509, %v510
  %512 = vst.msk [vmem:[%s4] sm:$0x1] %vm457, %v511
  // Predicated region
  $region10: #{discriminator_forward.10} parent=0 // pred_check
    _
  $region11: #{discriminator_forward.10} parent=0 // pred_check_branch
    %514 = sbr.rel (0) target = $region13
  $region12: #{discriminator_forward.10} parent=0 // pred_region
    _
  $region13: #{discriminator_forward.10} parent=0 // pred_fallthru
    _
  // Predicated region
  $region14: #{discriminator_forward.10} parent=0 // pred_check
    _
  $region15: #{discriminator_forward.10} parent=0 // pred_check_branch
    %516 = sbr.rel (0) target = $region17
  $region16: #{discriminator_forward.10} parent=0 // pred_region
    _
  $region17: #{discriminator_forward.10} parent=0 // pred_fallthru
    _
  // Predicated region
  $region18: #{discriminator_forward.10} parent=0 // pred_check
    _
  $region19: #{discriminator_forward.10} parent=0 // pred_check_branch
    %518 = sbr.rel (0) target = $region21
  $region20: #{discriminator_forward.10} parent=0 // pred_region
    _
  $region21: #{discriminator_forward.10} parent=0 // pred_fallthru
    _
  // Predicated region
  $region22: #{discriminator_forward.10} parent=0 // pred_check
    _
  $region23: #{discriminator_forward.10} parent=0 // pred_check_branch
    %520 = sbr.rel (0) target = $region25
  $region24: #{discriminator_forward.10} parent=0 // pred_region
    _
  $region25: #{discriminator_forward.10} parent=0 // pred_fallthru
    _
  // Predicated region
  $region26: #{discriminator_forward.10} parent=0 // pred_check
    _
  $region27: #{discriminator_forward.10} parent=0 // pred_check_branch
    %522 = sbr.rel (0) target = $region29
  $region28: #{discriminator_forward.10} parent=0 // pred_region
    _
  $region29: #{discriminator_forward.10} parent=0 // pred_fallthru
    _
  // Predicated region
  $region30: #{discriminator_forward.10} parent=0 // pred_check
    _
  $region31: #{discriminator_forward.10} parent=0 // pred_check_branch
    %524 = sbr.rel (0) target = $region33
  $region32: #{discriminator_forward.10} parent=0 // pred_region
    _
  $region33: #{discriminator_forward.10} parent=0 // pred_fallthru
    _

// kernel: discriminator_forward.11
$region0: #{discriminator_forward.11}
  #allocation0 [shape = 'u32[]', space=smem, size = 0x4, offset = 0x4, fixed_abs, tag = 'smem constant byte address 0x4 - core index']
  #allocation1 [shape = 'u32[144,128]{1,0:T(1,128)}', space=vmem, size = 0x12000, scoped, tag = 'internal scratch']
  %s0 = inlined_call_operand.vmem [shape: f32[128,32], index: 0, kind: input, shape index: {}]
  %s1 = inlined_call_operand.vmem [shape: f32[1,32], index: 1, kind: input, shape index: {}]
  %s2 = inlined_call_operand.vmem [shape: f32[1,32], index: 2, kind: input, shape index: {}]
  %s3 = inlined_call_operand.vmem [shape: bf16[128,32], index: 3, kind: output, shape index: {}]
  %s4 = sld [smem:[#allocation0]]
  $region22: #{discriminator_forward.11} parent=0
    _
  %s6 = ssub.s32 1, %s4
  %s7 = scalar_select 0, %s6, %s4
  // Predicated region
  $region2: #{discriminator_forward.11} parent=0 // pred_check
    _
  $region3: #{discriminator_forward.11} parent=0 // pred_check_branch
    %9 = sbr.rel (0) target = $region5
  $region4: #{discriminator_forward.11} parent=0 // pred_region
    _
  $region5: #{discriminator_forward.11} parent=0 // pred_fallthru
    _
  // Predicated region
  $region6: #{discriminator_forward.11} parent=0 // pred_check
    _
  $region7: #{discriminator_forward.11} parent=0 // pred_check_branch
    %11 = sbr.rel (0) target = $region9
  $region8: #{discriminator_forward.11} parent=0 // pred_region
    _
  $region9: #{discriminator_forward.11} parent=0 // pred_fallthru
    _
  // Predicated region
  $region10: #{discriminator_forward.11} parent=0 // pred_check
    _
  $region11: #{discriminator_forward.11} parent=0 // pred_check_branch
    %13 = sbr.rel (0) target = $region13
  $region12: #{discriminator_forward.11} parent=0 // pred_region
    _
  $region13: #{discriminator_forward.11} parent=0 // pred_fallthru
    _
  %v14 = vld [vmem:[%s0] sm:$0xff]
  %v15 = vld [vmem:[%s0 + $0x8] sm:$0xff]
  %v16 = vld [vmem:[%s0 + $0x10] sm:$0xff]
  %v17 = vld [vmem:[%s0 + $0x18] sm:$0xff]
  %v18 = vld [vmem:[%s0 + $0x20] sm:$0xff]
  %v19 = vld [vmem:[%s0 + $0x28] sm:$0xff]
  %v20 = vld [vmem:[%s0 + $0x30] sm:$0xff]
  %v21 = vld [vmem:[%s0 + $0x38] sm:$0xff]
  %v22 = vld [vmem:[%s0 + $0x40] sm:$0xff]
  %v23 = vld [vmem:[%s0 + $0x48] sm:$0xff]
  %v24 = vld [vmem:[%s0 + $0x50] sm:$0xff]
  %v25 = vld [vmem:[%s0 + $0x58] sm:$0xff]
  %v26 = vld [vmem:[%s0 + $0x60] sm:$0xff]
  %v27 = vld [vmem:[%s0 + $0x68] sm:$0xff]
  %v28 = vld [vmem:[%s0 + $0x70] sm:$0xff]
  %v29 = vld [vmem:[%s0 + $0x78] sm:$0xff]
  %v30 = vld [vmem:[%s1] sm:$0x1]
  %v32 = vlaneseq
  %v33 = vshrl.u32 %v32, 7
  %v34 = vsub.s32 0, %v33
  %v35 = vrot.slane %v30, %v34
  %v37 = vmul.f32 %v14, %v35
  %v38 = vmul.f32 %v15, %v35
  %v39 = vmul.f32 %v16, %v35
  %v40 = vmul.f32 %v17, %v35
  %v41 = vmul.f32 %v18, %v35
  %v42 = vmul.f32 %v19, %v35
  %v43 = vmul.f32 %v20, %v35
  %v44 = vmul.f32 %v21, %v35
  %v45 = vmul.f32 %v22, %v35
  %v46 = vmul.f32 %v23, %v35
  %v47 = vmul.f32 %v24, %v35
  %v48 = vmul.f32 %v25, %v35
  %v49 = vmul.f32 %v26, %v35
  %v50 = vmul.f32 %v27, %v35
  %v51 = vmul.f32 %v28, %v35
  %v52 = vmul.f32 %v29, %v35
  %v53 = vld [vmem:[%s2] sm:$0x1]
  %v55 = vlaneseq
  %v56 = vshrl.u32 %v55, 7
  %v57 = vsub.s32 0, %v56
  %v58 = vrot.slane %v53, %v57
  %v60 = vadd.f32 %v37, %v58
  %v61 = vadd.f32 %v38, %v58
  %v62 = vadd.f32 %v39, %v58
  %v63 = vadd.f32 %v40, %v58
  %v64 = vadd.f32 %v41, %v58
  %v65 = vadd.f32 %v42, %v58
  %v66 = vadd.f32 %v43, %v58
  %v67 = vadd.f32 %v44, %v58
  %v68 = vadd.f32 %v45, %v58
  %v69 = vadd.f32 %v46, %v58
  %v70 = vadd.f32 %v47, %v58
  %v71 = vadd.f32 %v48, %v58
  %v72 = vadd.f32 %v49, %v58
  %v73 = vadd.f32 %v50, %v58
  %v74 = vadd.f32 %v51, %v58
  %v75 = vadd.f32 %v52, %v58
  %vm76 = vcmp.ge.f32.partialorder %v60, 0.0
  %vm77 = vcmp.ge.f32.partialorder %v61, 0.0
  %vm78 = vcmp.ge.f32.partialorder %v62, 0.0
  %vm79 = vcmp.ge.f32.partialorder %v63, 0.0
  %vm80 = vcmp.ge.f32.partialorder %v64, 0.0
  %vm81 = vcmp.ge.f32.partialorder %v65, 0.0
  %vm82 = vcmp.ge.f32.partialorder %v66, 0.0
  %vm83 = vcmp.ge.f32.partialorder %v67, 0.0
  %vm84 = vcmp.ge.f32.partialorder %v68, 0.0
  %vm85 = vcmp.ge.f32.partialorder %v69, 0.0
  %vm86 = vcmp.ge.f32.partialorder %v70, 0.0
  %vm87 = vcmp.ge.f32.partialorder %v71, 0.0
  %vm88 = vcmp.ge.f32.partialorder %v72, 0.0
  %vm89 = vcmp.ge.f32.partialorder %v73, 0.0
  %vm90 = vcmp.ge.f32.partialorder %v74, 0.0
  %vm91 = vcmp.ge.f32.partialorder %v75, 0.0
  %v92 = vmul.f32 %v60, 0.2
  %v93 = vmul.f32 %v61, 0.2
  %v94 = vmul.f32 %v62, 0.2
  %v95 = vmul.f32 %v63, 0.2
  %v96 = vmul.f32 %v64, 0.2
  %v97 = vmul.f32 %v65, 0.2
  %v98 = vmul.f32 %v66, 0.2
  %v99 = vmul.f32 %v67, 0.2
  %v100 = vmul.f32 %v68, 0.2
  %v101 = vmul.f32 %v69, 0.2
  %v102 = vmul.f32 %v70, 0.2
  %v103 = vmul.f32 %v71, 0.2
  %v104 = vmul.f32 %v72, 0.2
  %v105 = vmul.f32 %v73, 0.2
  %v106 = vmul.f32 %v74, 0.2
  %v107 = vmul.f32 %v75, 0.2
  %v108 = vsel %vm76, %v60, %v92
  %v109 = vsel %vm77, %v61, %v93
  %v110 = vsel %vm78, %v62, %v94
  %v111 = vsel %vm79, %v63, %v95
  %v112 = vsel %vm80, %v64, %v96
  %v113 = vsel %vm81, %v65, %v97
  %v114 = vsel %vm82, %v66, %v98
  %v115 = vsel %vm83, %v67, %v99
  %v116 = vsel %vm84, %v68, %v100
  %v117 = vsel %vm85, %v69, %v101
  %v118 = vsel %vm86, %v70, %v102
  %v119 = vsel %vm87, %v71, %v103
  %v120 = vsel %vm88, %v72, %v104
  %v121 = vsel %vm89, %v73, %v105
  %v122 = vsel %vm90, %v74, %v106
  %v123 = vsel %vm91, %v75, %v107
  %v124 = vpack.c.bf16 %v109, %v108
  %v125 = vpack.c.bf16 %v111, %v110
  %v126 = vpack.c.bf16 %v113, %v112
  %v127 = vpack.c.bf16 %v115, %v114
  %v128 = vpack.c.bf16 %v117, %v116
  %v129 = vpack.c.bf16 %v119, %v118
  %v130 = vpack.c.bf16 %v121, %v120
  %v131 = vpack.c.bf16 %v123, %v122
  %v140 = vunpack.c.l.b16 %v124
  %v141 = vunpack.c.h.b16 %v124
  %v142 = vunpack.c.l.b16 %v125
  %v143 = vunpack.c.h.b16 %v125
  %v144 = vunpack.c.l.b16 %v126
  %v145 = vunpack.c.h.b16 %v126
  %v146 = vunpack.c.l.b16 %v127
  %v147 = vunpack.c.h.b16 %v127
  %v148 = vunpack.c.l.b16 %v128
  %v149 = vunpack.c.h.b16 %v128
  %v150 = vunpack.c.l.b16 %v129
  %v151 = vunpack.c.h.b16 %v129
  %v152 = vunpack.c.l.b16 %v130
  %v153 = vunpack.c.h.b16 %v130
  %v154 = vunpack.c.l.b16 %v131
  %v155 = vunpack.c.h.b16 %v131
  %v156 = vpack.c.b16 %v140, %v140
  %v157 = vpack.c.b16 %v141, %v141
  %v158 = vpack.c.b16 %v142, %v142
  %v159 = vpack.c.b16 %v143, %v143
  %v160 = vpack.c.b16 %v144, %v144
  %v161 = vpack.c.b16 %v145, %v145
  %v162 = vpack.c.b16 %v146, %v146
  %v163 = vpack.c.b16 %v147, %v147
  %v164 = vpack.c.b16 %v148, %v148
  %v165 = vpack.c.b16 %v149, %v149
  %v166 = vpack.c.b16 %v150, %v150
  %v167 = vpack.c.b16 %v151, %v151
  %v168 = vpack.c.b16 %v152, %v152
  %v169 = vpack.c.b16 %v153, %v153
  %v170 = vpack.c.b16 %v154, %v154
  %v171 = vpack.c.b16 %v155, %v155
  %vm188 = vcmask 257024
  %189 = vst.msk [vmem:[%s3] sm:$0xf] %vm188, %v156
  %190 = vst.msk [vmem:[%s3 + $0x4] sm:$0xf] %vm188, %v157
  %191 = vst.msk [vmem:[%s3 + $0x8] sm:$0xf] %vm188, %v158
  %192 = vst.msk [vmem:[%s3 + $0xc] sm:$0xf] %vm188, %v159
  %193 = vst.msk [vmem:[%s3 + $0x10] sm:$0xf] %vm188, %v160
  %194 = vst.msk [vmem:[%s3 + $0x14] sm:$0xf] %vm188, %v161
  %195 = vst.msk [vmem:[%s3 + $0x18] sm:$0xf] %vm188, %v162
  %196 = vst.msk [vmem:[%s3 + $0x1c] sm:$0xf] %vm188, %v163
  %197 = vst.msk [vmem:[%s3 + $0x20] sm:$0xf] %vm188, %v164
  %198 = vst.msk [vmem:[%s3 + $0x24] sm:$0xf] %vm188, %v165
  %199 = vst.msk [vmem:[%s3 + $0x28] sm:$0xf] %vm188, %v166
  %200 = vst.msk [vmem:[%s3 + $0x2c] sm:$0xf] %vm188, %v167
  %201 = vst.msk [vmem:[%s3 + $0x30] sm:$0xf] %vm188, %v168
  %202 = vst.msk [vmem:[%s3 + $0x34] sm:$0xf] %vm188, %v169
  %203 = vst.msk [vmem:[%s3 + $0x38] sm:$0xf] %vm188, %v170
  %204 = vst.msk [vmem:[%s3 + $0x3c] sm:$0xf] %vm188, %v171
  // Predicated region
  $region14: #{discriminator_forward.11} parent=0 // pred_check
    _
  $region15: #{discriminator_forward.11} parent=0 // pred_check_branch
    %206 = sbr.rel (0) target = $region17
  $region16: #{discriminator_forward.11} parent=0 // pred_region
    _
  $region17: #{discriminator_forward.11} parent=0 // pred_fallthru
    _
  // Predicated region
  $region18: #{discriminator_forward.11} parent=0 // pred_check
    _
  $region19: #{discriminator_forward.11} parent=0 // pred_check_branch
    %208 = sbr.rel (0) target = $region21
  $region20: #{discriminator_forward.11} parent=0 // pred_region
    _
  $region21: #{discriminator_forward.11} parent=0 // pred_fallthru
    _

// kernel: discriminator_forward.12
$region0: #{discriminator_forward.12}
  #allocation0 [shape = 'u32[]', space=smem, size = 0x4, offset = 0x4, fixed_abs, tag = 'smem constant byte address 0x4 - core index']
  #allocation1 [shape = 'u32[144,128]{1,0:T(1,128)}', space=vmem, size = 0x12000, scoped, tag = 'internal scratch']
  %s0 = inlined_call_operand.vmem [shape: bf16[32,512], index: 0, kind: input, shape index: {}]
  %s1 = inlined_call_operand.vmem [shape: bf16[512,64], index: 1, kind: input, shape index: {}]
  %s2 = inlined_call_operand.vmem [shape: f32[32,64], index: 2, kind: output, shape index: {0}]
  %s3 = inlined_call_operand.vmem [shape: f32[1,1,64], index: 3, kind: output, shape index: {1}]
  %s4 = inlined_call_operand.vmem [shape: f32[1,1,64], index: 4, kind: output, shape index: {2}]
  %5 = xla_tuple %s2, %s3, %s4
  %s6 = sld [smem:[#allocation0]]
  $region34: #{discriminator_forward.12} parent=0
    _
  %s8 = ssub.s32 1, %s6
  %s9 = scalar_select 0, %s8, %s6
  // Predicated region
  $region2: #{discriminator_forward.12} parent=0 // pred_check
    _
  $region3: #{discriminator_forward.12} parent=0 // pred_check_branch
    %11 = sbr.rel (0) target = $region5
  $region4: #{discriminator_forward.12} parent=0 // pred_region
    _
  $region5: #{discriminator_forward.12} parent=0 // pred_fallthru
    _
  // Predicated region
  $region6: #{discriminator_forward.12} parent=0 // pred_check
    _
  $region7: #{discriminator_forward.12} parent=0 // pred_check_branch
    %13 = sbr.rel (0) target = $region9
  $region8: #{discriminator_forward.12} parent=0 // pred_region
    _
  $region9: #{discriminator_forward.12} parent=0 // pred_fallthru
    _
  %v15 = vld [vmem:[%s0] sm:$0xff]
  %v16 = vld [vmem:[%s0 + $0x8] sm:$0xff]
  %v17 = vld [vmem:[%s0 + $0x10] sm:$0xff]
  %v18 = vld [vmem:[%s0 + $0x18] sm:$0xff]
  %v19 = vld [vmem:[%s0 + $0x20] sm:$0xff]
  %v20 = vld [vmem:[%s0 + $0x28] sm:$0xff]
  %v21 = vld [vmem:[%s0 + $0x30] sm:$0xff]
  %v22 = vld [vmem:[%s0 + $0x38] sm:$0xff]
  %v23 = vld [vmem:[%s1] sm:$0xf]
  %v24 = vld [vmem:[%s1 + $0x4] sm:$0xf]
  %v25 = vld [vmem:[%s1 + $0x8] sm:$0xf]
  %v26 = vld [vmem:[%s1 + $0xc] sm:$0xf]
  %v27 = vld [vmem:[%s1 + $0x10] sm:$0xf]
  %v28 = vld [vmem:[%s1 + $0x14] sm:$0xf]
  %v29 = vld [vmem:[%s1 + $0x18] sm:$0xf]
  %v30 = vld [vmem:[%s1 + $0x1c] sm:$0xf]
  %v31 = vld [vmem:[%s1 + $0x20] sm:$0xf]
  %v32 = vld [vmem:[%s1 + $0x24] sm:$0xf]
  %v33 = vld [vmem:[%s1 + $0x28] sm:$0xf]
  %v34 = vld [vmem:[%s1 + $0x2c] sm:$0xf]
  %v35 = vld [vmem:[%s1 + $0x30] sm:$0xf]
  %v36 = vld [vmem:[%s1 + $0x34] sm:$0xf]
  %v37 = vld [vmem:[%s1 + $0x38] sm:$0xf]
  %v38 = vld [vmem:[%s1 + $0x3c] sm:$0xf]
  %v39 = vld [vmem:[%s1 + $0x40] sm:$0xf]
  %v40 = vld [vmem:[%s1 + $0x44] sm:$0xf]
  %v41 = vld [vmem:[%s1 + $0x48] sm:$0xf]
  %v42 = vld [vmem:[%s1 + $0x4c] sm:$0xf]
  %v43 = vld [vmem:[%s1 + $0x50] sm:$0xf]
  %v44 = vld [vmem:[%s1 + $0x54] sm:$0xf]
  %v45 = vld [vmem:[%s1 + $0x58] sm:$0xf]
  %v46 = vld [vmem:[%s1 + $0x5c] sm:$0xf]
  %v47 = vld [vmem:[%s1 + $0x60] sm:$0xf]
  %v48 = vld [vmem:[%s1 + $0x64] sm:$0xf]
  %v49 = vld [vmem:[%s1 + $0x68] sm:$0xf]
  %v50 = vld [vmem:[%s1 + $0x6c] sm:$0xf]
  %v51 = vld [vmem:[%s1 + $0x70] sm:$0xf]
  %v52 = vld [vmem:[%s1 + $0x74] sm:$0xf]
  %v53 = vld [vmem:[%s1 + $0x78] sm:$0xf]
  %v54 = vld [vmem:[%s1 + $0x7c] sm:$0xf]
  %v55 = vld [vmem:[%s1 + $0x80] sm:$0xf]
  %v56 = vld [vmem:[%s1 + $0x84] sm:$0xf]
  %v57 = vld [vmem:[%s1 + $0x88] sm:$0xf]
  %v58 = vld [vmem:[%s1 + $0x8c] sm:$0xf]
  %v59 = vld [vmem:[%s1 + $0x90] sm:$0xf]
  %v60 = vld [vmem:[%s1 + $0x94] sm:$0xf]
  %v61 = vld [vmem:[%s1 + $0x98] sm:$0xf]
  %v62 = vld [vmem:[%s1 + $0x9c] sm:$0xf]
  %v63 = vld [vmem:[%s1 + $0xa0] sm:$0xf]
  %v64 = vld [vmem:[%s1 + $0xa4] sm:$0xf]
  %v65 = vld [vmem:[%s1 + $0xa8] sm:$0xf]
  %v66 = vld [vmem:[%s1 + $0xac] sm:$0xf]
  %v67 = vld [vmem:[%s1 + $0xb0] sm:$0xf]
  %v68 = vld [vmem:[%s1 + $0xb4] sm:$0xf]
  %v69 = vld [vmem:[%s1 + $0xb8] sm:$0xf]
  %v70 = vld [vmem:[%s1 + $0xbc] sm:$0xf]
  %v71 = vld [vmem:[%s1 + $0xc0] sm:$0xf]
  %v72 = vld [vmem:[%s1 + $0xc4] sm:$0xf]
  %v73 = vld [vmem:[%s1 + $0xc8] sm:$0xf]
  %v74 = vld [vmem:[%s1 + $0xcc] sm:$0xf]
  %v75 = vld [vmem:[%s1 + $0xd0] sm:$0xf]
  %v76 = vld [vmem:[%s1 + $0xd4] sm:$0xf]
  %v77 = vld [vmem:[%s1 + $0xd8] sm:$0xf]
  %v78 = vld [vmem:[%s1 + $0xdc] sm:$0xf]
  %v79 = vld [vmem:[%s1 + $0xe0] sm:$0xf]
  %v80 = vld [vmem:[%s1 + $0xe4] sm:$0xf]
  %v81 = vld [vmem:[%s1 + $0xe8] sm:$0xf]
  %v82 = vld [vmem:[%s1 + $0xec] sm:$0xf]
  %v83 = vld [vmem:[%s1 + $0xf0] sm:$0xf]
  %v84 = vld [vmem:[%s1 + $0xf4] sm:$0xf]
  %v85 = vld [vmem:[%s1 + $0xf8] sm:$0xf]
  %v86 = vld [vmem:[%s1 + $0xfc] sm:$0xf]
  %v95 = vunpack.c.l.b16 %v15
  %v96 = vunpack.c.h.b16 %v15
  %v97 = vunpack.c.l.b16 %v16
  %v98 = vunpack.c.h.b16 %v16
  %v99 = vunpack.c.l.b16 %v17
  %v100 = vunpack.c.h.b16 %v17
  %v101 = vunpack.c.l.b16 %v18
  %v102 = vunpack.c.h.b16 %v18
  %v103 = vunpack.c.l.b16 %v19
  %v104 = vunpack.c.h.b16 %v19
  %v105 = vunpack.c.l.b16 %v20
  %v106 = vunpack.c.h.b16 %v20
  %v107 = vunpack.c.l.b16 %v21
  %v108 = vunpack.c.h.b16 %v21
  %v109 = vunpack.c.l.b16 %v22
  %v110 = vunpack.c.h.b16 %v22
  %v111 = vpack.c.b16 %v99, %v95
  %v112 = vpack.c.b16 %v100, %v96
  %v113 = vpack.c.b16 %v101, %v97
  %v114 = vpack.c.b16 %v102, %v98
  %v115 = vpack.c.b16 %v107, %v103
  %v116 = vpack.c.b16 %v108, %v104
  %v117 = vpack.c.b16 %v109, %v105
  %v118 = vpack.c.b16 %v110, %v106
  %v191 = vunpack.c.l.b16 %v23
  %v192 = vunpack.c.l.b16 %v24
  %v193 = vunpack.c.l.b16 %v25
  %v194 = vunpack.c.l.b16 %v26
  %v195 = vunpack.c.l.b16 %v27
  %v196 = vunpack.c.l.b16 %v28
  %v197 = vunpack.c.l.b16 %v29
  %v198 = vunpack.c.l.b16 %v30
  %v199 = vunpack.c.l.b16 %v31
  %v200 = vunpack.c.l.b16 %v32
  %v201 = vunpack.c.l.b16 %v33
  %v202 = vunpack.c.l.b16 %v34
  %v203 = vunpack.c.l.b16 %v35
  %v204 = vunpack.c.l.b16 %v36
  %v205 = vunpack.c.l.b16 %v37
  %v206 = vunpack.c.l.b16 %v38
  %v207 = vunpack.c.l.b16 %v39
  %v208 = vunpack.c.l.b16 %v40
  %v209 = vunpack.c.l.b16 %v41
  %v210 = vunpack.c.l.b16 %v42
  %v211 = vunpack.c.l.b16 %v43
  %v212 = vunpack.c.l.b16 %v44
  %v213 = vunpack.c.l.b16 %v45
  %v214 = vunpack.c.l.b16 %v46
  %v215 = vunpack.c.l.b16 %v47
  %v216 = vunpack.c.l.b16 %v48
  %v217 = vunpack.c.l.b16 %v49
  %v218 = vunpack.c.l.b16 %v50
  %v219 = vunpack.c.l.b16 %v51
  %v220 = vunpack.c.l.b16 %v52
  %v221 = vunpack.c.l.b16 %v53
  %v222 = vunpack.c.l.b16 %v54
  %v223 = vunpack.c.l.b16 %v55
  %v224 = vunpack.c.l.b16 %v56
  %v225 = vunpack.c.l.b16 %v57
  %v226 = vunpack.c.l.b16 %v58
  %v227 = vunpack.c.l.b16 %v59
  %v228 = vunpack.c.l.b16 %v60
  %v229 = vunpack.c.l.b16 %v61
  %v230 = vunpack.c.l.b16 %v62
  %v231 = vunpack.c.l.b16 %v63
  %v232 = vunpack.c.l.b16 %v64
  %v233 = vunpack.c.l.b16 %v65
  %v234 = vunpack.c.l.b16 %v66
  %v235 = vunpack.c.l.b16 %v67
  %v236 = vunpack.c.l.b16 %v68
  %v237 = vunpack.c.l.b16 %v69
  %v238 = vunpack.c.l.b16 %v70
  %v239 = vunpack.c.l.b16 %v71
  %v240 = vunpack.c.l.b16 %v72
  %v241 = vunpack.c.l.b16 %v73
  %v242 = vunpack.c.l.b16 %v74
  %v243 = vunpack.c.l.b16 %v75
  %v244 = vunpack.c.l.b16 %v76
  %v245 = vunpack.c.l.b16 %v77
  %v246 = vunpack.c.l.b16 %v78
  %v247 = vunpack.c.l.b16 %v79
  %v248 = vunpack.c.l.b16 %v80
  %v249 = vunpack.c.l.b16 %v81
  %v250 = vunpack.c.l.b16 %v82
  %v251 = vunpack.c.l.b16 %v83
  %v252 = vunpack.c.l.b16 %v84
  %v253 = vunpack.c.l.b16 %v85
  %v254 = vunpack.c.l.b16 %v86
  %v255 = vpack.c.b16 %v192, %v191
  %v256 = vpack.c.b16 %v194, %v193
  %v257 = vpack.c.b16 %v196, %v195
  %v258 = vpack.c.b16 %v198, %v197
  %v259 = vpack.c.b16 %v200, %v199
  %v260 = vpack.c.b16 %v202, %v201
  %v261 = vpack.c.b16 %v204, %v203
  %v262 = vpack.c.b16 %v206, %v205
  %v263 = vpack.c.b16 %v208, %v207
  %v264 = vpack.c.b16 %v210, %v209
  %v265 = vpack.c.b16 %v212, %v211
  %v266 = vpack.c.b16 %v214, %v213
  %v267 = vpack.c.b16 %v216, %v215
  %v268 = vpack.c.b16 %v218, %v217
  %v269 = vpack.c.b16 %v220, %v219
  %v270 = vpack.c.b16 %v222, %v221
  %v271 = vpack.c.b16 %v224, %v223
  %v272 = vpack.c.b16 %v226, %v225
  %v273 = vpack.c.b16 %v228, %v227
  %v274 = vpack.c.b16 %v230, %v229
  %v275 = vpack.c.b16 %v232, %v231
  %v276 = vpack.c.b16 %v234, %v233
  %v277 = vpack.c.b16 %v236, %v235
  %v278 = vpack.c.b16 %v238, %v237
  %v279 = vpack.c.b16 %v240, %v239
  %v280 = vpack.c.b16 %v242, %v241
  %v281 = vpack.c.b16 %v244, %v243
  %v282 = vpack.c.b16 %v246, %v245
  %v283 = vpack.c.b16 %v248, %v247
  %v284 = vpack.c.b16 %v250, %v249
  %v285 = vpack.c.b16 %v252, %v251
  %v286 = vpack.c.b16 %v254, %v253
  %319 = vmatprep.subr.bf16.mxu0 0
  %320 = vmatpush1.bf16.msra.mxu0 %v255
  %321 = vmatprep.subr.bf16.mxu0 0
  %322 = vmatpush1.bf16.msra.mxu0 %v256
  %323 = vmatprep.subr.bf16.mxu0 0
  %324 = vmatpush1.bf16.msra.mxu0 %v257
  %325 = vmatprep.subr.bf16.mxu0 0
  %326 = vmatpush1.bf16.msra.mxu0 %v258
  %327 = vmatprep.subr.bf16.mxu0 0
  %328 = vmatpush1.bf16.msra.mxu0 %v259
  %329 = vmatprep.subr.bf16.mxu0 0
  %330 = vmatpush1.bf16.msra.mxu0 %v260
  %331 = vmatprep.subr.bf16.mxu0 0
  %332 = vmatpush1.bf16.msra.mxu0 %v261
  %333 = vmatprep.subr.bf16.mxu0 0
  %334 = vmatpush1.bf16.msra.mxu0 %v262
  %335 = vmatprep.subr.bf16.mxu0 0
  %336 = vmatpush1.bf16.msra.mxu0 %v263
  %337 = vmatprep.subr.bf16.mxu0 0
  %338 = vmatpush1.bf16.msra.mxu0 %v264
  %339 = vmatprep.subr.bf16.mxu0 0
  %340 = vmatpush1.bf16.msra.mxu0 %v265
  %341 = vmatprep.subr.bf16.mxu0 0
  %342 = vmatpush1.bf16.msra.mxu0 %v266
  %343 = vmatprep.subr.bf16.mxu0 0
  %344 = vmatpush1.bf16.msra.mxu0 %v267
  %345 = vmatprep.subr.bf16.mxu0 0
  %346 = vmatpush1.bf16.msra.mxu0 %v268
  %347 = vmatprep.subr.bf16.mxu0 0
  %348 = vmatpush1.bf16.msra.mxu0 %v269
  %349 = vmatprep.subr.bf16.mxu0 0
  %350 = vmatpush1.bf16.msra.mxu0 %v270
  %351 = vmatprep.mubr.bf16.mxu0 %v112
  %352 = vmatmul.mubr.bf16.gmra.mrb[0].mxu0 %v111
  %v353 = vpop.f32.mrb[0].mxu0
  %v354 = vadd.f32 0.0, %v353
  %v355 = vpop.f32.mrb[0].mxu0
  %v356 = vpop.f32.mrb[0].mxu0
  %v357 = vadd.f32 0.0, %v356
  %v358 = vpop.f32.mrb[0].mxu0
  %359 = vmatprep.mubr.bf16.mxu0 %v116
  %360 = vmatmul.mubr.bf16.gmra.mrb[0].mxu0 %v115
  %v361 = vpop.f32.mrb[0].mxu0
  %v362 = vadd.f32 0.0, %v361
  %v363 = vpop.f32.mrb[0].mxu0
  %v364 = vpop.f32.mrb[0].mxu0
  %v365 = vadd.f32 0.0, %v364
  %v366 = vpop.f32.mrb[0].mxu0
  %367 = vdwg.mxu0
  %368 = vmatprep.subr.bf16.mxu0 0
  %369 = vmatpush1.bf16.msra.mxu0 %v271
  %370 = vmatprep.subr.bf16.mxu0 0
  %371 = vmatpush1.bf16.msra.mxu0 %v272
  %372 = vmatprep.subr.bf16.mxu0 0
  %373 = vmatpush1.bf16.msra.mxu0 %v273
  %374 = vmatprep.subr.bf16.mxu0 0
  %375 = vmatpush1.bf16.msra.mxu0 %v274
  %376 = vmatprep.subr.bf16.mxu0 0
  %377 = vmatpush1.bf16.msra.mxu0 %v275
  %378 = vmatprep.subr.bf16.mxu0 0
  %379 = vmatpush1.bf16.msra.mxu0 %v276
  %380 = vmatprep.subr.bf16.mxu0 0
  %381 = vmatpush1.bf16.msra.mxu0 %v277
  %382 = vmatprep.subr.bf16.mxu0 0
  %383 = vmatpush1.bf16.msra.mxu0 %v278
  %384 = vmatprep.subr.bf16.mxu0 0
  %385 = vmatpush1.bf16.msra.mxu0 %v279
  %386 = vmatprep.subr.bf16.mxu0 0
  %387 = vmatpush1.bf16.msra.mxu0 %v280
  %388 = vmatprep.subr.bf16.mxu0 0
  %389 = vmatpush1.bf16.msra.mxu0 %v281
  %390 = vmatprep.subr.bf16.mxu0 0
  %391 = vmatpush1.bf16.msra.mxu0 %v282
  %392 = vmatprep.subr.bf16.mxu0 0
  %393 = vmatpush1.bf16.msra.mxu0 %v283
  %394 = vmatprep.subr.bf16.mxu0 0
  %395 = vmatpush1.bf16.msra.mxu0 %v284
  %396 = vmatprep.subr.bf16.mxu0 0
  %397 = vmatpush1.bf16.msra.mxu0 %v285
  %398 = vmatprep.subr.bf16.mxu0 0
  %399 = vmatpush1.bf16.msra.mxu0 %v286
  %400 = vmatprep.mubr.bf16.mxu0 %v114
  %401 = vmatmul.mubr.bf16.gmra.mrb[0].mxu0 %v113
  %v402 = vpop.f32.mrb[0].mxu0
  %v403 = vadd.f32 %v354, %v402
  %v404 = vpop.f32.mrb[0].mxu0
  %v405 = vpop.f32.mrb[0].mxu0
  %v406 = vadd.f32 %v357, %v405
  %v407 = vpop.f32.mrb[0].mxu0
  %408 = vmatprep.mubr.bf16.mxu0 %v118
  %409 = vmatmul.mubr.bf16.gmra.mrb[0].mxu0 %v117
  %v410 = vpop.f32.mrb[0].mxu0
  %v411 = vadd.f32 %v362, %v410
  %v412 = vpop.f32.mrb[0].mxu0
  %v413 = vpop.f32.mrb[0].mxu0
  %v414 = vadd.f32 %v365, %v413
  %v415 = vpop.f32.mrb[0].mxu0
  %416 = vdwg.mxu0
  %vm417 = vcmask 523264
  %418 = vst.msk [vmem:[%s2] sm:$0xff] %vm417, %v403
  %419 = vst.msk [vmem:[%s2 + $0x8] sm:$0xff] %vm417, %v406
  %420 = vst.msk [vmem:[%s2 + $0x10] sm:$0xff] %vm417, %v411
  %421 = vst.msk [vmem:[%s2 + $0x18] sm:$0xff] %vm417, %v414
  %v422 = vlaneseq
  %v423 = vshrl.u32 %v422, 7
  %v424 = vadd.s32 %v423, 8
  %v425 = vadd.s32 %v423, 16
  %v426 = vadd.s32 %v423, 24
  %s427 = smul.u32 0, 32
  %v428 = vstv %s427
  %v429 = vadd.s32 %v423, %v428
  %v430 = vadd.s32 %v424, %v428
  %v431 = vadd.s32 %v425, %v428
  %v432 = vadd.s32 %v426, %v428
  %vm433 = vcmp.lt.s32.totalorder %v429, 32
  %vm434 = vcmp.lt.s32.totalorder %v430, 32
  %vm435 = vcmp.lt.s32.totalorder %v431, 32
  %vm436 = vcmp.lt.s32.totalorder %v432, 32
  %v437 = vsel %vm433, %v403, 0.0
  %v438 = vsel %vm434, %v406, 0.0
  %v439 = vsel %vm435, %v411, 0.0
  %v440 = vsel %vm436, %v414, 0.0
  %v441 = vsel %vm417, %v437, 0.0
  %v442 = vsel %vm417, %v438, 0.0
  %v443 = vadd.f32 %v441, %v442
  %v444 = vsel %vm417, %v439, 0.0
  %v445 = vadd.f32 %v443, %v444
  %v446 = vsel %vm417, %v440, 0.0
  %v447 = vadd.f32 %v445, %v446
  %v448 = vrot.slane %v447, 4
  %v449 = vadd.f32 %v447, %v448
  %v450 = vrot.slane %v449, 2
  %v451 = vadd.f32 %v449, %v450
  %v452 = vrot.slane %v451, 1
  %v453 = vadd.f32 %v451, %v452
  %vm454 = vcmask 516096
  %455 = vst.msk [vmem:[%s3] sm:$0x1] %vm454, %v453
  %v456 = vmul.f32 %v437, %v437
  %v457 = vmul.f32 %v438, %v438
  %v458 = vmul.f32 %v439, %v439
  %v459 = vmul.f32 %v440, %v440
  %v460 = vsel %vm417, %v456, 0.0
  %v461 = vsel %vm417, %v457, 0.0
  %v462 = vadd.f32 %v460, %v461
  %v463 = vsel %vm417, %v458, 0.0
  %v464 = vadd.f32 %v462, %v463
  %v465 = vsel %vm417, %v459, 0.0
  %v466 = vadd.f32 %v464, %v465
  %v467 = vrot.slane %v466, 4
  %v468 = vadd.f32 %v466, %v467
  %v469 = vrot.slane %v468, 2
  %v470 = vadd.f32 %v468, %v469
  %v471 = vrot.slane %v470, 1
  %v472 = vadd.f32 %v470, %v471
  %473 = vst.msk [vmem:[%s4] sm:$0x1] %vm454, %v472
  // Predicated region
  $region10: #{discriminator_forward.12} parent=0 // pred_check
    _
  $region11: #{discriminator_forward.12} parent=0 // pred_check_branch
    %475 = sbr.rel (0) target = $region13
  $region12: #{discriminator_forward.12} parent=0 // pred_region
    _
  $region13: #{discriminator_forward.12} parent=0 // pred_fallthru
    _
  // Predicated region
  $region14: #{discriminator_forward.12} parent=0 // pred_check
    _
  $region15: #{discriminator_forward.12} parent=0 // pred_check_branch
    %477 = sbr.rel (0) target = $region17
  $region16: #{discriminator_forward.12} parent=0 // pred_region
    _
  $region17: #{discriminator_forward.12} parent=0 // pred_fallthru
    _
  // Predicated region
  $region18: #{discriminator_forward.12} parent=0 // pred_check
    _
  $region19: #{discriminator_forward.12} parent=0 // pred_check_branch
    %479 = sbr.rel (0) target = $region21
  $region20: #{discriminator_forward.12} parent=0 // pred_region
    _
  $region21: #{discriminator_forward.12} parent=0 // pred_fallthru
    _
  // Predicated region
  $region22: #{discriminator_forward.12} parent=0 // pred_check
    _
  $region23: #{discriminator_forward.12} parent=0 // pred_check_branch
    %481 = sbr.rel (0) target = $region25
  $region24: #{discriminator_forward.12} parent=0 // pred_region
    _
  $region25: #{discriminator_forward.12} parent=0 // pred_fallthru
    _
  // Predicated region
  $region26: #{discriminator_forward.12} parent=0 // pred_check
    _
  $region27: #{discriminator_forward.12} parent=0 // pred_check_branch
    %483 = sbr.rel (0) target = $region29
  $region28: #{discriminator_forward.12} parent=0 // pred_region
    _
  $region29: #{discriminator_forward.12} parent=0 // pred_fallthru
    _
  // Predicated region
  $region30: #{discriminator_forward.12} parent=0 // pred_check
    _
  $region31: #{discriminator_forward.12} parent=0 // pred_check_branch
    %485 = sbr.rel (0) target = $region33
  $region32: #{discriminator_forward.12} parent=0 // pred_region
    _
  $region33: #{discriminator_forward.12} parent=0 // pred_fallthru
    _

// kernel: discriminator_forward.13
$region0: #{discriminator_forward.13}
  #allocation0 [shape = 'u32[]', space=smem, size = 0x4, offset = 0x4, fixed_abs, tag = 'smem constant byte address 0x4 - core index']
  #allocation1 [shape = 'u32[144,128]{1,0:T(1,128)}', space=vmem, size = 0x12000, scoped, tag = 'internal scratch']
  %s0 = inlined_call_operand.vmem [shape: f32[32,64], index: 0, kind: input, shape index: {}]
  %s1 = inlined_call_operand.vmem [shape: f32[1,64], index: 1, kind: input, shape index: {}]
  %s2 = inlined_call_operand.vmem [shape: f32[1,64], index: 2, kind: input, shape index: {}]
  %s3 = inlined_call_operand.vmem [shape: bf16[32,64], index: 3, kind: output, shape index: {}]
  %s4 = sld [smem:[#allocation0]]
  $region22: #{discriminator_forward.13} parent=0
    _
  %s6 = ssub.s32 1, %s4
  %s7 = scalar_select 0, %s6, %s4
  // Predicated region
  $region2: #{discriminator_forward.13} parent=0 // pred_check
    _
  $region3: #{discriminator_forward.13} parent=0 // pred_check_branch
    %9 = sbr.rel (0) target = $region5
  $region4: #{discriminator_forward.13} parent=0 // pred_region
    _
  $region5: #{discriminator_forward.13} parent=0 // pred_fallthru
    _
  // Predicated region
  $region6: #{discriminator_forward.13} parent=0 // pred_check
    _
  $region7: #{discriminator_forward.13} parent=0 // pred_check_branch
    %11 = sbr.rel (0) target = $region9
  $region8: #{discriminator_forward.13} parent=0 // pred_region
    _
  $region9: #{discriminator_forward.13} parent=0 // pred_fallthru
    _
  // Predicated region
  $region10: #{discriminator_forward.13} parent=0 // pred_check
    _
  $region11: #{discriminator_forward.13} parent=0 // pred_check_branch
    %13 = sbr.rel (0) target = $region13
  $region12: #{discriminator_forward.13} parent=0 // pred_region
    _
  $region13: #{discriminator_forward.13} parent=0 // pred_fallthru
    _
  %v14 = vld [vmem:[%s0] sm:$0xff]
  %v15 = vld [vmem:[%s0 + $0x8] sm:$0xff]
  %v16 = vld [vmem:[%s0 + $0x10] sm:$0xff]
  %v17 = vld [vmem:[%s0 + $0x18] sm:$0xff]
  %v18 = vld [vmem:[%s1] sm:$0x1]
  %v20 = vlaneseq
  %v21 = vshrl.u32 %v20, 7
  %v22 = vsub.s32 0, %v21
  %v23 = vrot.slane %v18, %v22
  %v25 = vmul.f32 %v14, %v23
  %v26 = vmul.f32 %v15, %v23
  %v27 = vmul.f32 %v16, %v23
  %v28 = vmul.f32 %v17, %v23
  %v29 = vld [vmem:[%s2] sm:$0x1]
  %v31 = vlaneseq
  %v32 = vshrl.u32 %v31, 7
  %v33 = vsub.s32 0, %v32
  %v34 = vrot.slane %v29, %v33
  %v36 = vadd.f32 %v25, %v34
  %v37 = vadd.f32 %v26, %v34
  %v38 = vadd.f32 %v27, %v34
  %v39 = vadd.f32 %v28, %v34
  %vm40 = vcmp.ge.f32.partialorder %v36, 0.0
  %vm41 = vcmp.ge.f32.partialorder %v37, 0.0
  %vm42 = vcmp.ge.f32.partialorder %v38, 0.0
  %vm43 = vcmp.ge.f32.partialorder %v39, 0.0
  %v44 = vmul.f32 %v36, 0.2
  %v45 = vmul.f32 %v37, 0.2
  %v46 = vmul.f32 %v38, 0.2
  %v47 = vmul.f32 %v39, 0.2
  %v48 = vsel %vm40, %v36, %v44
  %v49 = vsel %vm41, %v37, %v45
  %v50 = vsel %vm42, %v38, %v46
  %v51 = vsel %vm43, %v39, %v47
  %v52 = vpack.c.bf16 %v49, %v48
  %v53 = vpack.c.bf16 %v51, %v50
  %v56 = vunpack.c.l.b16 %v52
  %v57 = vunpack.c.h.b16 %v52
  %v58 = vunpack.c.l.b16 %v53
  %v59 = vunpack.c.h.b16 %v53
  %v60 = vpack.c.b16 %v56, %v56
  %v61 = vpack.c.b16 %v57, %v57
  %v62 = vpack.c.b16 %v58, %v58
  %v63 = vpack.c.b16 %v59, %v59
  %vm68 = vcmask 519168
  %69 = vst.msk [vmem:[%s3] sm:$0xf] %vm68, %v60
  %70 = vst.msk [vmem:[%s3 + $0x4] sm:$0xf] %vm68, %v61
  %71 = vst.msk [vmem:[%s3 + $0x8] sm:$0xf] %vm68, %v62
  %72 = vst.msk [vmem:[%s3 + $0xc] sm:$0xf] %vm68, %v63
  // Predicated region
  $region14: #{discriminator_forward.13} parent=0 // pred_check
    _
  $region15: #{discriminator_forward.13} parent=0 // pred_check_branch
    %74 = sbr.rel (0) target = $region17
  $region16: #{discriminator_forward.13} parent=0 // pred_region
    _
  $region17: #{discriminator_forward.13} parent=0 // pred_fallthru
    _
  // Predicated region
  $region18: #{discriminator_forward.13} parent=0 // pred_check
    _
  $region19: #{discriminator_forward.13} parent=0 // pred_check_branch
    %76 = sbr.rel (0) target = $region21
  $region20: #{discriminator_forward.13} parent=0 // pred_region
    _
  $region21: #{discriminator_forward.13} parent=0 // pred_fallthru
    _

</llo_original>
